<compile_context>
chip_gen: v5e
topology: v5e:2x2
jax: 0.10.0
libtpu: 0.0.40
codegen_flags: <defaults>
</compile_context>

<pallas_src>
import jax
import jax.numpy as jnp
from jax.experimental import pallas as pl
from jax.experimental.pallas import tpu as pltpu


def mlp_kernel(x_ref,
               w0_ref, b0_ref,
               w1_ref, b1_ref,
               w2_ref, b2_ref,
               w3_ref, b3_ref,
               o_ref):
    bf = w0_ref.dtype  # bfloat16 weights; activations cast to match for the MXU

    # layer_input -> relu(dropout(.)) ; dropout is identity in eval mode.
    # x arrives f32; the bf16 cast runs on the VPU (free filler under the MXU)
    # instead of a separate wrapper-side XLA pass over HBM.
    h = jnp.dot(x_ref[...].astype(bf), w0_ref[...],
                preferred_element_type=jnp.float32) + b0_ref[...]
    h = jnp.maximum(h, 0.0)

    # layer_hidden1 -> relu
    h = jnp.dot(h.astype(bf), w1_ref[...],
                preferred_element_type=jnp.float32) + b1_ref[...]
    h = jnp.maximum(h, 0.0)

    # layer_hidden2 -> relu
    h = jnp.dot(h.astype(bf), w2_ref[...],
                preferred_element_type=jnp.float32) + b2_ref[...]
    h = jnp.maximum(h, 0.0)

    # layer_output (no activation)
    out = jnp.dot(h.astype(bf), w3_ref[...],
                  preferred_element_type=jnp.float32) + b3_ref[...]
    o_ref[...] = out.astype(o_ref.dtype)


def _pick_tb(B):
    """Batch tile.

    v6e/v7x MXU is 2x256x256: M should be >=256 when the batch allows, while
    keeping >=2 grid steps so dimension_semantics=("parallel",) can shard
    batch tiles across the two v7x TensorCores.  v5e (128x128 MXU, 1 TC) is
    already row-filled at 128 and only benefits from fewer grid steps.
    """
    if B >= 1024:
        return 512
    if B >= 512:
        return 256      # full 256-row MXU occupancy, >=2 grid steps
    if B >= 256:
        return 128      # 2+ tiles -> both v7x TensorCores get work
    # Small batch: single tile, rounded up to an f32 sublane multiple.
    return max(8, ((B + 7) // 8) * 8)


def prepare_params(params):
    """One-time conversion (outside the per-call path): bf16 weights for the
    MXU, f32 biases added to the f32 accumulator.  Weights are [in, out]."""
    bf = jnp.bfloat16
    w = tuple(params[k].astype(bf) for k in ("w0", "w1", "w2", "w3"))
    b = tuple(params[k].astype(jnp.float32).reshape(1, -1)
              for k in ("b0", "b1", "b2", "b3"))
    return (w[0], b[0], w[1], b[1], w[2], b[2], w[3], b[3])


def mlp_forward(x, prepared, *, tb=None, out_dtype=jnp.float32):
    """x: [B, dim_in] float32.  prepared: output of prepare_params()."""
    B, dim_in = x.shape
    w0, b0, w1, b1, w2, b2, w3, b3 = prepared
    dim_hidden = w0.shape[1]
    dim_out = w3.shape[1]

    if tb is None:
        tb = _pick_tb(B)

    # Ragged last tile is masked by Pallas -- no jnp.pad (extra HBM pass) needed.
    grid = (pl.cdiv(B, tb),)
    n_rows = grid[0] * tb  # for flop/bytes accounting only

    out_bytes = jnp.dtype(out_dtype).itemsize

    # VMEM budget: resident weights/biases + double-buffered x/out tiles +
    # activation scratch headroom.  Guard against the v7x 64 MiB ceiling.
    resident_bytes = (2 * (w0.size + w1.size + w2.size + w3.size)
                      + 4 * (b0.size + b1.size + b2.size + b3.size))
    pipelined_bytes = 2 * (tb * dim_in * 4 + tb * dim_out * out_bytes)
    scratch_bytes = 4 * tb * dim_hidden * 4
    vmem_limit = int(resident_bytes + pipelined_bytes + scratch_bytes) + (4 << 20)
    if vmem_limit > (48 << 20):
        # TODO(synk): switch w1/w2 to pipelined N-tiled BlockSpecs for very
        # wide hidden dims instead of whole-array resident copies.
        raise ValueError(
            f"Resident-weight scheme needs ~{vmem_limit >> 20} MiB VMEM; "
            "exceeds the v7x budget -- tile the weights instead.")

    # Grid-invariant operands: single resident VMEM copy (no double buffering).
    resident = pl.BlockSpec(memory_space=pltpu.MemorySpace.VMEM)

    flops = 2 * n_rows * (dim_in * dim_hidden
                          + 2 * dim_hidden * dim_hidden
                          + dim_hidden * dim_out)
    bytes_accessed = (B * dim_in * 4                                   # x (f32)
                      + (w0.size + w1.size + w2.size + w3.size) * 2    # weights (bf16)
                      + (b0.size + b1.size + b2.size + b3.size) * 4    # biases (f32)
                      + B * dim_out * out_bytes)                       # output

    out = pl.pallas_call(
        mlp_kernel,
        out_shape=jax.ShapeDtypeStruct((B, dim_out), out_dtype),
        grid_spec=pltpu.PrefetchScalarGridSpec(
            num_scalar_prefetch=0,
            grid=grid,
            in_specs=[
                pl.BlockSpec((tb, dim_in), lambda i: (i, 0)),   # x tile (pipelined)
                resident, resident,                             # w0, b0
                resident, resident,                             # w1, b1
                resident, resident,                             # w2, b2
                resident, resident,                             # w3, b3
            ],
            out_specs=pl.BlockSpec((tb, dim_out), lambda i: (i, 0)),
        ),
        compiler_params=pltpu.CompilerParams(
            dimension_semantics=("parallel",),
            vmem_limit_bytes=vmem_limit,
        ),
        cost_estimate=pl.CostEstimate(
            flops=int(flops),
            transcendentals=0,
            bytes_accessed=int(bytes_accessed),
        ),
    )(x,
      w0, b0,
      w1, b1,
      w2, b2,
      w3, b3)

    return out


def init_linear(key, fan_in, fan_out):
    """Deterministic PyTorch-style Linear init: U(-1/sqrt(fan_in), +1/sqrt(fan_in)).
    Weight returned as [fan_in, fan_out] (already transposed for x @ W)."""
    kw, kb = jax.random.split(key)
    bound = 1.0 / jnp.sqrt(jnp.float32(fan_in))
    w = jax.random.uniform(kw, (fan_in, fan_out), jnp.float32, -bound, bound)
    b = jax.random.uniform(kb, (1, fan_out), jnp.float32, -bound, bound)
    return w, b


def mlp_reference_bf16(x, params):
    """Reference that mirrors the kernel's bf16-operand / f32-accumulate math."""
    bf = jnp.bfloat16

    def lin(h, w, b):
        return jnp.dot(h.astype(bf), w.astype(bf),
                       preferred_element_type=jnp.float32) + b.astype(jnp.float32)

    h = jnp.maximum(lin(x, params["w0"], params["b0"]), 0.0)
    h = jnp.maximum(lin(h, params["w1"], params["b1"]), 0.0)
    h = jnp.maximum(lin(h, params["w2"], params["b2"]), 0.0)
    return lin(h, params["w3"], params["b3"])


if __name__ == "__main__":
    # Shapes consistent with the module: MLP(dim_in, dim_hidden=512, dim_out).
    # B=256 -> tb=128 -> a 2-step "parallel" grid (feeds both TCs on v7x).
    B, dim_in, dim_hidden, dim_out = 256, 128, 512, 128

    root = jax.random.PRNGKey(0)
    kx, k0, k1, k2, k3 = jax.random.split(root, 5)

    x = jax.random.normal(kx, (B, dim_in), jnp.float32)

    w0, b0 = init_linear(k0, dim_in, dim_hidden)      # layer_input
    w1, b1 = init_linear(k1, dim_hidden, dim_hidden)  # layer_hidden1
    w2, b2 = init_linear(k2, dim_hidden, dim_hidden)  # layer_hidden2
    w3, b3 = init_linear(k3, dim_hidden, dim_out)     # layer_output
    params = dict(w0=w0, b0=b0, w1=w1, b1=b1, w2=w2, b2=b2, w3=w3, b3=b3)

    prepared = prepare_params(params)   # one-time bf16 weight conversion

    out = mlp_forward(x, prepared)
    out = jax.block_until_ready(out)

    ref = mlp_reference_bf16(x, params)
    assert out.shape == (B, dim_out)
    assert jnp.allclose(out, ref, atol=1e-2, rtol=1e-2), "mismatch vs bf16 JAX reference"

    print("KERNEL_OK")
</pallas_src>

<mosaic_0001>
module attributes {stable_mosaic.version = 11 : i64} {
  func.func @mlp_kernel(%arg0: i32, %arg1: memref<128x128xf32, #tpu.memory_space<vmem>>, %arg2: memref<128x512xbf16, #tpu.memory_space<vmem>>, %arg3: memref<1x512xf32, #tpu.memory_space<vmem>>, %arg4: memref<512x512xbf16, #tpu.memory_space<vmem>>, %arg5: memref<1x512xf32, #tpu.memory_space<vmem>>, %arg6: memref<512x512xbf16, #tpu.memory_space<vmem>>, %arg7: memref<1x512xf32, #tpu.memory_space<vmem>>, %arg8: memref<512x128xbf16, #tpu.memory_space<vmem>>, %arg9: memref<1x128xf32, #tpu.memory_space<vmem>>, %arg10: memref<128x128xf32, #tpu.memory_space<vmem>>) attributes {dimension_semantics = [#tpu.dimension_semantics<parallel>], iteration_bounds = array<i64: 2>, scalar_prefetch = 0 : i64, scratch_operands = 0 : i64, tpu.core_type = #tpu.core_type<tc>, window_params = [{transform_indices = @transform_0, window_bounds = array<i64: 128, 128>}, {pipeline_mode = #tpu.pipeline_mode<synchronous>, transform_indices = @transform_1, window_bounds = array<i64: 128, 512>}, {pipeline_mode = #tpu.pipeline_mode<synchronous>, transform_indices = @transform_2, window_bounds = array<i64: 1, 512>}, {pipeline_mode = #tpu.pipeline_mode<synchronous>, transform_indices = @transform_3, window_bounds = array<i64: 512, 512>}, {pipeline_mode = #tpu.pipeline_mode<synchronous>, transform_indices = @transform_4, window_bounds = array<i64: 1, 512>}, {pipeline_mode = #tpu.pipeline_mode<synchronous>, transform_indices = @transform_5, window_bounds = array<i64: 512, 512>}, {pipeline_mode = #tpu.pipeline_mode<synchronous>, transform_indices = @transform_6, window_bounds = array<i64: 1, 512>}, {pipeline_mode = #tpu.pipeline_mode<synchronous>, transform_indices = @transform_7, window_bounds = array<i64: 512, 128>}, {pipeline_mode = #tpu.pipeline_mode<synchronous>, transform_indices = @transform_8, window_bounds = array<i64: 1, 128>}, {transform_indices = @transform_9, window_bounds = array<i64: 128, 128>}]} {
    %c0 = arith.constant 0 : index
    %c0_0 = arith.constant 0 : index
    %0 = vector.load %arg1[%c0, %c0_0] : memref<128x128xf32, #tpu.memory_space<vmem>>, vector<128x128xf32>
    %1 = arith.truncf %0 : vector<128x128xf32> to vector<128x128xbf16>
    %c0_1 = arith.constant 0 : index
    %c0_2 = arith.constant 0 : index
    %2 = vector.load %arg2[%c0_1, %c0_2] : memref<128x512xbf16, #tpu.memory_space<vmem>>, vector<128x512xbf16>
    %cst = arith.constant dense<0.000000e+00> : vector<128x512xf32>
    %3 = tpu.matmul %1, %2, %cst {dimension_numbers = #tpu.dot_dimension_numbers<[1], [0], [0], [1], [0, 0, 1, 1], [], []>} : vector<128x128xbf16>, vector<128x512xbf16>, vector<128x512xf32> -> vector<128x512xf32>
    %c0_3 = arith.constant 0 : index
    %c0_4 = arith.constant 0 : index
    %4 = vector.load %arg3[%c0_3, %c0_4] : memref<1x512xf32, #tpu.memory_space<vmem>>, vector<1x512xf32>
    %5 = vector.broadcast %4 : vector<1x512xf32> to vector<128x512xf32>
    %6 = arith.addf %3, %5 : vector<128x512xf32>
    %cst_5 = arith.constant 0.000000e+00 : f32
    %7 = vector.broadcast %cst_5 : f32 to vector<128x512xf32>
    %8 = arith.maximumf %6, %7 : vector<128x512xf32>
    %9 = arith.truncf %8 : vector<128x512xf32> to vector<128x512xbf16>
    %c0_6 = arith.constant 0 : index
    %c0_7 = arith.constant 0 : index
    %10 = vector.load %arg4[%c0_6, %c0_7] : memref<512x512xbf16, #tpu.memory_space<vmem>>, vector<512x512xbf16>
    %cst_8 = arith.constant dense<0.000000e+00> : vector<128x512xf32>
    %11 = tpu.matmul %9, %10, %cst_8 {dimension_numbers = #tpu.dot_dimension_numbers<[1], [0], [0], [1], [0, 0, 1, 1], [], []>} : vector<128x512xbf16>, vector<512x512xbf16>, vector<128x512xf32> -> vector<128x512xf32>
    %c0_9 = arith.constant 0 : index
    %c0_10 = arith.constant 0 : index
    %12 = vector.load %arg5[%c0_9, %c0_10] : memref<1x512xf32, #tpu.memory_space<vmem>>, vector<1x512xf32>
    %13 = vector.broadcast %12 : vector<1x512xf32> to vector<128x512xf32>
    %14 = arith.addf %11, %13 : vector<128x512xf32>
    %cst_11 = arith.constant 0.000000e+00 : f32
    %15 = vector.broadcast %cst_11 : f32 to vector<128x512xf32>
    %16 = arith.maximumf %14, %15 : vector<128x512xf32>
    %17 = arith.truncf %16 : vector<128x512xf32> to vector<128x512xbf16>
    %c0_12 = arith.constant 0 : index
    %c0_13 = arith.constant 0 : index
    %18 = vector.load %arg6[%c0_12, %c0_13] : memref<512x512xbf16, #tpu.memory_space<vmem>>, vector<512x512xbf16>
    %cst_14 = arith.constant dense<0.000000e+00> : vector<128x512xf32>
    %19 = tpu.matmul %17, %18, %cst_14 {dimension_numbers = #tpu.dot_dimension_numbers<[1], [0], [0], [1], [0, 0, 1, 1], [], []>} : vector<128x512xbf16>, vector<512x512xbf16>, vector<128x512xf32> -> vector<128x512xf32>
    %c0_15 = arith.constant 0 : index
    %c0_16 = arith.constant 0 : index
    %20 = vector.load %arg7[%c0_15, %c0_16] : memref<1x512xf32, #tpu.memory_space<vmem>>, vector<1x512xf32>
    %21 = vector.broadcast %20 : vector<1x512xf32> to vector<128x512xf32>
    %22 = arith.addf %19, %21 : vector<128x512xf32>
    %cst_17 = arith.constant 0.000000e+00 : f32
    %23 = vector.broadcast %cst_17 : f32 to vector<128x512xf32>
    %24 = arith.maximumf %22, %23 : vector<128x512xf32>
    %25 = arith.truncf %24 : vector<128x512xf32> to vector<128x512xbf16>
    %c0_18 = arith.constant 0 : index
    %c0_19 = arith.constant 0 : index
    %26 = vector.load %arg8[%c0_18, %c0_19] : memref<512x128xbf16, #tpu.memory_space<vmem>>, vector<512x128xbf16>
    %cst_20 = arith.constant dense<0.000000e+00> : vector<128x128xf32>
    %27 = tpu.matmul %25, %26, %cst_20 {dimension_numbers = #tpu.dot_dimension_numbers<[1], [0], [0], [1], [0, 0, 1, 1], [], []>} : vector<128x512xbf16>, vector<512x128xbf16>, vector<128x128xf32> -> vector<128x128xf32>
    %c0_21 = arith.constant 0 : index
    %c0_22 = arith.constant 0 : index
    %28 = vector.load %arg9[%c0_21, %c0_22] : memref<1x128xf32, #tpu.memory_space<vmem>>, vector<1x128xf32>
    %29 = vector.broadcast %28 : vector<1x128xf32> to vector<128x128xf32>
    %30 = arith.addf %27, %29 : vector<128x128xf32>
    %c0_23 = arith.constant 0 : index
    %c0_24 = arith.constant 0 : index
    %31 = vector.load %arg10[%c0_23, %c0_24] : memref<128x128xf32, #tpu.memory_space<vmem>>, vector<128x128xf32>
    tpu.vector_store %arg10[%c0_23, %c0_24], %30 {strides = array<i32>} : memref<128x128xf32, #tpu.memory_space<vmem>>, vector<128x128xf32>,
    return
  }
  func.func @transform_0(%arg0: i32) -> (i32, i32) {
    %c0_i32 = arith.constant 0 : i32
    %c0_i32_0 = arith.constant 0 : i32
    return %arg0, %c0_i32 : i32, i32
  }
  func.func @transform_1(%arg0: i32) -> (i32, i32) {
    %c0_i32 = arith.constant 0 : i32
    %c0_i32_0 = arith.constant 0 : i32
    %c0_i32_1 = arith.constant 0 : i32
    return %c0_i32, %c0_i32_0 : i32, i32
  }
  func.func @transform_2(%arg0: i32) -> (i32, i32) {
    %c0_i32 = arith.constant 0 : i32
    %c0_i32_0 = arith.constant 0 : i32
    %c0_i32_1 = arith.constant 0 : i32
    return %c0_i32, %c0_i32_0 : i32, i32
  }
  func.func @transform_3(%arg0: i32) -> (i32, i32) {
    %c0_i32 = arith.constant 0 : i32
    %c0_i32_0 = arith.constant 0 : i32
    %c0_i32_1 = arith.constant 0 : i32
    return %c0_i32, %c0_i32_0 : i32, i32
  }
  func.func @transform_4(%arg0: i32) -> (i32, i32) {
    %c0_i32 = arith.constant 0 : i32
    %c0_i32_0 = arith.constant 0 : i32
    %c0_i32_1 = arith.constant 0 : i32
    return %c0_i32, %c0_i32_0 : i32, i32
  }
  func.func @transform_5(%arg0: i32) -> (i32, i32) {
    %c0_i32 = arith.constant 0 : i32
    %c0_i32_0 = arith.constant 0 : i32
    %c0_i32_1 = arith.constant 0 : i32
    return %c0_i32, %c0_i32_0 : i32, i32
  }
  func.func @transform_6(%arg0: i32) -> (i32, i32) {
    %c0_i32 = arith.constant 0 : i32
    %c0_i32_0 = arith.constant 0 : i32
    %c0_i32_1 = arith.constant 0 : i32
    return %c0_i32, %c0_i32_0 : i32, i32
  }
  func.func @transform_7(%arg0: i32) -> (i32, i32) {
    %c0_i32 = arith.constant 0 : i32
    %c0_i32_0 = arith.constant 0 : i32
    %c0_i32_1 = arith.constant 0 : i32
    return %c0_i32, %c0_i32_0 : i32, i32
  }
  func.func @transform_8(%arg0: i32) -> (i32, i32) {
    %c0_i32 = arith.constant 0 : i32
    %c0_i32_0 = arith.constant 0 : i32
    %c0_i32_1 = arith.constant 0 : i32
    return %c0_i32, %c0_i32_0 : i32, i32
  }
  func.func @transform_9(%arg0: i32) -> (i32, i32) {
    %c0_i32 = arith.constant 0 : i32
    %c0_i32_0 = arith.constant 0 : i32
    return %arg0, %c0_i32 : i32, i32
  }
}

</mosaic_0001>

<llo_original>
// kernel: tpu_custom_call.1
$region0: #{tpu_custom_call.1}
  #allocation0 [shape = 'u32[]', space=smem, size = 0x4, offset = 0x4, fixed_abs, tag = 'smem constant byte address 0x4 - core index']
  #allocation1 [shape = 'u32[72,128]{1,0:T(1,128)}', space=vmem, size = 0x9000, scoped, tag = 'internal scratch']
  %s0 = inlined_call_operand.hbm [shape: f32[256,128], index: 0, kind: input, shape index: {}]
  %s1 = inlined_call_operand.hbm [shape: bf16[128,512], index: 1, kind: input, shape index: {}]
  %s2 = inlined_call_operand.hbm [shape: f32[1,512], index: 2, kind: input, shape index: {}]
  %s3 = inlined_call_operand.hbm [shape: bf16[512,512], index: 3, kind: input, shape index: {}]
  %s4 = inlined_call_operand.hbm [shape: f32[1,512], index: 4, kind: input, shape index: {}]
  %s5 = inlined_call_operand.hbm [shape: bf16[512,512], index: 5, kind: input, shape index: {}]
  %s6 = inlined_call_operand.vmem [shape: f32[1,512], index: 6, kind: input, shape index: {}]
  %s7 = inlined_call_operand.hbm [shape: bf16[512,128], index: 7, kind: input, shape index: {}]
  %s8 = inlined_call_operand.vmem [shape: f32[1,128], index: 8, kind: input, shape index: {}]
  %s9 = inlined_call_operand.hbm [shape: f32[256,128], index: 9, kind: output, shape index: {}]
  %s10 = sld [smem:[#allocation0]]
  $region97: #{tpu_custom_call.1} parent=0
    _
  %s12 = ssub.s32 1, %s10
  %s13 = scalar_select 0, %s12, %s10
  $region1: #{tpu_custom_call.1} parent=0
    #allocation2 [shape = 'u8[131072]{0}', space=vmem, size = 0x20000, scoped, tag = 'input window, operand 0']
    #allocation3 [shape = 's32[2]{0}', space=sflag, size = 0x8, scoped, tag = 'scoped memory for tpu_custom_call.1']
    #allocation4 [shape = 's32[2]{0}', space=sflag, size = 0x8, scoped, tag = 'scoped memory for tpu_custom_call.1']
    #allocation5 [shape = 'u8[131072]{0}', space=vmem, size = 0x20000, scoped, tag = 'input window, operand 1, single buffered']
    #allocation6 [shape = 's32[1]{0}', space=sflag, size = 0x4, scoped, tag = 'scoped memory for tpu_custom_call.1']
    #allocation7 [shape = 'u8[2048]{0}', space=vmem, size = 0x800, scoped, tag = 'input window, operand 2, single buffered']
    #allocation8 [shape = 'u8[524288]{0}', space=vmem, size = 0x80000, scoped, tag = 'input window, operand 3, single buffered']
    #allocation9 [shape = 's32[1]{0}', space=sflag, size = 0x4, scoped, tag = 'scoped memory for tpu_custom_call.1']
    #allocation10 [shape = 'u8[2048]{0}', space=vmem, size = 0x800, scoped, tag = 'input window, operand 4, single buffered']
    #allocation11 [shape = 'u8[524288]{0}', space=vmem, size = 0x80000, scoped, tag = 'input window, operand 5, single buffered']
    #allocation12 [shape = 's32[1]{0}', space=sflag, size = 0x4, scoped, tag = 'scoped memory for tpu_custom_call.1']
    #allocation13 [shape = 'u8[131072]{0}', space=vmem, size = 0x20000, scoped, tag = 'input window, operand 7, single buffered']
    #allocation14 [shape = 'u8[131072]{0}', space=vmem, size = 0x20000, scoped, tag = 'output window, operand 0']
    %14 = vsyncpa [#allocation3], 0
    %s15 = scalar_lea.sflag [#allocation3], 1
    %16 = vsyncpa %s15, 0
    %17 = vsyncpa [#allocation6], 0
    %18 = vsyncpa [#allocation9], 0
    %19 = vsyncpa [#allocation12], 0
    %20 = vsyncpa [#allocation4], 0
    %s21 = scalar_lea.sflag [#allocation4], 1
    %22 = vsyncpa %s21, 0
    loop: start=0, step=1, limit=4
    $region2: #{tpu_custom_call.1} parent=1 // loop_pre_header
      _
    $region3: #{tpu_custom_call.1} parent=1 // loop_header
      %s24 = sphi 0, %s28
      %p25 = scmp.ge.s32.totalorder %s24, 4
      %s34 = sphi 0, %s36
      %s37 = sphi 0, %s34
      %s38 = sphi 0, %s37
      %s54 = sphi 0, %s38
      %s58 = sphi 0, %s58
      %s60 = sphi 0, %s58
      %s61 = sphi 0, %s60
      %s75 = sphi 0, %s61
      %s79 = sphi 0, %s79
      %s81 = sphi 0, %s79
      %s82 = sphi 0, %s81
      %s96 = sphi 0, %s82
      %s100 = sphi 0, %s100
      %s102 = sphi 0, %s100
      %s103 = sphi 0, %s102
      %s117 = sphi 0, %s103
      %s121 = sphi 0, %s121
      %s123 = sphi 0, %s121
      %s124 = sphi 0, %s123
      %s138 = sphi 0, %s124
      %s142 = sphi 0, %s142
      %s144 = sphi 0, %s142
      %s145 = sphi 0, %s144
      %s159 = sphi 0, %s145
      %s163 = sphi 0, %s163
      %s165 = sphi 0, %s163
      %s166 = sphi 0, %s165
      %s180 = sphi 0, %s166
      %s184 = sphi 0, %s184
      %s186 = sphi 0, %s184
      %s187 = sphi 0, %s186
      %s201 = sphi 0, %s187
      %s205 = sphi 0, %s205
      %s207 = sphi 0, %s205
      %s208 = sphi 0, %s207
      %s222 = sphi 0, %s208
      %s228 = sphi 0, %s230
      %s231 = sphi 0, %s228
      %s232 = sphi 0, %s231
      %s248 = sphi 0, %s232
    $region4: #{tpu_custom_call.1} parent=1 // loop_header_branch
      %27 = sbr.rel (%p25) target = $region8
    $region5: #{tpu_custom_call.1} parent=1 // loop_body
      %s29 = ssub.s32 %s24, 1
      %s30 = ssub.s32 %s24, 2
      %s31 = sadd.s32 %s24, 1
      %s32 = ssub.s32 %s24, %s31
      %p33 = scmp.eq.s32.totalorder %s32, 0
      %s35 = sadd.s32 %s34, 1
      %s36 = scalar_select %p33, %s34, %s35
      %p39 = pneg %p33
      %p40 = scmp.eq.s32.totalorder %s24, 1
      %p41 = por %p39, %p40
      %p42 = scmp.ne.s32.totalorder %s34, %s37
      %p43 = scmp.eq.s32.totalorder %s24, 0
      %p44 = por %p42, %p43
      %p45 = scmp.ne.s32.totalorder %s34, %s37
      %p46 = scmp.eq.s32.totalorder %s29, 1
      %p47 = por %p45, %p46
      %p48 = scmp.ne.s32.totalorder %s37, %s38
      %p49 = scmp.eq.s32.totalorder %s29, 0
      %p50 = por %p48, %p49
      %p51 = scmp.ne.s32.totalorder %s37, %s38
      %p52 = scmp.eq.s32.totalorder %s30, 1
      %p53 = por %p51, %p52
      %p55 = scmp.ne.s32.totalorder %s38, %s54
      %p56 = scmp.eq.s32.totalorder %s30, 0
      %p57 = por %p55, %p56
      %s59 = sadd.s32 %s58, 1
      %p62 = scmp.eq.s32.totalorder %s24, 1
      %p63 = scmp.ne.s32.totalorder %s58, %s60
      %p64 = scmp.eq.s32.totalorder %s24, 0
      %p65 = por %p63, %p64
      %p66 = scmp.ne.s32.totalorder %s58, %s60
      %p67 = scmp.eq.s32.totalorder %s29, 1
      %p68 = por %p66, %p67
      %p69 = scmp.ne.s32.totalorder %s60, %s61
      %p70 = scmp.eq.s32.totalorder %s29, 0
      %p71 = por %p69, %p70
      %p72 = scmp.ne.s32.totalorder %s60, %s61
      %p73 = scmp.eq.s32.totalorder %s30, 1
      %p74 = por %p72, %p73
      %p76 = scmp.ne.s32.totalorder %s61, %s75
      %p77 = scmp.eq.s32.totalorder %s30, 0
      %p78 = por %p76, %p77
      %s80 = sadd.s32 %s79, 1
      %p83 = scmp.eq.s32.totalorder %s24, 1
      %p84 = scmp.ne.s32.totalorder %s79, %s81
      %p85 = scmp.eq.s32.totalorder %s24, 0
      %p86 = por %p84, %p85
      %p87 = scmp.ne.s32.totalorder %s79, %s81
      %p88 = scmp.eq.s32.totalorder %s29, 1
      %p89 = por %p87, %p88
      %p90 = scmp.ne.s32.totalorder %s81, %s82
      %p91 = scmp.eq.s32.totalorder %s29, 0
      %p92 = por %p90, %p91
      %p93 = scmp.ne.s32.totalorder %s81, %s82
      %p94 = scmp.eq.s32.totalorder %s30, 1
      %p95 = por %p93, %p94
      %p97 = scmp.ne.s32.totalorder %s82, %s96
      %p98 = scmp.eq.s32.totalorder %s30, 0
      %p99 = por %p97, %p98
      %s101 = sadd.s32 %s100, 1
      %p104 = scmp.eq.s32.totalorder %s24, 1
      %p105 = scmp.ne.s32.totalorder %s100, %s102
      %p106 = scmp.eq.s32.totalorder %s24, 0
      %p107 = por %p105, %p106
      %p108 = scmp.ne.s32.totalorder %s100, %s102
      %p109 = scmp.eq.s32.totalorder %s29, 1
      %p110 = por %p108, %p109
      %p111 = scmp.ne.s32.totalorder %s102, %s103
      %p112 = scmp.eq.s32.totalorder %s29, 0
      %p113 = por %p111, %p112
      %p114 = scmp.ne.s32.totalorder %s102, %s103
      %p115 = scmp.eq.s32.totalorder %s30, 1
      %p116 = por %p114, %p115
      %p118 = scmp.ne.s32.totalorder %s103, %s117
      %p119 = scmp.eq.s32.totalorder %s30, 0
      %p120 = por %p118, %p119
      %s122 = sadd.s32 %s121, 1
      %p125 = scmp.eq.s32.totalorder %s24, 1
      %p126 = scmp.ne.s32.totalorder %s121, %s123
      %p127 = scmp.eq.s32.totalorder %s24, 0
      %p128 = por %p126, %p127
      %p129 = scmp.ne.s32.totalorder %s121, %s123
      %p130 = scmp.eq.s32.totalorder %s29, 1
      %p131 = por %p129, %p130
      %p132 = scmp.ne.s32.totalorder %s123, %s124
      %p133 = scmp.eq.s32.totalorder %s29, 0
      %p134 = por %p132, %p133
      %p135 = scmp.ne.s32.totalorder %s123, %s124
      %p136 = scmp.eq.s32.totalorder %s30, 1
      %p137 = por %p135, %p136
      %p139 = scmp.ne.s32.totalorder %s124, %s138
      %p140 = scmp.eq.s32.totalorder %s30, 0
      %p141 = por %p139, %p140
      %s143 = sadd.s32 %s142, 1
      %p146 = scmp.eq.s32.totalorder %s24, 1
      %p147 = scmp.ne.s32.totalorder %s142, %s144
      %p148 = scmp.eq.s32.totalorder %s24, 0
      %p149 = por %p147, %p148
      %p150 = scmp.ne.s32.totalorder %s142, %s144
      %p151 = scmp.eq.s32.totalorder %s29, 1
      %p152 = por %p150, %p151
      %p153 = scmp.ne.s32.totalorder %s144, %s145
      %p154 = scmp.eq.s32.totalorder %s29, 0
      %p155 = por %p153, %p154
      %p156 = scmp.ne.s32.totalorder %s144, %s145
      %p157 = scmp.eq.s32.totalorder %s30, 1
      %p158 = por %p156, %p157
      %p160 = scmp.ne.s32.totalorder %s145, %s159
      %p161 = scmp.eq.s32.totalorder %s30, 0
      %p162 = por %p160, %p161
      %s164 = sadd.s32 %s163, 1
      %p167 = scmp.eq.s32.totalorder %s24, 1
      %p168 = scmp.ne.s32.totalorder %s163, %s165
      %p169 = scmp.eq.s32.totalorder %s24, 0
      %p170 = por %p168, %p169
      %p171 = scmp.ne.s32.totalorder %s163, %s165
      %p172 = scmp.eq.s32.totalorder %s29, 1
      %p173 = por %p171, %p172
      %p174 = scmp.ne.s32.totalorder %s165, %s166
      %p175 = scmp.eq.s32.totalorder %s29, 0
      %p176 = por %p174, %p175
      %p177 = scmp.ne.s32.totalorder %s165, %s166
      %p178 = scmp.eq.s32.totalorder %s30, 1
      %p179 = por %p177, %p178
      %p181 = scmp.ne.s32.totalorder %s166, %s180
      %p182 = scmp.eq.s32.totalorder %s30, 0
      %p183 = por %p181, %p182
      %s185 = sadd.s32 %s184, 1
      %p188 = scmp.eq.s32.totalorder %s24, 1
      %p189 = scmp.ne.s32.totalorder %s184, %s186
      %p190 = scmp.eq.s32.totalorder %s24, 0
      %p191 = por %p189, %p190
      %p192 = scmp.ne.s32.totalorder %s184, %s186
      %p193 = scmp.eq.s32.totalorder %s29, 1
      %p194 = por %p192, %p193
      %p195 = scmp.ne.s32.totalorder %s186, %s187
      %p196 = scmp.eq.s32.totalorder %s29, 0
      %p197 = por %p195, %p196
      %p198 = scmp.ne.s32.totalorder %s186, %s187
      %p199 = scmp.eq.s32.totalorder %s30, 1
      %p200 = por %p198, %p199
      %p202 = scmp.ne.s32.totalorder %s187, %s201
      %p203 = scmp.eq.s32.totalorder %s30, 0
      %p204 = por %p202, %p203
      %s206 = sadd.s32 %s205, 1
      %p209 = scmp.eq.s32.totalorder %s24, 1
      %p210 = scmp.ne.s32.totalorder %s205, %s207
      %p211 = scmp.eq.s32.totalorder %s24, 0
      %p212 = por %p210, %p211
      %p213 = scmp.ne.s32.totalorder %s205, %s207
      %p214 = scmp.eq.s32.totalorder %s29, 1
      %p215 = por %p213, %p214
      %p216 = scmp.ne.s32.totalorder %s207, %s208
      %p217 = scmp.eq.s32.totalorder %s29, 0
      %p218 = por %p216, %p217
      %p219 = scmp.ne.s32.totalorder %s207, %s208
      %p220 = scmp.eq.s32.totalorder %s30, 1
      %p221 = por %p219, %p220
      %p223 = scmp.ne.s32.totalorder %s208, %s222
      %p224 = scmp.eq.s32.totalorder %s30, 0
      %p225 = por %p223, %p224
      %s226 = ssub.s32 %s24, %s31
      %p227 = scmp.eq.s32.totalorder %s226, 0
      %s229 = sadd.s32 %s228, 1
      %s230 = scalar_select %p227, %s228, %s229
      %p233 = pneg %p227
      %p234 = scmp.eq.s32.totalorder %s24, 1
      %p235 = por %p233, %p234
      %p236 = scmp.ne.s32.totalorder %s228, %s231
      %p237 = scmp.eq.s32.totalorder %s24, 0
      %p238 = por %p236, %p237
      %p239 = scmp.ne.s32.totalorder %s228, %s231
      %p240 = scmp.eq.s32.totalorder %s29, 1
      %p241 = por %p239, %p240
      %p242 = scmp.ne.s32.totalorder %s231, %s232
      %p243 = scmp.eq.s32.totalorder %s29, 0
      %p244 = por %p242, %p243
      %p245 = scmp.ne.s32.totalorder %s231, %s232
      %p246 = scmp.eq.s32.totalorder %s30, 1
      %p247 = por %p245, %p246
      %p249 = scmp.ne.s32.totalorder %s232, %s248
      %p250 = scmp.eq.s32.totalorder %s30, 0
      %p251 = por %p249, %p250
      %p252 = scmp.le.s32.totalorder 1, %s24
      %p253 = scmp.lt.s32.totalorder %s24, 3
      %p254 = pnand %p252, %p253
      %p255 = pneg %p254
      // Predicated region
      $region9: #{tpu_custom_call.1} parent=5 // pred_check
        _
      $region10: #{tpu_custom_call.1} parent=5 // pred_check_branch
        %257 = sbr.rel (%p254) target = $region12
      $region11: #{tpu_custom_call.1} parent=5 // pred_region
        %s258 = ssub.s32 %s24, 1
        // Predicated region
        $region13: #{tpu_custom_call.1} parent=11 // pred_check
          %p259 = pneg %p71
        $region14: #{tpu_custom_call.1} parent=11 // pred_check_branch
          %261 = sbr.rel (%p259) target = $region16
        $region15: #{tpu_custom_call.1} parent=11 // pred_region
          %263 = vsyncadd [#allocation6], 0
          %s264 = sshll.u32 %s1, 4
          %s265 = int_to_ptr.hbm [resolvable:$true] %s264
          %s266 = sshll.u32 [#allocation5], 4
          %s267 = int_to_ptr.vmem [resolvable:$true] %s266
          %272 = dma.hbm_to_vmem [thread:$0]  %s265, 4096, %s267, [#allocation6], 256, 256, 16
        $region16: #{tpu_custom_call.1} parent=11 // pred_fallthru
          _
        // Predicated region
        $region17: #{tpu_custom_call.1} parent=11 // pred_check
          %p273 = pneg %p92
        $region18: #{tpu_custom_call.1} parent=11 // pred_check_branch
          %275 = sbr.rel (%p273) target = $region20
        $region19: #{tpu_custom_call.1} parent=11 // pred_region
          %277 = vsyncadd [#allocation6], 0
          %s279 = sshll.u32 %s2, 4
          %s280 = int_to_ptr.hbm [resolvable:$true] %s279
          %s281 = sshll.u32 [#allocation7], 4
          %s282 = int_to_ptr.vmem [resolvable:$true] %s281
          %284 = dma.hbm_to_vmem [thread:$0]  %s280, 64, %s282, [#allocation6]
        $region20: #{tpu_custom_call.1} parent=11 // pred_fallthru
          _
        // Predicated region
        $region21: #{tpu_custom_call.1} parent=11 // pred_check
          %p285 = pneg %p113
        $region22: #{tpu_custom_call.1} parent=11 // pred_check_branch
          %287 = sbr.rel (%p285) target = $region24
        $region23: #{tpu_custom_call.1} parent=11 // pred_region
          %289 = vsyncadd [#allocation9], 0
          %s290 = sshll.u32 %s3, 4
          %s291 = int_to_ptr.hbm [resolvable:$true] %s290
          %s292 = sshll.u32 [#allocation8], 4
          %s293 = int_to_ptr.vmem [resolvable:$true] %s292
          %298 = dma.hbm_to_vmem [thread:$0]  %s291, 16384, %s293, [#allocation9], 256, 256, 16
        $region24: #{tpu_custom_call.1} parent=11 // pred_fallthru
          _
        // Predicated region
        $region25: #{tpu_custom_call.1} parent=11 // pred_check
          %p299 = pneg %p134
        $region26: #{tpu_custom_call.1} parent=11 // pred_check_branch
          %301 = sbr.rel (%p299) target = $region28
        $region27: #{tpu_custom_call.1} parent=11 // pred_region
          %303 = vsyncadd [#allocation9], 0
          %s305 = sshll.u32 %s4, 4
          %s306 = int_to_ptr.hbm [resolvable:$true] %s305
          %s307 = sshll.u32 [#allocation10], 4
          %s308 = int_to_ptr.vmem [resolvable:$true] %s307
          %310 = dma.hbm_to_vmem [thread:$0]  %s306, 64, %s308, [#allocation9]
        $region28: #{tpu_custom_call.1} parent=11 // pred_fallthru
          _
        // Predicated region
        $region29: #{tpu_custom_call.1} parent=11 // pred_check
          %p311 = pneg %p155
        $region30: #{tpu_custom_call.1} parent=11 // pred_check_branch
          %313 = sbr.rel (%p311) target = $region32
        $region31: #{tpu_custom_call.1} parent=11 // pred_region
          %315 = vsyncadd [#allocation12], 0
          %s316 = sshll.u32 %s5, 4
          %s317 = int_to_ptr.hbm [resolvable:$true] %s316
          %s318 = sshll.u32 [#allocation11], 4
          %s319 = int_to_ptr.vmem [resolvable:$true] %s318
          %324 = dma.hbm_to_vmem [thread:$0]  %s317, 16384, %s319, [#allocation12], 256, 256, 16
        $region32: #{tpu_custom_call.1} parent=11 // pred_fallthru
          _
        // Predicated region
        $region33: #{tpu_custom_call.1} parent=11 // pred_check
          %p325 = pneg %p176
        $region34: #{tpu_custom_call.1} parent=11 // pred_check_branch
          %327 = sbr.rel (%p325) target = $region36
        $region35: #{tpu_custom_call.1} parent=11 // pred_region
          _
        $region36: #{tpu_custom_call.1} parent=11 // pred_fallthru
          _
        // Predicated region
        $region37: #{tpu_custom_call.1} parent=11 // pred_check
          %p328 = pneg %p197
        $region38: #{tpu_custom_call.1} parent=11 // pred_check_branch
          %330 = sbr.rel (%p328) target = $region40
        $region39: #{tpu_custom_call.1} parent=11 // pred_region
          %332 = vsyncadd [#allocation12], 0
          %s333 = sshll.u32 %s7, 4
          %s334 = int_to_ptr.hbm [resolvable:$true] %s333
          %s335 = sshll.u32 [#allocation13], 4
          %s336 = int_to_ptr.vmem [resolvable:$true] %s335
          %341 = dma.hbm_to_vmem [thread:$0]  %s334, 4096, %s336, [#allocation12], 64, 64, 4
        $region40: #{tpu_custom_call.1} parent=11 // pred_fallthru
          _
        // Predicated region
        $region41: #{tpu_custom_call.1} parent=11 // pred_check
          %p342 = pneg %p218
        $region42: #{tpu_custom_call.1} parent=11 // pred_check_branch
          %344 = sbr.rel (%p342) target = $region44
        $region43: #{tpu_custom_call.1} parent=11 // pred_region
          _
        $region44: #{tpu_custom_call.1} parent=11 // pred_fallthru
          _
      $region12: #{tpu_custom_call.1} parent=5 // pred_fallthru
        _
      %p345 = scmp.lt.s32.totalorder %s24, 2
      // Predicated region
      $region45: #{tpu_custom_call.1} parent=5 // pred_check
        %p346 = pneg %p345
      $region46: #{tpu_custom_call.1} parent=5 // pred_check_branch
        %348 = sbr.rel (%p346) target = $region48
      $region47: #{tpu_custom_call.1} parent=5 // pred_region
        // Predicated region
        $region49: #{tpu_custom_call.1} parent=47 // pred_check
          %p349 = pneg %p44
        $region50: #{tpu_custom_call.1} parent=47 // pred_check_branch
          %351 = sbr.rel (%p349) target = $region52
        $region51: #{tpu_custom_call.1} parent=47 // pred_region
          %s352 = sand.u32 %s34, 1
          %s353 = scalar_lea.sflag [#allocation3], %s352
          %s354 = sand.u32 %s34, 1
          %s355 = smul.addr %s354, 128
          %s356 = scalar_lea.vmem [#allocation2], %s355
          %s357 = smul.u32 16, %s24
          %359 = vsyncadd %s353, 0
          %s360 = smul.addr %s357, 8
          %s361 = scalar_lea.hbm %s0, %s360
          %s362 = sshll.u32 %s361, 4
          %s363 = int_to_ptr.hbm [resolvable:$true] %s362
          %s364 = sshll.u32 %s356, 4
          %s365 = int_to_ptr.vmem [resolvable:$true] %s364
          %370 = dma.hbm_to_vmem [thread:$0]  %s363, 2048, %s365, %s353, 128, 128, 8
        $region52: #{tpu_custom_call.1} parent=47 // pred_fallthru
          _
      $region48: #{tpu_custom_call.1} parent=5 // pred_fallthru
        _
      %p371 = scmp.le.s32.totalorder 1, %s24
      %p372 = scmp.lt.s32.totalorder %s24, 3
      %p373 = pnand %p371, %p372
      %p374 = pneg %p373
      // Predicated region
      $region53: #{tpu_custom_call.1} parent=5 // pred_check
        _
      $region54: #{tpu_custom_call.1} parent=5 // pred_check_branch
        %376 = sbr.rel (%p373) target = $region56
      $region55: #{tpu_custom_call.1} parent=5 // pred_region
        %s377 = ssub.s32 %s24, 1
        %s378 = sand.u32 %s37, 1
        %s379 = scalar_lea.sflag [#allocation3], %s378
        %s380 = sand.u32 %s37, 1
        %s381 = smul.addr %s380, 128
        %s382 = scalar_lea.vmem [#allocation2], %s381
        // Predicated region
        $region57: #{tpu_custom_call.1} parent=55 // pred_check
          %p383 = pneg %p50
        $region58: #{tpu_custom_call.1} parent=55 // pred_check_branch
          %385 = sbr.rel (%p383) target = $region60
        $region59: #{tpu_custom_call.1} parent=55 // pred_region
          %387 = dma.done %s379, 2048
        $region60: #{tpu_custom_call.1} parent=55 // pred_fallthru
          _
        // Predicated region
        $region61: #{tpu_custom_call.1} parent=55 // pred_check
          %p388 = pneg %p71
        $region62: #{tpu_custom_call.1} parent=55 // pred_check_branch
          %390 = sbr.rel (%p388) target = $region64
        $region63: #{tpu_custom_call.1} parent=55 // pred_region
          %392 = dma.done [#allocation6], 4096
        $region64: #{tpu_custom_call.1} parent=55 // pred_fallthru
          _
        // Predicated region
        $region65: #{tpu_custom_call.1} parent=55 // pred_check
          %p393 = pneg %p92
        $region66: #{tpu_custom_call.1} parent=55 // pred_check_branch
          %395 = sbr.rel (%p393) target = $region68
        $region67: #{tpu_custom_call.1} parent=55 // pred_region
          %397 = dma.done [#allocation6], 64
        $region68: #{tpu_custom_call.1} parent=55 // pred_fallthru
          _
        // Predicated region
        $region69: #{tpu_custom_call.1} parent=55 // pred_check
          %p398 = pneg %p113
        $region70: #{tpu_custom_call.1} parent=55 // pred_check_branch
          %400 = sbr.rel (%p398) target = $region72
        $region71: #{tpu_custom_call.1} parent=55 // pred_region
          %402 = dma.done [#allocation9], 16384
        $region72: #{tpu_custom_call.1} parent=55 // pred_fallthru
          _
        // Predicated region
        $region73: #{tpu_custom_call.1} parent=55 // pred_check
          %p403 = pneg %p134
        $region74: #{tpu_custom_call.1} parent=55 // pred_check_branch
          %405 = sbr.rel (%p403) target = $region76
        $region75: #{tpu_custom_call.1} parent=55 // pred_region
          %407 = dma.done [#allocation9], 64
        $region76: #{tpu_custom_call.1} parent=55 // pred_fallthru
          _
        // Predicated region
        $region77: #{tpu_custom_call.1} parent=55 // pred_check
          %p408 = pneg %p155
        $region78: #{tpu_custom_call.1} parent=55 // pred_check_branch
          %410 = sbr.rel (%p408) target = $region80
        $region79: #{tpu_custom_call.1} parent=55 // pred_region
          %412 = dma.done [#allocation12], 16384
        $region80: #{tpu_custom_call.1} parent=55 // pred_fallthru
          _
        // Predicated region
        $region81: #{tpu_custom_call.1} parent=55 // pred_check
          %p413 = pneg %p197
        $region82: #{tpu_custom_call.1} parent=55 // pred_check_branch
          %415 = sbr.rel (%p413) target = $region84
        $region83: #{tpu_custom_call.1} parent=55 // pred_region
          %417 = dma.done [#allocation12], 4096
        $region84: #{tpu_custom_call.1} parent=55 // pred_fallthru
          _
        %s418 = sand.u32 %s37, 1
        %s419 = scalar_lea.sflag [#allocation3], %s418
        %s420 = sand.u32 %s37, 1
        %s421 = smul.addr %s420, 128
        %s422 = scalar_lea.vmem [#allocation2], %s421
        %p423 = pneg %p50
        %p424 = pneg %p47
        %p425 = pneg %p71
        %p426 = pneg %p68
        %p427 = pneg %p92
        %p428 = pneg %p89
        %p429 = pneg %p113
        %p430 = pneg %p110
        %p431 = pneg %p134
        %p432 = pneg %p131
        %p433 = pneg %p155
        %p434 = pneg %p152
        %p435 = pneg %p176
        %p436 = pneg %p173
        %p437 = pneg %p197
        %p438 = pneg %p194
        %p439 = pneg %p218
        %p440 = pneg %p215
        %p441 = pneg %p244
        %p442 = pneg %p241
        %s443 = sand.u32 %s231, 1
        %s444 = scalar_lea.sflag [#allocation4], %s443
        %s445 = sand.u32 %s231, 1
        %s446 = smul.addr %s445, 128
        %s447 = scalar_lea.vmem [#allocation14], %s446
        %s448 = smul.u32 16, %s29
        %s449 = smul.u32 16, %s29
        %v450 = vld [vmem:[%s382] sm:$0xff]
        %v451 = vld [vmem:[%s382 + $0x8] sm:$0xff]
        %v452 = vld [vmem:[%s382 + $0x10] sm:$0xff]
        %v453 = vld [vmem:[%s382 + $0x18] sm:$0xff]
        %v454 = vld [vmem:[%s382 + $0x20] sm:$0xff]
        %v455 = vld [vmem:[%s382 + $0x28] sm:$0xff]
        %v456 = vld [vmem:[%s382 + $0x30] sm:$0xff]
        %v457 = vld [vmem:[%s382 + $0x38] sm:$0xff]
        %v458 = vld [vmem:[%s382 + $0x40] sm:$0xff]
        %v459 = vld [vmem:[%s382 + $0x48] sm:$0xff]
        %v460 = vld [vmem:[%s382 + $0x50] sm:$0xff]
        %v461 = vld [vmem:[%s382 + $0x58] sm:$0xff]
        %v462 = vld [vmem:[%s382 + $0x60] sm:$0xff]
        %v463 = vld [vmem:[%s382 + $0x68] sm:$0xff]
        %v464 = vld [vmem:[%s382 + $0x70] sm:$0xff]
        %v465 = vld [vmem:[%s382 + $0x78] sm:$0xff]
        %v466 = vpack.c.bf16 %v451, %v450
        %v467 = vpack.c.bf16 %v453, %v452
        %v468 = vpack.c.bf16 %v455, %v454
        %v469 = vpack.c.bf16 %v457, %v456
        %v470 = vpack.c.bf16 %v459, %v458
        %v471 = vpack.c.bf16 %v461, %v460
        %v472 = vpack.c.bf16 %v463, %v462
        %v473 = vpack.c.bf16 %v465, %v464
        %v474 = vld [vmem:[#allocation5] sm:$0xff]
        %v475 = vld [vmem:[#allocation5 + $0x8] sm:$0xff]
        %v476 = vld [vmem:[#allocation5 + $0x10] sm:$0xff]
        %v477 = vld [vmem:[#allocation5 + $0x18] sm:$0xff]
        %v478 = vld [vmem:[#allocation5 + $0x20] sm:$0xff]
        %v479 = vld [vmem:[#allocation5 + $0x28] sm:$0xff]
        %v480 = vld [vmem:[#allocation5 + $0x30] sm:$0xff]
        %v481 = vld [vmem:[#allocation5 + $0x38] sm:$0xff]
        %v482 = vld [vmem:[#allocation5 + $0x40] sm:$0xff]
        %v483 = vld [vmem:[#allocation5 + $0x48] sm:$0xff]
        %v484 = vld [vmem:[#allocation5 + $0x50] sm:$0xff]
        %v485 = vld [vmem:[#allocation5 + $0x58] sm:$0xff]
        %v486 = vld [vmem:[#allocation5 + $0x60] sm:$0xff]
        %v487 = vld [vmem:[#allocation5 + $0x68] sm:$0xff]
        %v488 = vld [vmem:[#allocation5 + $0x70] sm:$0xff]
        %v489 = vld [vmem:[#allocation5 + $0x78] sm:$0xff]
        %v490 = vld [vmem:[#allocation5 + $0x80] sm:$0xff]
        %v491 = vld [vmem:[#allocation5 + $0x88] sm:$0xff]
        %v492 = vld [vmem:[#allocation5 + $0x90] sm:$0xff]
        %v493 = vld [vmem:[#allocation5 + $0x98] sm:$0xff]
        %v494 = vld [vmem:[#allocation5 + $0xa0] sm:$0xff]
        %v495 = vld [vmem:[#allocation5 + $0xa8] sm:$0xff]
        %v496 = vld [vmem:[#allocation5 + $0xb0] sm:$0xff]
        %v497 = vld [vmem:[#allocation5 + $0xb8] sm:$0xff]
        %v498 = vld [vmem:[#allocation5 + $0xc0] sm:$0xff]
        %v499 = vld [vmem:[#allocation5 + $0xc8] sm:$0xff]
        %v500 = vld [vmem:[#allocation5 + $0xd0] sm:$0xff]
        %v501 = vld [vmem:[#allocation5 + $0xd8] sm:$0xff]
        %v502 = vld [vmem:[#allocation5 + $0xe0] sm:$0xff]
        %v503 = vld [vmem:[#allocation5 + $0xe8] sm:$0xff]
        %v504 = vld [vmem:[#allocation5 + $0xf0] sm:$0xff]
        %v505 = vld [vmem:[#allocation5 + $0xf8] sm:$0xff]
        %v506 = vld [vmem:[#allocation7] sm:$0xf]
        %v508 = vperm.slane %v506, 0
        %v509 = vperm.slane %v506, 1
        %v510 = vperm.slane %v506, 2
        %v511 = vperm.slane %v506, 3
        %v548 = vunpack.c.l.b16 %v474
        %v549 = vunpack.c.h.b16 %v474
        %v550 = vunpack.c.l.b16 %v475
        %v551 = vunpack.c.h.b16 %v475
        %v552 = vunpack.c.l.b16 %v476
        %v553 = vunpack.c.h.b16 %v476
        %v554 = vunpack.c.l.b16 %v477
        %v555 = vunpack.c.h.b16 %v477
        %v556 = vunpack.c.l.b16 %v478
        %v557 = vunpack.c.h.b16 %v478
        %v558 = vunpack.c.l.b16 %v479
        %v559 = vunpack.c.h.b16 %v479
        %v560 = vunpack.c.l.b16 %v480
        %v561 = vunpack.c.h.b16 %v480
        %v562 = vunpack.c.l.b16 %v481
        %v563 = vunpack.c.h.b16 %v481
        %v564 = vunpack.c.l.b16 %v482
        %v565 = vunpack.c.h.b16 %v482
        %v566 = vunpack.c.l.b16 %v483
        %v567 = vunpack.c.h.b16 %v483
        %v568 = vunpack.c.l.b16 %v484
        %v569 = vunpack.c.h.b16 %v484
        %v570 = vunpack.c.l.b16 %v485
        %v571 = vunpack.c.h.b16 %v485
        %v572 = vunpack.c.l.b16 %v486
        %v573 = vunpack.c.h.b16 %v486
        %v574 = vunpack.c.l.b16 %v487
        %v575 = vunpack.c.h.b16 %v487
        %v576 = vunpack.c.l.b16 %v488
        %v577 = vunpack.c.h.b16 %v488
        %v578 = vunpack.c.l.b16 %v489
        %v579 = vunpack.c.h.b16 %v489
        %v580 = vunpack.c.l.b16 %v490
        %v581 = vunpack.c.h.b16 %v490
        %v582 = vunpack.c.l.b16 %v491
        %v583 = vunpack.c.h.b16 %v491
        %v584 = vunpack.c.l.b16 %v492
        %v585 = vunpack.c.h.b16 %v492
        %v586 = vunpack.c.l.b16 %v493
        %v587 = vunpack.c.h.b16 %v493
        %v588 = vunpack.c.l.b16 %v494
        %v589 = vunpack.c.h.b16 %v494
        %v590 = vunpack.c.l.b16 %v495
        %v591 = vunpack.c.h.b16 %v495
        %v592 = vunpack.c.l.b16 %v496
        %v593 = vunpack.c.h.b16 %v496
        %v594 = vunpack.c.l.b16 %v497
        %v595 = vunpack.c.h.b16 %v497
        %v596 = vunpack.c.l.b16 %v498
        %v597 = vunpack.c.h.b16 %v498
        %v598 = vunpack.c.l.b16 %v499
        %v599 = vunpack.c.h.b16 %v499
        %v600 = vunpack.c.l.b16 %v500
        %v601 = vunpack.c.h.b16 %v500
        %v602 = vunpack.c.l.b16 %v501
        %v603 = vunpack.c.h.b16 %v501
        %v604 = vunpack.c.l.b16 %v502
        %v605 = vunpack.c.h.b16 %v502
        %v606 = vunpack.c.l.b16 %v503
        %v607 = vunpack.c.h.b16 %v503
        %v608 = vunpack.c.l.b16 %v504
        %v609 = vunpack.c.h.b16 %v504
        %v610 = vunpack.c.l.b16 %v505
        %v611 = vunpack.c.h.b16 %v505
        %v612 = vpack.c.b16 %v552, %v548
        %v613 = vpack.c.b16 %v553, %v549
        %v614 = vpack.c.b16 %v554, %v550
        %v615 = vpack.c.b16 %v555, %v551
        %v616 = vpack.c.b16 %v560, %v556
        %v617 = vpack.c.b16 %v561, %v557
        %v618 = vpack.c.b16 %v562, %v558
        %v619 = vpack.c.b16 %v563, %v559
        %v620 = vpack.c.b16 %v568, %v564
        %v621 = vpack.c.b16 %v569, %v565
        %v622 = vpack.c.b16 %v570, %v566
        %v623 = vpack.c.b16 %v571, %v567
        %v624 = vpack.c.b16 %v576, %v572
        %v625 = vpack.c.b16 %v577, %v573
        %v626 = vpack.c.b16 %v578, %v574
        %v627 = vpack.c.b16 %v579, %v575
        %v628 = vpack.c.b16 %v584, %v580
        %v629 = vpack.c.b16 %v585, %v581
        %v630 = vpack.c.b16 %v586, %v582
        %v631 = vpack.c.b16 %v587, %v583
        %v632 = vpack.c.b16 %v592, %v588
        %v633 = vpack.c.b16 %v593, %v589
        %v634 = vpack.c.b16 %v594, %v590
        %v635 = vpack.c.b16 %v595, %v591
        %v636 = vpack.c.b16 %v600, %v596
        %v637 = vpack.c.b16 %v601, %v597
        %v638 = vpack.c.b16 %v602, %v598
        %v639 = vpack.c.b16 %v603, %v599
        %v640 = vpack.c.b16 %v608, %v604
        %v641 = vpack.c.b16 %v609, %v605
        %v642 = vpack.c.b16 %v610, %v606
        %v643 = vpack.c.b16 %v611, %v607
        %676 = vmatpush.bf16.msra.mxu0 %v640
        %677 = vmatpush.bf16.msra.mxu0 %v636
        %678 = vmatpush.bf16.msra.mxu0 %v632
        %679 = vmatpush.bf16.msra.mxu0 %v628
        %680 = vmatpush.bf16.msra.mxu0 %v624
        %681 = vmatpush.bf16.msra.mxu0 %v620
        %682 = vmatpush.bf16.msra.mxu0 %v616
        %683 = vmatpush.bf16.msra.mxu0 %v612
        %684 = vmatmul.bf16.gmra.mxu0 %v466
        %v685 = vpop.f32.mrf.mxu0
        %v686 = vadd.f32 %v508, %v685
        %v687 = vpop.f32.mrf.mxu0
        %v688 = vadd.f32 %v508, %v687
        %689 = vmatmul.bf16.gmra.mxu0 %v467
        %v690 = vpop.f32.mrf.mxu0
        %v691 = vadd.f32 %v508, %v690
        %v692 = vpop.f32.mrf.mxu0
        %v693 = vadd.f32 %v508, %v692
        %694 = vmatmul.bf16.gmra.mxu0 %v468
        %v695 = vpop.f32.mrf.mxu0
        %v696 = vadd.f32 %v508, %v695
        %v697 = vpop.f32.mrf.mxu0
        %v698 = vadd.f32 %v508, %v697
        %699 = vmatmul.bf16.gmra.mxu0 %v469
        %v700 = vpop.f32.mrf.mxu0
        %v701 = vadd.f32 %v508, %v700
        %v702 = vpop.f32.mrf.mxu0
        %v703 = vadd.f32 %v508, %v702
        %704 = vmatmul.bf16.gmra.mxu0 %v470
        %v705 = vpop.f32.mrf.mxu0
        %v706 = vadd.f32 %v508, %v705
        %v707 = vpop.f32.mrf.mxu0
        %v708 = vadd.f32 %v508, %v707
        %709 = vmatmul.bf16.gmra.mxu0 %v471
        %v710 = vpop.f32.mrf.mxu0
        %v711 = vadd.f32 %v508, %v710
        %v712 = vpop.f32.mrf.mxu0
        %v713 = vadd.f32 %v508, %v712
        %714 = vmatmul.bf16.gmra.mxu0 %v472
        %v715 = vpop.f32.mrf.mxu0
        %v716 = vadd.f32 %v508, %v715
        %v717 = vpop.f32.mrf.mxu0
        %v718 = vadd.f32 %v508, %v717
        %719 = vmatmul.bf16.gmra.mxu0 %v473
        %v720 = vpop.f32.mrf.mxu0
        %v721 = vadd.f32 %v508, %v720
        %v722 = vpop.f32.mrf.mxu0
        %v723 = vadd.f32 %v508, %v722
        %724 = vdwg.mxu0
        %725 = vmatpush.bf16.msra.mxu0 %v641
        %726 = vmatpush.bf16.msra.mxu0 %v637
        %727 = vmatpush.bf16.msra.mxu0 %v633
        %728 = vmatpush.bf16.msra.mxu0 %v629
        %729 = vmatpush.bf16.msra.mxu0 %v625
        %730 = vmatpush.bf16.msra.mxu0 %v621
        %731 = vmatpush.bf16.msra.mxu0 %v617
        %732 = vmatpush.bf16.msra.mxu0 %v613
        %733 = vmatmul.bf16.gmra.mxu0 %v466
        %v734 = vpop.f32.mrf.mxu0
        %v735 = vadd.f32 %v509, %v734
        %v736 = vpop.f32.mrf.mxu0
        %v737 = vadd.f32 %v509, %v736
        %738 = vmatmul.bf16.gmra.mxu0 %v467
        %v739 = vpop.f32.mrf.mxu0
        %v740 = vadd.f32 %v509, %v739
        %v741 = vpop.f32.mrf.mxu0
        %v742 = vadd.f32 %v509, %v741
        %743 = vmatmul.bf16.gmra.mxu0 %v468
        %v744 = vpop.f32.mrf.mxu0
        %v745 = vadd.f32 %v509, %v744
        %v746 = vpop.f32.mrf.mxu0
        %v747 = vadd.f32 %v509, %v746
        %748 = vmatmul.bf16.gmra.mxu0 %v469
        %v749 = vpop.f32.mrf.mxu0
        %v750 = vadd.f32 %v509, %v749
        %v751 = vpop.f32.mrf.mxu0
        %v752 = vadd.f32 %v509, %v751
        %753 = vmatmul.bf16.gmra.mxu0 %v470
        %v754 = vpop.f32.mrf.mxu0
        %v755 = vadd.f32 %v509, %v754
        %v756 = vpop.f32.mrf.mxu0
        %v757 = vadd.f32 %v509, %v756
        %758 = vmatmul.bf16.gmra.mxu0 %v471
        %v759 = vpop.f32.mrf.mxu0
        %v760 = vadd.f32 %v509, %v759
        %v761 = vpop.f32.mrf.mxu0
        %v762 = vadd.f32 %v509, %v761
        %763 = vmatmul.bf16.gmra.mxu0 %v472
        %v764 = vpop.f32.mrf.mxu0
        %v765 = vadd.f32 %v509, %v764
        %v766 = vpop.f32.mrf.mxu0
        %v767 = vadd.f32 %v509, %v766
        %768 = vmatmul.bf16.gmra.mxu0 %v473
        %v769 = vpop.f32.mrf.mxu0
        %v770 = vadd.f32 %v509, %v769
        %v771 = vpop.f32.mrf.mxu0
        %v772 = vadd.f32 %v509, %v771
        %773 = vdwg.mxu0
        %774 = vmatpush.bf16.msra.mxu0 %v642
        %775 = vmatpush.bf16.msra.mxu0 %v638
        %776 = vmatpush.bf16.msra.mxu0 %v634
        %777 = vmatpush.bf16.msra.mxu0 %v630
        %778 = vmatpush.bf16.msra.mxu0 %v626
        %779 = vmatpush.bf16.msra.mxu0 %v622
        %780 = vmatpush.bf16.msra.mxu0 %v618
        %781 = vmatpush.bf16.msra.mxu0 %v614
        %782 = vmatmul.bf16.gmra.mxu0 %v466
        %v783 = vpop.f32.mrf.mxu0
        %v784 = vadd.f32 %v510, %v783
        %v785 = vpop.f32.mrf.mxu0
        %v786 = vadd.f32 %v510, %v785
        %787 = vmatmul.bf16.gmra.mxu0 %v467
        %v788 = vpop.f32.mrf.mxu0
        %v789 = vadd.f32 %v510, %v788
        %v790 = vpop.f32.mrf.mxu0
        %v791 = vadd.f32 %v510, %v790
        %792 = vmatmul.bf16.gmra.mxu0 %v468
        %v793 = vpop.f32.mrf.mxu0
        %v794 = vadd.f32 %v510, %v793
        %v795 = vpop.f32.mrf.mxu0
        %v796 = vadd.f32 %v510, %v795
        %797 = vmatmul.bf16.gmra.mxu0 %v469
        %v798 = vpop.f32.mrf.mxu0
        %v799 = vadd.f32 %v510, %v798
        %v800 = vpop.f32.mrf.mxu0
        %v801 = vadd.f32 %v510, %v800
        %802 = vmatmul.bf16.gmra.mxu0 %v470
        %v803 = vpop.f32.mrf.mxu0
        %v804 = vadd.f32 %v510, %v803
        %v805 = vpop.f32.mrf.mxu0
        %v806 = vadd.f32 %v510, %v805
        %807 = vmatmul.bf16.gmra.mxu0 %v471
        %v808 = vpop.f32.mrf.mxu0
        %v809 = vadd.f32 %v510, %v808
        %v810 = vpop.f32.mrf.mxu0
        %v811 = vadd.f32 %v510, %v810
        %812 = vmatmul.bf16.gmra.mxu0 %v472
        %v813 = vpop.f32.mrf.mxu0
        %v814 = vadd.f32 %v510, %v813
        %v815 = vpop.f32.mrf.mxu0
        %v816 = vadd.f32 %v510, %v815
        %817 = vmatmul.bf16.gmra.mxu0 %v473
        %v818 = vpop.f32.mrf.mxu0
        %v819 = vadd.f32 %v510, %v818
        %v820 = vpop.f32.mrf.mxu0
        %v821 = vadd.f32 %v510, %v820
        %822 = vdwg.mxu0
        %823 = vmatpush.bf16.msra.mxu0 %v643
        %824 = vmatpush.bf16.msra.mxu0 %v639
        %825 = vmatpush.bf16.msra.mxu0 %v635
        %826 = vmatpush.bf16.msra.mxu0 %v631
        %827 = vmatpush.bf16.msra.mxu0 %v627
        %828 = vmatpush.bf16.msra.mxu0 %v623
        %829 = vmatpush.bf16.msra.mxu0 %v619
        %830 = vmatpush.bf16.msra.mxu0 %v615
        %831 = vmatmul.bf16.gmra.mxu0 %v466
        %v832 = vpop.f32.mrf.mxu0
        %v833 = vadd.f32 %v511, %v832
        %v834 = vpop.f32.mrf.mxu0
        %v835 = vadd.f32 %v511, %v834
        %836 = vmatmul.bf16.gmra.mxu0 %v467
        %v837 = vpop.f32.mrf.mxu0
        %v838 = vadd.f32 %v511, %v837
        %v839 = vpop.f32.mrf.mxu0
        %v840 = vadd.f32 %v511, %v839
        %841 = vmatmul.bf16.gmra.mxu0 %v468
        %v842 = vpop.f32.mrf.mxu0
        %v843 = vadd.f32 %v511, %v842
        %v844 = vpop.f32.mrf.mxu0
        %v845 = vadd.f32 %v511, %v844
        %846 = vmatmul.bf16.gmra.mxu0 %v469
        %v847 = vpop.f32.mrf.mxu0
        %v848 = vadd.f32 %v511, %v847
        %v849 = vpop.f32.mrf.mxu0
        %v850 = vadd.f32 %v511, %v849
        %851 = vmatmul.bf16.gmra.mxu0 %v470
        %v852 = vpop.f32.mrf.mxu0
        %v853 = vadd.f32 %v511, %v852
        %v854 = vpop.f32.mrf.mxu0
        %v855 = vadd.f32 %v511, %v854
        %856 = vmatmul.bf16.gmra.mxu0 %v471
        %v857 = vpop.f32.mrf.mxu0
        %v858 = vadd.f32 %v511, %v857
        %v859 = vpop.f32.mrf.mxu0
        %v860 = vadd.f32 %v511, %v859
        %861 = vmatmul.bf16.gmra.mxu0 %v472
        %v862 = vpop.f32.mrf.mxu0
        %v863 = vadd.f32 %v511, %v862
        %v864 = vpop.f32.mrf.mxu0
        %v865 = vadd.f32 %v511, %v864
        %866 = vmatmul.bf16.gmra.mxu0 %v473
        %v867 = vpop.f32.mrf.mxu0
        %v868 = vadd.f32 %v511, %v867
        %v869 = vpop.f32.mrf.mxu0
        %v870 = vadd.f32 %v511, %v869
        %871 = vdwg.mxu0
        %v872 = vmax.f32 %v686, 0.0
        %v873 = vmax.f32 %v735, 0.0
        %v874 = vmax.f32 %v784, 0.0
        %v875 = vmax.f32 %v833, 0.0
        %v876 = vmax.f32 %v688, 0.0
        %v877 = vmax.f32 %v737, 0.0
        %v878 = vmax.f32 %v786, 0.0
        %v879 = vmax.f32 %v835, 0.0
        %v880 = vmax.f32 %v691, 0.0
        %v881 = vmax.f32 %v740, 0.0
        %v882 = vmax.f32 %v789, 0.0
        %v883 = vmax.f32 %v838, 0.0
        %v884 = vmax.f32 %v693, 0.0
        %v885 = vmax.f32 %v742, 0.0
        %v886 = vmax.f32 %v791, 0.0
        %v887 = vmax.f32 %v840, 0.0
        %v888 = vmax.f32 %v696, 0.0
        %v889 = vmax.f32 %v745, 0.0
        %v890 = vmax.f32 %v794, 0.0
        %v891 = vmax.f32 %v843, 0.0
        %v892 = vmax.f32 %v698, 0.0
        %v893 = vmax.f32 %v747, 0.0
        %v894 = vmax.f32 %v796, 0.0
        %v895 = vmax.f32 %v845, 0.0
        %v896 = vmax.f32 %v701, 0.0
        %v897 = vmax.f32 %v750, 0.0
        %v898 = vmax.f32 %v799, 0.0
        %v899 = vmax.f32 %v848, 0.0
        %v900 = vmax.f32 %v703, 0.0
        %v901 = vmax.f32 %v752, 0.0
        %v902 = vmax.f32 %v801, 0.0
        %v903 = vmax.f32 %v850, 0.0
        %v904 = vmax.f32 %v706, 0.0
        %v905 = vmax.f32 %v755, 0.0
        %v906 = vmax.f32 %v804, 0.0
        %v907 = vmax.f32 %v853, 0.0
        %v908 = vmax.f32 %v708, 0.0
        %v909 = vmax.f32 %v757, 0.0
        %v910 = vmax.f32 %v806, 0.0
        %v911 = vmax.f32 %v855, 0.0
        %v912 = vmax.f32 %v711, 0.0
        %v913 = vmax.f32 %v760, 0.0
        %v914 = vmax.f32 %v809, 0.0
        %v915 = vmax.f32 %v858, 0.0
        %v916 = vmax.f32 %v713, 0.0
        %v917 = vmax.f32 %v762, 0.0
        %v918 = vmax.f32 %v811, 0.0
        %v919 = vmax.f32 %v860, 0.0
        %v920 = vmax.f32 %v716, 0.0
        %v921 = vmax.f32 %v765, 0.0
        %v922 = vmax.f32 %v814, 0.0
        %v923 = vmax.f32 %v863, 0.0
        %v924 = vmax.f32 %v718, 0.0
        %v925 = vmax.f32 %v767, 0.0
        %v926 = vmax.f32 %v816, 0.0
        %v927 = vmax.f32 %v865, 0.0
        %v928 = vmax.f32 %v721, 0.0
        %v929 = vmax.f32 %v770, 0.0
        %v930 = vmax.f32 %v819, 0.0
        %v931 = vmax.f32 %v868, 0.0
        %v932 = vmax.f32 %v723, 0.0
        %v933 = vmax.f32 %v772, 0.0
        %v934 = vmax.f32 %v821, 0.0
        %v935 = vmax.f32 %v870, 0.0
        %v936 = vpack.c.bf16 %v876, %v872
        %v937 = vpack.c.bf16 %v877, %v873
        %v938 = vpack.c.bf16 %v878, %v874
        %v939 = vpack.c.bf16 %v879, %v875
        %v940 = vpack.c.bf16 %v884, %v880
        %v941 = vpack.c.bf16 %v885, %v881
        %v942 = vpack.c.bf16 %v886, %v882
        %v943 = vpack.c.bf16 %v887, %v883
        %v944 = vpack.c.bf16 %v892, %v888
        %v945 = vpack.c.bf16 %v893, %v889
        %v946 = vpack.c.bf16 %v894, %v890
        %v947 = vpack.c.bf16 %v895, %v891
        %v948 = vpack.c.bf16 %v900, %v896
        %v949 = vpack.c.bf16 %v901, %v897
        %v950 = vpack.c.bf16 %v902, %v898
        %v951 = vpack.c.bf16 %v903, %v899
        %v952 = vpack.c.bf16 %v908, %v904
        %v953 = vpack.c.bf16 %v909, %v905
        %v954 = vpack.c.bf16 %v910, %v906
        %v955 = vpack.c.bf16 %v911, %v907
        %v956 = vpack.c.bf16 %v916, %v912
        %v957 = vpack.c.bf16 %v917, %v913
        %v958 = vpack.c.bf16 %v918, %v914
        %v959 = vpack.c.bf16 %v919, %v915
        %v960 = vpack.c.bf16 %v924, %v920
        %v961 = vpack.c.bf16 %v925, %v921
        %v962 = vpack.c.bf16 %v926, %v922
        %v963 = vpack.c.bf16 %v927, %v923
        %v964 = vpack.c.bf16 %v932, %v928
        %v965 = vpack.c.bf16 %v933, %v929
        %v966 = vpack.c.bf16 %v934, %v930
        %v967 = vpack.c.bf16 %v935, %v931
        %v968 = vld [vmem:[#allocation8] sm:$0xff]
        %v969 = vld [vmem:[#allocation8 + $0x8] sm:$0xff]
        %v970 = vld [vmem:[#allocation8 + $0x10] sm:$0xff]
        %v971 = vld [vmem:[#allocation8 + $0x18] sm:$0xff]
        %v972 = vld [vmem:[#allocation8 + $0x20] sm:$0xff]
        %v973 = vld [vmem:[#allocation8 + $0x28] sm:$0xff]
        %v974 = vld [vmem:[#allocation8 + $0x30] sm:$0xff]
        %v975 = vld [vmem:[#allocation8 + $0x38] sm:$0xff]
        %v976 = vld [vmem:[#allocation8 + $0x40] sm:$0xff]
        %v977 = vld [vmem:[#allocation8 + $0x48] sm:$0xff]
        %v978 = vld [vmem:[#allocation8 + $0x50] sm:$0xff]
        %v979 = vld [vmem:[#allocation8 + $0x58] sm:$0xff]
        %v980 = vld [vmem:[#allocation8 + $0x60] sm:$0xff]
        %v981 = vld [vmem:[#allocation8 + $0x68] sm:$0xff]
        %v982 = vld [vmem:[#allocation8 + $0x70] sm:$0xff]
        %v983 = vld [vmem:[#allocation8 + $0x78] sm:$0xff]
        %v984 = vld [vmem:[#allocation8 + $0x80] sm:$0xff]
        %v985 = vld [vmem:[#allocation8 + $0x88] sm:$0xff]
        %v986 = vld [vmem:[#allocation8 + $0x90] sm:$0xff]
        %v987 = vld [vmem:[#allocation8 + $0x98] sm:$0xff]
        %v988 = vld [vmem:[#allocation8 + $0xa0] sm:$0xff]
        %v989 = vld [vmem:[#allocation8 + $0xa8] sm:$0xff]
        %v990 = vld [vmem:[#allocation8 + $0xb0] sm:$0xff]
        %v991 = vld [vmem:[#allocation8 + $0xb8] sm:$0xff]
        %v992 = vld [vmem:[#allocation8 + $0xc0] sm:$0xff]
        %v993 = vld [vmem:[#allocation8 + $0xc8] sm:$0xff]
        %v994 = vld [vmem:[#allocation8 + $0xd0] sm:$0xff]
        %v995 = vld [vmem:[#allocation8 + $0xd8] sm:$0xff]
        %v996 = vld [vmem:[#allocation8 + $0xe0] sm:$0xff]
        %v997 = vld [vmem:[#allocation8 + $0xe8] sm:$0xff]
        %v998 = vld [vmem:[#allocation8 + $0xf0] sm:$0xff]
        %v999 = vld [vmem:[#allocation8 + $0xf8] sm:$0xff]
        %v1000 = vld [vmem:[#allocation8 + $0x100] sm:$0xff]
        %v1001 = vld [vmem:[#allocation8 + $0x108] sm:$0xff]
        %v1002 = vld [vmem:[#allocation8 + $0x110] sm:$0xff]
        %v1003 = vld [vmem:[#allocation8 + $0x118] sm:$0xff]
        %v1004 = vld [vmem:[#allocation8 + $0x120] sm:$0xff]
        %v1005 = vld [vmem:[#allocation8 + $0x128] sm:$0xff]
        %v1006 = vld [vmem:[#allocation8 + $0x130] sm:$0xff]
        %v1007 = vld [vmem:[#allocation8 + $0x138] sm:$0xff]
        %v1008 = vld [vmem:[#allocation8 + $0x140] sm:$0xff]
        %v1009 = vld [vmem:[#allocation8 + $0x148] sm:$0xff]
        %v1010 = vld [vmem:[#allocation8 + $0x150] sm:$0xff]
        %v1011 = vld [vmem:[#allocation8 + $0x158] sm:$0xff]
        %v1012 = vld [vmem:[#allocation8 + $0x160] sm:$0xff]
        %v1013 = vld [vmem:[#allocation8 + $0x168] sm:$0xff]
        %v1014 = vld [vmem:[#allocation8 + $0x170] sm:$0xff]
        %v1015 = vld [vmem:[#allocation8 + $0x178] sm:$0xff]
        %v1016 = vld [vmem:[#allocation8 + $0x180] sm:$0xff]
        %v1017 = vld [vmem:[#allocation8 + $0x188] sm:$0xff]
        %v1018 = vld [vmem:[#allocation8 + $0x190] sm:$0xff]
        %v1019 = vld [vmem:[#allocation8 + $0x198] sm:$0xff]
        %v1020 = vld [vmem:[#allocation8 + $0x1a0] sm:$0xff]
        %v1021 = vld [vmem:[#allocation8 + $0x1a8] sm:$0xff]
        %v1022 = vld [vmem:[#allocation8 + $0x1b0] sm:$0xff]
        %v1023 = vld [vmem:[#allocation8 + $0x1b8] sm:$0xff]
        %v1024 = vld [vmem:[#allocation8 + $0x1c0] sm:$0xff]
        %v1025 = vld [vmem:[#allocation8 + $0x1c8] sm:$0xff]
        %v1026 = vld [vmem:[#allocation8 + $0x1d0] sm:$0xff]
        %v1027 = vld [vmem:[#allocation8 + $0x1d8] sm:$0xff]
        %v1028 = vld [vmem:[#allocation8 + $0x1e0] sm:$0xff]
        %v1029 = vld [vmem:[#allocation8 + $0x1e8] sm:$0xff]
        %v1030 = vld [vmem:[#allocation8 + $0x1f0] sm:$0xff]
        %v1031 = vld [vmem:[#allocation8 + $0x1f8] sm:$0xff]
        %v1032 = vld [vmem:[#allocation8 + $0x200] sm:$0xff]
        %v1033 = vld [vmem:[#allocation8 + $0x208] sm:$0xff]
        %v1034 = vld [vmem:[#allocation8 + $0x210] sm:$0xff]
        %v1035 = vld [vmem:[#allocation8 + $0x218] sm:$0xff]
        %v1036 = vld [vmem:[#allocation8 + $0x220] sm:$0xff]
        %v1037 = vld [vmem:[#allocation8 + $0x228] sm:$0xff]
        %v1038 = vld [vmem:[#allocation8 + $0x230] sm:$0xff]
        %v1039 = vld [vmem:[#allocation8 + $0x238] sm:$0xff]
        %v1040 = vld [vmem:[#allocation8 + $0x240] sm:$0xff]
        %v1041 = vld [vmem:[#allocation8 + $0x248] sm:$0xff]
        %v1042 = vld [vmem:[#allocation8 + $0x250] sm:$0xff]
        %v1043 = vld [vmem:[#allocation8 + $0x258] sm:$0xff]
        %v1044 = vld [vmem:[#allocation8 + $0x260] sm:$0xff]
        %v1045 = vld [vmem:[#allocation8 + $0x268] sm:$0xff]
        %v1046 = vld [vmem:[#allocation8 + $0x270] sm:$0xff]
        %v1047 = vld [vmem:[#allocation8 + $0x278] sm:$0xff]
        %v1048 = vld [vmem:[#allocation8 + $0x280] sm:$0xff]
        %v1049 = vld [vmem:[#allocation8 + $0x288] sm:$0xff]
        %v1050 = vld [vmem:[#allocation8 + $0x290] sm:$0xff]
        %v1051 = vld [vmem:[#allocation8 + $0x298] sm:$0xff]
        %v1052 = vld [vmem:[#allocation8 + $0x2a0] sm:$0xff]
        %v1053 = vld [vmem:[#allocation8 + $0x2a8] sm:$0xff]
        %v1054 = vld [vmem:[#allocation8 + $0x2b0] sm:$0xff]
        %v1055 = vld [vmem:[#allocation8 + $0x2b8] sm:$0xff]
        %v1056 = vld [vmem:[#allocation8 + $0x2c0] sm:$0xff]
        %v1057 = vld [vmem:[#allocation8 + $0x2c8] sm:$0xff]
        %v1058 = vld [vmem:[#allocation8 + $0x2d0] sm:$0xff]
        %v1059 = vld [vmem:[#allocation8 + $0x2d8] sm:$0xff]
        %v1060 = vld [vmem:[#allocation8 + $0x2e0] sm:$0xff]
        %v1061 = vld [vmem:[#allocation8 + $0x2e8] sm:$0xff]
        %v1062 = vld [vmem:[#allocation8 + $0x2f0] sm:$0xff]
        %v1063 = vld [vmem:[#allocation8 + $0x2f8] sm:$0xff]
        %v1064 = vld [vmem:[#allocation8 + $0x300] sm:$0xff]
        %v1065 = vld [vmem:[#allocation8 + $0x308] sm:$0xff]
        %v1066 = vld [vmem:[#allocation8 + $0x310] sm:$0xff]
        %v1067 = vld [vmem:[#allocation8 + $0x318] sm:$0xff]
        %v1068 = vld [vmem:[#allocation8 + $0x320] sm:$0xff]
        %v1069 = vld [vmem:[#allocation8 + $0x328] sm:$0xff]
        %v1070 = vld [vmem:[#allocation8 + $0x330] sm:$0xff]
        %v1071 = vld [vmem:[#allocation8 + $0x338] sm:$0xff]
        %v1072 = vld [vmem:[#allocation8 + $0x340] sm:$0xff]
        %v1073 = vld [vmem:[#allocation8 + $0x348] sm:$0xff]
        %v1074 = vld [vmem:[#allocation8 + $0x350] sm:$0xff]
        %v1075 = vld [vmem:[#allocation8 + $0x358] sm:$0xff]
        %v1076 = vld [vmem:[#allocation8 + $0x360] sm:$0xff]
        %v1077 = vld [vmem:[#allocation8 + $0x368] sm:$0xff]
        %v1078 = vld [vmem:[#allocation8 + $0x370] sm:$0xff]
        %v1079 = vld [vmem:[#allocation8 + $0x378] sm:$0xff]
        %v1080 = vld [vmem:[#allocation8 + $0x380] sm:$0xff]
        %v1081 = vld [vmem:[#allocation8 + $0x388] sm:$0xff]
        %v1082 = vld [vmem:[#allocation8 + $0x390] sm:$0xff]
        %v1083 = vld [vmem:[#allocation8 + $0x398] sm:$0xff]
        %v1084 = vld [vmem:[#allocation8 + $0x3a0] sm:$0xff]
        %v1085 = vld [vmem:[#allocation8 + $0x3a8] sm:$0xff]
        %v1086 = vld [vmem:[#allocation8 + $0x3b0] sm:$0xff]
        %v1087 = vld [vmem:[#allocation8 + $0x3b8] sm:$0xff]
        %v1088 = vld [vmem:[#allocation8 + $0x3c0] sm:$0xff]
        %v1089 = vld [vmem:[#allocation8 + $0x3c8] sm:$0xff]
        %v1090 = vld [vmem:[#allocation8 + $0x3d0] sm:$0xff]
        %v1091 = vld [vmem:[#allocation8 + $0x3d8] sm:$0xff]
        %v1092 = vld [vmem:[#allocation8 + $0x3e0] sm:$0xff]
        %v1093 = vld [vmem:[#allocation8 + $0x3e8] sm:$0xff]
        %v1094 = vld [vmem:[#allocation8 + $0x3f0] sm:$0xff]
        %v1095 = vld [vmem:[#allocation8 + $0x3f8] sm:$0xff]
        %v1096 = vld [vmem:[#allocation10] sm:$0xf]
        %v1098 = vperm.slane %v1096, 0
        %v1099 = vperm.slane %v1096, 1
        %v1100 = vperm.slane %v1096, 2
        %v1101 = vperm.slane %v1096, 3
        %v1234 = vunpack.c.l.b16 %v968
        %v1235 = vunpack.c.h.b16 %v968
        %v1236 = vunpack.c.l.b16 %v969
        %v1237 = vunpack.c.h.b16 %v969
        %v1238 = vunpack.c.l.b16 %v970
        %v1239 = vunpack.c.h.b16 %v970
        %v1240 = vunpack.c.l.b16 %v971
        %v1241 = vunpack.c.h.b16 %v971
        %v1242 = vunpack.c.l.b16 %v972
        %v1243 = vunpack.c.h.b16 %v972
        %v1244 = vunpack.c.l.b16 %v973
        %v1245 = vunpack.c.h.b16 %v973
        %v1246 = vunpack.c.l.b16 %v974
        %v1247 = vunpack.c.h.b16 %v974
        %v1248 = vunpack.c.l.b16 %v975
        %v1249 = vunpack.c.h.b16 %v975
        %v1250 = vunpack.c.l.b16 %v976
        %v1251 = vunpack.c.h.b16 %v976
        %v1252 = vunpack.c.l.b16 %v977
        %v1253 = vunpack.c.h.b16 %v977
        %v1254 = vunpack.c.l.b16 %v978
        %v1255 = vunpack.c.h.b16 %v978
        %v1256 = vunpack.c.l.b16 %v979
        %v1257 = vunpack.c.h.b16 %v979
        %v1258 = vunpack.c.l.b16 %v980
        %v1259 = vunpack.c.h.b16 %v980
        %v1260 = vunpack.c.l.b16 %v981
        %v1261 = vunpack.c.h.b16 %v981
        %v1262 = vunpack.c.l.b16 %v982
        %v1263 = vunpack.c.h.b16 %v982
        %v1264 = vunpack.c.l.b16 %v983
        %v1265 = vunpack.c.h.b16 %v983
        %v1266 = vunpack.c.l.b16 %v984
        %v1267 = vunpack.c.h.b16 %v984
        %v1268 = vunpack.c.l.b16 %v985
        %v1269 = vunpack.c.h.b16 %v985
        %v1270 = vunpack.c.l.b16 %v986
        %v1271 = vunpack.c.h.b16 %v986
        %v1272 = vunpack.c.l.b16 %v987
        %v1273 = vunpack.c.h.b16 %v987
        %v1274 = vunpack.c.l.b16 %v988
        %v1275 = vunpack.c.h.b16 %v988
        %v1276 = vunpack.c.l.b16 %v989
        %v1277 = vunpack.c.h.b16 %v989
        %v1278 = vunpack.c.l.b16 %v990
        %v1279 = vunpack.c.h.b16 %v990
        %v1280 = vunpack.c.l.b16 %v991
        %v1281 = vunpack.c.h.b16 %v991
        %v1282 = vunpack.c.l.b16 %v992
        %v1283 = vunpack.c.h.b16 %v992
        %v1284 = vunpack.c.l.b16 %v993
        %v1285 = vunpack.c.h.b16 %v993
        %v1286 = vunpack.c.l.b16 %v994
        %v1287 = vunpack.c.h.b16 %v994
        %v1288 = vunpack.c.l.b16 %v995
        %v1289 = vunpack.c.h.b16 %v995
        %v1290 = vunpack.c.l.b16 %v996
        %v1291 = vunpack.c.h.b16 %v996
        %v1292 = vunpack.c.l.b16 %v997
        %v1293 = vunpack.c.h.b16 %v997
        %v1294 = vunpack.c.l.b16 %v998
        %v1295 = vunpack.c.h.b16 %v998
        %v1296 = vunpack.c.l.b16 %v999
        %v1297 = vunpack.c.h.b16 %v999
        %v1298 = vunpack.c.l.b16 %v1000
        %v1299 = vunpack.c.h.b16 %v1000
        %v1300 = vunpack.c.l.b16 %v1001
        %v1301 = vunpack.c.h.b16 %v1001
        %v1302 = vunpack.c.l.b16 %v1002
        %v1303 = vunpack.c.h.b16 %v1002
        %v1304 = vunpack.c.l.b16 %v1003
        %v1305 = vunpack.c.h.b16 %v1003
        %v1306 = vunpack.c.l.b16 %v1004
        %v1307 = vunpack.c.h.b16 %v1004
        %v1308 = vunpack.c.l.b16 %v1005
        %v1309 = vunpack.c.h.b16 %v1005
        %v1310 = vunpack.c.l.b16 %v1006
        %v1311 = vunpack.c.h.b16 %v1006
        %v1312 = vunpack.c.l.b16 %v1007
        %v1313 = vunpack.c.h.b16 %v1007
        %v1314 = vunpack.c.l.b16 %v1008
        %v1315 = vunpack.c.h.b16 %v1008
        %v1316 = vunpack.c.l.b16 %v1009
        %v1317 = vunpack.c.h.b16 %v1009
        %v1318 = vunpack.c.l.b16 %v1010
        %v1319 = vunpack.c.h.b16 %v1010
        %v1320 = vunpack.c.l.b16 %v1011
        %v1321 = vunpack.c.h.b16 %v1011
        %v1322 = vunpack.c.l.b16 %v1012
        %v1323 = vunpack.c.h.b16 %v1012
        %v1324 = vunpack.c.l.b16 %v1013
        %v1325 = vunpack.c.h.b16 %v1013
        %v1326 = vunpack.c.l.b16 %v1014
        %v1327 = vunpack.c.h.b16 %v1014
        %v1328 = vunpack.c.l.b16 %v1015
        %v1329 = vunpack.c.h.b16 %v1015
        %v1330 = vunpack.c.l.b16 %v1016
        %v1331 = vunpack.c.h.b16 %v1016
        %v1332 = vunpack.c.l.b16 %v1017
        %v1333 = vunpack.c.h.b16 %v1017
        %v1334 = vunpack.c.l.b16 %v1018
        %v1335 = vunpack.c.h.b16 %v1018
        %v1336 = vunpack.c.l.b16 %v1019
        %v1337 = vunpack.c.h.b16 %v1019
        %v1338 = vunpack.c.l.b16 %v1020
        %v1339 = vunpack.c.h.b16 %v1020
        %v1340 = vunpack.c.l.b16 %v1021
        %v1341 = vunpack.c.h.b16 %v1021
        %v1342 = vunpack.c.l.b16 %v1022
        %v1343 = vunpack.c.h.b16 %v1022
        %v1344 = vunpack.c.l.b16 %v1023
        %v1345 = vunpack.c.h.b16 %v1023
        %v1346 = vunpack.c.l.b16 %v1024
        %v1347 = vunpack.c.h.b16 %v1024
        %v1348 = vunpack.c.l.b16 %v1025
        %v1349 = vunpack.c.h.b16 %v1025
        %v1350 = vunpack.c.l.b16 %v1026
        %v1351 = vunpack.c.h.b16 %v1026
        %v1352 = vunpack.c.l.b16 %v1027
        %v1353 = vunpack.c.h.b16 %v1027
        %v1354 = vunpack.c.l.b16 %v1028
        %v1355 = vunpack.c.h.b16 %v1028
        %v1356 = vunpack.c.l.b16 %v1029
        %v1357 = vunpack.c.h.b16 %v1029
        %v1358 = vunpack.c.l.b16 %v1030
        %v1359 = vunpack.c.h.b16 %v1030
        %v1360 = vunpack.c.l.b16 %v1031
        %v1361 = vunpack.c.h.b16 %v1031
        %v1362 = vunpack.c.l.b16 %v1032
        %v1363 = vunpack.c.h.b16 %v1032
        %v1364 = vunpack.c.l.b16 %v1033
        %v1365 = vunpack.c.h.b16 %v1033
        %v1366 = vunpack.c.l.b16 %v1034
        %v1367 = vunpack.c.h.b16 %v1034
        %v1368 = vunpack.c.l.b16 %v1035
        %v1369 = vunpack.c.h.b16 %v1035
        %v1370 = vunpack.c.l.b16 %v1036
        %v1371 = vunpack.c.h.b16 %v1036
        %v1372 = vunpack.c.l.b16 %v1037
        %v1373 = vunpack.c.h.b16 %v1037
        %v1374 = vunpack.c.l.b16 %v1038
        %v1375 = vunpack.c.h.b16 %v1038
        %v1376 = vunpack.c.l.b16 %v1039
        %v1377 = vunpack.c.h.b16 %v1039
        %v1378 = vunpack.c.l.b16 %v1040
        %v1379 = vunpack.c.h.b16 %v1040
        %v1380 = vunpack.c.l.b16 %v1041
        %v1381 = vunpack.c.h.b16 %v1041
        %v1382 = vunpack.c.l.b16 %v1042
        %v1383 = vunpack.c.h.b16 %v1042
        %v1384 = vunpack.c.l.b16 %v1043
        %v1385 = vunpack.c.h.b16 %v1043
        %v1386 = vunpack.c.l.b16 %v1044
        %v1387 = vunpack.c.h.b16 %v1044
        %v1388 = vunpack.c.l.b16 %v1045
        %v1389 = vunpack.c.h.b16 %v1045
        %v1390 = vunpack.c.l.b16 %v1046
        %v1391 = vunpack.c.h.b16 %v1046
        %v1392 = vunpack.c.l.b16 %v1047
        %v1393 = vunpack.c.h.b16 %v1047
        %v1394 = vunpack.c.l.b16 %v1048
        %v1395 = vunpack.c.h.b16 %v1048
        %v1396 = vunpack.c.l.b16 %v1049
        %v1397 = vunpack.c.h.b16 %v1049
        %v1398 = vunpack.c.l.b16 %v1050
        %v1399 = vunpack.c.h.b16 %v1050
        %v1400 = vunpack.c.l.b16 %v1051
        %v1401 = vunpack.c.h.b16 %v1051
        %v1402 = vunpack.c.l.b16 %v1052
        %v1403 = vunpack.c.h.b16 %v1052
        %v1404 = vunpack.c.l.b16 %v1053
        %v1405 = vunpack.c.h.b16 %v1053
        %v1406 = vunpack.c.l.b16 %v1054
        %v1407 = vunpack.c.h.b16 %v1054
        %v1408 = vunpack.c.l.b16 %v1055
        %v1409 = vunpack.c.h.b16 %v1055
        %v1410 = vunpack.c.l.b16 %v1056
        %v1411 = vunpack.c.h.b16 %v1056
        %v1412 = vunpack.c.l.b16 %v1057
        %v1413 = vunpack.c.h.b16 %v1057
        %v1414 = vunpack.c.l.b16 %v1058
        %v1415 = vunpack.c.h.b16 %v1058
        %v1416 = vunpack.c.l.b16 %v1059
        %v1417 = vunpack.c.h.b16 %v1059
        %v1418 = vunpack.c.l.b16 %v1060
        %v1419 = vunpack.c.h.b16 %v1060
        %v1420 = vunpack.c.l.b16 %v1061
        %v1421 = vunpack.c.h.b16 %v1061
        %v1422 = vunpack.c.l.b16 %v1062
        %v1423 = vunpack.c.h.b16 %v1062
        %v1424 = vunpack.c.l.b16 %v1063
        %v1425 = vunpack.c.h.b16 %v1063
        %v1426 = vunpack.c.l.b16 %v1064
        %v1427 = vunpack.c.h.b16 %v1064
        %v1428 = vunpack.c.l.b16 %v1065
        %v1429 = vunpack.c.h.b16 %v1065
        %v1430 = vunpack.c.l.b16 %v1066
        %v1431 = vunpack.c.h.b16 %v1066
        %v1432 = vunpack.c.l.b16 %v1067
        %v1433 = vunpack.c.h.b16 %v1067
        %v1434 = vunpack.c.l.b16 %v1068
        %v1435 = vunpack.c.h.b16 %v1068
        %v1436 = vunpack.c.l.b16 %v1069
        %v1437 = vunpack.c.h.b16 %v1069
        %v1438 = vunpack.c.l.b16 %v1070
        %v1439 = vunpack.c.h.b16 %v1070
        %v1440 = vunpack.c.l.b16 %v1071
        %v1441 = vunpack.c.h.b16 %v1071
        %v1442 = vunpack.c.l.b16 %v1072
        %v1443 = vunpack.c.h.b16 %v1072
        %v1444 = vunpack.c.l.b16 %v1073
        %v1445 = vunpack.c.h.b16 %v1073
        %v1446 = vunpack.c.l.b16 %v1074
        %v1447 = vunpack.c.h.b16 %v1074
        %v1448 = vunpack.c.l.b16 %v1075
        %v1449 = vunpack.c.h.b16 %v1075
        %v1450 = vunpack.c.l.b16 %v1076
        %v1451 = vunpack.c.h.b16 %v1076
        %v1452 = vunpack.c.l.b16 %v1077
        %v1453 = vunpack.c.h.b16 %v1077
        %v1454 = vunpack.c.l.b16 %v1078
        %v1455 = vunpack.c.h.b16 %v1078
        %v1456 = vunpack.c.l.b16 %v1079
        %v1457 = vunpack.c.h.b16 %v1079
        %v1458 = vunpack.c.l.b16 %v1080
        %v1459 = vunpack.c.h.b16 %v1080
        %v1460 = vunpack.c.l.b16 %v1081
        %v1461 = vunpack.c.h.b16 %v1081
        %v1462 = vunpack.c.l.b16 %v1082
        %v1463 = vunpack.c.h.b16 %v1082
        %v1464 = vunpack.c.l.b16 %v1083
        %v1465 = vunpack.c.h.b16 %v1083
        %v1466 = vunpack.c.l.b16 %v1084
        %v1467 = vunpack.c.h.b16 %v1084
        %v1468 = vunpack.c.l.b16 %v1085
        %v1469 = vunpack.c.h.b16 %v1085
        %v1470 = vunpack.c.l.b16 %v1086
        %v1471 = vunpack.c.h.b16 %v1086
        %v1472 = vunpack.c.l.b16 %v1087
        %v1473 = vunpack.c.h.b16 %v1087
        %v1474 = vunpack.c.l.b16 %v1088
        %v1475 = vunpack.c.h.b16 %v1088
        %v1476 = vunpack.c.l.b16 %v1089
        %v1477 = vunpack.c.h.b16 %v1089
        %v1478 = vunpack.c.l.b16 %v1090
        %v1479 = vunpack.c.h.b16 %v1090
        %v1480 = vunpack.c.l.b16 %v1091
        %v1481 = vunpack.c.h.b16 %v1091
        %v1482 = vunpack.c.l.b16 %v1092
        %v1483 = vunpack.c.h.b16 %v1092
        %v1484 = vunpack.c.l.b16 %v1093
        %v1485 = vunpack.c.h.b16 %v1093
        %v1486 = vunpack.c.l.b16 %v1094
        %v1487 = vunpack.c.h.b16 %v1094
        %v1488 = vunpack.c.l.b16 %v1095
        %v1489 = vunpack.c.h.b16 %v1095
        %v1490 = vpack.c.b16 %v1238, %v1234
        %v1491 = vpack.c.b16 %v1239, %v1235
        %v1492 = vpack.c.b16 %v1240, %v1236
        %v1493 = vpack.c.b16 %v1241, %v1237
        %v1494 = vpack.c.b16 %v1246, %v1242
        %v1495 = vpack.c.b16 %v1247, %v1243
        %v1496 = vpack.c.b16 %v1248, %v1244
        %v1497 = vpack.c.b16 %v1249, %v1245
        %v1498 = vpack.c.b16 %v1254, %v1250
        %v1499 = vpack.c.b16 %v1255, %v1251
        %v1500 = vpack.c.b16 %v1256, %v1252
        %v1501 = vpack.c.b16 %v1257, %v1253
        %v1502 = vpack.c.b16 %v1262, %v1258
        %v1503 = vpack.c.b16 %v1263, %v1259
        %v1504 = vpack.c.b16 %v1264, %v1260
        %v1505 = vpack.c.b16 %v1265, %v1261
        %v1506 = vpack.c.b16 %v1270, %v1266
        %v1507 = vpack.c.b16 %v1271, %v1267
        %v1508 = vpack.c.b16 %v1272, %v1268
        %v1509 = vpack.c.b16 %v1273, %v1269
        %v1510 = vpack.c.b16 %v1278, %v1274
        %v1511 = vpack.c.b16 %v1279, %v1275
        %v1512 = vpack.c.b16 %v1280, %v1276
        %v1513 = vpack.c.b16 %v1281, %v1277
        %v1514 = vpack.c.b16 %v1286, %v1282
        %v1515 = vpack.c.b16 %v1287, %v1283
        %v1516 = vpack.c.b16 %v1288, %v1284
        %v1517 = vpack.c.b16 %v1289, %v1285
        %v1518 = vpack.c.b16 %v1294, %v1290
        %v1519 = vpack.c.b16 %v1295, %v1291
        %v1520 = vpack.c.b16 %v1296, %v1292
        %v1521 = vpack.c.b16 %v1297, %v1293
        %v1522 = vpack.c.b16 %v1302, %v1298
        %v1523 = vpack.c.b16 %v1303, %v1299
        %v1524 = vpack.c.b16 %v1304, %v1300
        %v1525 = vpack.c.b16 %v1305, %v1301
        %v1526 = vpack.c.b16 %v1310, %v1306
        %v1527 = vpack.c.b16 %v1311, %v1307
        %v1528 = vpack.c.b16 %v1312, %v1308
        %v1529 = vpack.c.b16 %v1313, %v1309
        %v1530 = vpack.c.b16 %v1318, %v1314
        %v1531 = vpack.c.b16 %v1319, %v1315
        %v1532 = vpack.c.b16 %v1320, %v1316
        %v1533 = vpack.c.b16 %v1321, %v1317
        %v1534 = vpack.c.b16 %v1326, %v1322
        %v1535 = vpack.c.b16 %v1327, %v1323
        %v1536 = vpack.c.b16 %v1328, %v1324
        %v1537 = vpack.c.b16 %v1329, %v1325
        %v1538 = vpack.c.b16 %v1334, %v1330
        %v1539 = vpack.c.b16 %v1335, %v1331
        %v1540 = vpack.c.b16 %v1336, %v1332
        %v1541 = vpack.c.b16 %v1337, %v1333
        %v1542 = vpack.c.b16 %v1342, %v1338
        %v1543 = vpack.c.b16 %v1343, %v1339
        %v1544 = vpack.c.b16 %v1344, %v1340
        %v1545 = vpack.c.b16 %v1345, %v1341
        %v1546 = vpack.c.b16 %v1350, %v1346
        %v1547 = vpack.c.b16 %v1351, %v1347
        %v1548 = vpack.c.b16 %v1352, %v1348
        %v1549 = vpack.c.b16 %v1353, %v1349
        %v1550 = vpack.c.b16 %v1358, %v1354
        %v1551 = vpack.c.b16 %v1359, %v1355
        %v1552 = vpack.c.b16 %v1360, %v1356
        %v1553 = vpack.c.b16 %v1361, %v1357
        %v1554 = vpack.c.b16 %v1366, %v1362
        %v1555 = vpack.c.b16 %v1367, %v1363
        %v1556 = vpack.c.b16 %v1368, %v1364
        %v1557 = vpack.c.b16 %v1369, %v1365
        %v1558 = vpack.c.b16 %v1374, %v1370
        %v1559 = vpack.c.b16 %v1375, %v1371
        %v1560 = vpack.c.b16 %v1376, %v1372
        %v1561 = vpack.c.b16 %v1377, %v1373
        %v1562 = vpack.c.b16 %v1382, %v1378
        %v1563 = vpack.c.b16 %v1383, %v1379
        %v1564 = vpack.c.b16 %v1384, %v1380
        %v1565 = vpack.c.b16 %v1385, %v1381
        %v1566 = vpack.c.b16 %v1390, %v1386
        %v1567 = vpack.c.b16 %v1391, %v1387
        %v1568 = vpack.c.b16 %v1392, %v1388
        %v1569 = vpack.c.b16 %v1393, %v1389
        %v1570 = vpack.c.b16 %v1398, %v1394
        %v1571 = vpack.c.b16 %v1399, %v1395
        %v1572 = vpack.c.b16 %v1400, %v1396
        %v1573 = vpack.c.b16 %v1401, %v1397
        %v1574 = vpack.c.b16 %v1406, %v1402
        %v1575 = vpack.c.b16 %v1407, %v1403
        %v1576 = vpack.c.b16 %v1408, %v1404
        %v1577 = vpack.c.b16 %v1409, %v1405
        %v1578 = vpack.c.b16 %v1414, %v1410
        %v1579 = vpack.c.b16 %v1415, %v1411
        %v1580 = vpack.c.b16 %v1416, %v1412
        %v1581 = vpack.c.b16 %v1417, %v1413
        %v1582 = vpack.c.b16 %v1422, %v1418
        %v1583 = vpack.c.b16 %v1423, %v1419
        %v1584 = vpack.c.b16 %v1424, %v1420
        %v1585 = vpack.c.b16 %v1425, %v1421
        %v1586 = vpack.c.b16 %v1430, %v1426
        %v1587 = vpack.c.b16 %v1431, %v1427
        %v1588 = vpack.c.b16 %v1432, %v1428
        %v1589 = vpack.c.b16 %v1433, %v1429
        %v1590 = vpack.c.b16 %v1438, %v1434
        %v1591 = vpack.c.b16 %v1439, %v1435
        %v1592 = vpack.c.b16 %v1440, %v1436
        %v1593 = vpack.c.b16 %v1441, %v1437
        %v1594 = vpack.c.b16 %v1446, %v1442
        %v1595 = vpack.c.b16 %v1447, %v1443
        %v1596 = vpack.c.b16 %v1448, %v1444
        %v1597 = vpack.c.b16 %v1449, %v1445
        %v1598 = vpack.c.b16 %v1454, %v1450
        %v1599 = vpack.c.b16 %v1455, %v1451
        %v1600 = vpack.c.b16 %v1456, %v1452
        %v1601 = vpack.c.b16 %v1457, %v1453
        %v1602 = vpack.c.b16 %v1462, %v1458
        %v1603 = vpack.c.b16 %v1463, %v1459
        %v1604 = vpack.c.b16 %v1464, %v1460
        %v1605 = vpack.c.b16 %v1465, %v1461
        %v1606 = vpack.c.b16 %v1470, %v1466
        %v1607 = vpack.c.b16 %v1471, %v1467
        %v1608 = vpack.c.b16 %v1472, %v1468
        %v1609 = vpack.c.b16 %v1473, %v1469
        %v1610 = vpack.c.b16 %v1478, %v1474
        %v1611 = vpack.c.b16 %v1479, %v1475
        %v1612 = vpack.c.b16 %v1480, %v1476
        %v1613 = vpack.c.b16 %v1481, %v1477
        %v1614 = vpack.c.b16 %v1486, %v1482
        %v1615 = vpack.c.b16 %v1487, %v1483
        %v1616 = vpack.c.b16 %v1488, %v1484
        %v1617 = vpack.c.b16 %v1489, %v1485
        %1746 = vmatpush.bf16.msra.mxu0 %v1518
        %1747 = vmatpush.bf16.msra.mxu0 %v1514
        %1748 = vmatpush.bf16.msra.mxu0 %v1510
        %1749 = vmatpush.bf16.msra.mxu0 %v1506
        %1750 = vmatpush.bf16.msra.mxu0 %v1502
        %1751 = vmatpush.bf16.msra.mxu0 %v1498
        %1752 = vmatpush.bf16.msra.mxu0 %v1494
        %1753 = vmatpush.bf16.msra.mxu0 %v1490
        %1754 = vmatmul.bf16.gmra.mxu0 %v936
        %v1755 = vpop.f32.mrf.mxu0
        %v1756 = vadd.f32 %v1098, %v1755
        %v1757 = vpop.f32.mrf.mxu0
        %v1758 = vadd.f32 %v1098, %v1757
        %1759 = vmatmul.bf16.gmra.mxu0 %v940
        %v1760 = vpop.f32.mrf.mxu0
        %v1761 = vadd.f32 %v1098, %v1760
        %v1762 = vpop.f32.mrf.mxu0
        %v1763 = vadd.f32 %v1098, %v1762
        %1764 = vmatmul.bf16.gmra.mxu0 %v944
        %v1765 = vpop.f32.mrf.mxu0
        %v1766 = vadd.f32 %v1098, %v1765
        %v1767 = vpop.f32.mrf.mxu0
        %v1768 = vadd.f32 %v1098, %v1767
        %1769 = vmatmul.bf16.gmra.mxu0 %v948
        %v1770 = vpop.f32.mrf.mxu0
        %v1771 = vadd.f32 %v1098, %v1770
        %v1772 = vpop.f32.mrf.mxu0
        %v1773 = vadd.f32 %v1098, %v1772
        %1774 = vmatmul.bf16.gmra.mxu0 %v952
        %v1775 = vpop.f32.mrf.mxu0
        %v1776 = vadd.f32 %v1098, %v1775
        %v1777 = vpop.f32.mrf.mxu0
        %v1778 = vadd.f32 %v1098, %v1777
        %1779 = vmatmul.bf16.gmra.mxu0 %v956
        %v1780 = vpop.f32.mrf.mxu0
        %v1781 = vadd.f32 %v1098, %v1780
        %v1782 = vpop.f32.mrf.mxu0
        %v1783 = vadd.f32 %v1098, %v1782
        %1784 = vmatmul.bf16.gmra.mxu0 %v960
        %v1785 = vpop.f32.mrf.mxu0
        %v1786 = vadd.f32 %v1098, %v1785
        %v1787 = vpop.f32.mrf.mxu0
        %v1788 = vadd.f32 %v1098, %v1787
        %1789 = vmatmul.bf16.gmra.mxu0 %v964
        %v1790 = vpop.f32.mrf.mxu0
        %v1791 = vadd.f32 %v1098, %v1790
        %v1792 = vpop.f32.mrf.mxu0
        %v1793 = vadd.f32 %v1098, %v1792
        %1794 = vdwg.mxu0
        %1795 = vmatpush.bf16.msra.mxu0 %v1550
        %1796 = vmatpush.bf16.msra.mxu0 %v1546
        %1797 = vmatpush.bf16.msra.mxu0 %v1542
        %1798 = vmatpush.bf16.msra.mxu0 %v1538
        %1799 = vmatpush.bf16.msra.mxu0 %v1534
        %1800 = vmatpush.bf16.msra.mxu0 %v1530
        %1801 = vmatpush.bf16.msra.mxu0 %v1526
        %1802 = vmatpush.bf16.msra.mxu0 %v1522
        %1803 = vmatmul.bf16.gmra.mxu0 %v937
        %v1804 = vpop.f32.mrf.mxu0
        %v1805 = vadd.f32 %v1756, %v1804
        %v1806 = vpop.f32.mrf.mxu0
        %v1807 = vadd.f32 %v1758, %v1806
        %1808 = vmatmul.bf16.gmra.mxu0 %v941
        %v1809 = vpop.f32.mrf.mxu0
        %v1810 = vadd.f32 %v1761, %v1809
        %v1811 = vpop.f32.mrf.mxu0
        %v1812 = vadd.f32 %v1763, %v1811
        %1813 = vmatmul.bf16.gmra.mxu0 %v945
        %v1814 = vpop.f32.mrf.mxu0
        %v1815 = vadd.f32 %v1766, %v1814
        %v1816 = vpop.f32.mrf.mxu0
        %v1817 = vadd.f32 %v1768, %v1816
        %1818 = vmatmul.bf16.gmra.mxu0 %v949
        %v1819 = vpop.f32.mrf.mxu0
        %v1820 = vadd.f32 %v1771, %v1819
        %v1821 = vpop.f32.mrf.mxu0
        %v1822 = vadd.f32 %v1773, %v1821
        %1823 = vmatmul.bf16.gmra.mxu0 %v953
        %v1824 = vpop.f32.mrf.mxu0
        %v1825 = vadd.f32 %v1776, %v1824
        %v1826 = vpop.f32.mrf.mxu0
        %v1827 = vadd.f32 %v1778, %v1826
        %1828 = vmatmul.bf16.gmra.mxu0 %v957
        %v1829 = vpop.f32.mrf.mxu0
        %v1830 = vadd.f32 %v1781, %v1829
        %v1831 = vpop.f32.mrf.mxu0
        %v1832 = vadd.f32 %v1783, %v1831
        %1833 = vmatmul.bf16.gmra.mxu0 %v961
        %v1834 = vpop.f32.mrf.mxu0
        %v1835 = vadd.f32 %v1786, %v1834
        %v1836 = vpop.f32.mrf.mxu0
        %v1837 = vadd.f32 %v1788, %v1836
        %1838 = vmatmul.bf16.gmra.mxu0 %v965
        %v1839 = vpop.f32.mrf.mxu0
        %v1840 = vadd.f32 %v1791, %v1839
        %v1841 = vpop.f32.mrf.mxu0
        %v1842 = vadd.f32 %v1793, %v1841
        %1843 = vdwg.mxu0
        %1844 = vmatpush.bf16.msra.mxu0 %v1582
        %1845 = vmatpush.bf16.msra.mxu0 %v1578
        %1846 = vmatpush.bf16.msra.mxu0 %v1574
        %1847 = vmatpush.bf16.msra.mxu0 %v1570
        %1848 = vmatpush.bf16.msra.mxu0 %v1566
        %1849 = vmatpush.bf16.msra.mxu0 %v1562
        %1850 = vmatpush.bf16.msra.mxu0 %v1558
        %1851 = vmatpush.bf16.msra.mxu0 %v1554
        %1852 = vmatmul.bf16.gmra.mxu0 %v938
        %v1853 = vpop.f32.mrf.mxu0
        %v1854 = vadd.f32 %v1805, %v1853
        %v1855 = vpop.f32.mrf.mxu0
        %v1856 = vadd.f32 %v1807, %v1855
        %1857 = vmatmul.bf16.gmra.mxu0 %v942
        %v1858 = vpop.f32.mrf.mxu0
        %v1859 = vadd.f32 %v1810, %v1858
        %v1860 = vpop.f32.mrf.mxu0
        %v1861 = vadd.f32 %v1812, %v1860
        %1862 = vmatmul.bf16.gmra.mxu0 %v946
        %v1863 = vpop.f32.mrf.mxu0
        %v1864 = vadd.f32 %v1815, %v1863
        %v1865 = vpop.f32.mrf.mxu0
        %v1866 = vadd.f32 %v1817, %v1865
        %1867 = vmatmul.bf16.gmra.mxu0 %v950
        %v1868 = vpop.f32.mrf.mxu0
        %v1869 = vadd.f32 %v1820, %v1868
        %v1870 = vpop.f32.mrf.mxu0
        %v1871 = vadd.f32 %v1822, %v1870
        %1872 = vmatmul.bf16.gmra.mxu0 %v954
        %v1873 = vpop.f32.mrf.mxu0
        %v1874 = vadd.f32 %v1825, %v1873
        %v1875 = vpop.f32.mrf.mxu0
        %v1876 = vadd.f32 %v1827, %v1875
        %1877 = vmatmul.bf16.gmra.mxu0 %v958
        %v1878 = vpop.f32.mrf.mxu0
        %v1879 = vadd.f32 %v1830, %v1878
        %v1880 = vpop.f32.mrf.mxu0
        %v1881 = vadd.f32 %v1832, %v1880
        %1882 = vmatmul.bf16.gmra.mxu0 %v962
        %v1883 = vpop.f32.mrf.mxu0
        %v1884 = vadd.f32 %v1835, %v1883
        %v1885 = vpop.f32.mrf.mxu0
        %v1886 = vadd.f32 %v1837, %v1885
        %1887 = vmatmul.bf16.gmra.mxu0 %v966
        %v1888 = vpop.f32.mrf.mxu0
        %v1889 = vadd.f32 %v1840, %v1888
        %v1890 = vpop.f32.mrf.mxu0
        %v1891 = vadd.f32 %v1842, %v1890
        %1892 = vdwg.mxu0
        %1893 = vmatpush.bf16.msra.mxu0 %v1614
        %1894 = vmatpush.bf16.msra.mxu0 %v1610
        %1895 = vmatpush.bf16.msra.mxu0 %v1606
        %1896 = vmatpush.bf16.msra.mxu0 %v1602
        %1897 = vmatpush.bf16.msra.mxu0 %v1598
        %1898 = vmatpush.bf16.msra.mxu0 %v1594
        %1899 = vmatpush.bf16.msra.mxu0 %v1590
        %1900 = vmatpush.bf16.msra.mxu0 %v1586
        %1901 = vmatmul.bf16.gmra.mxu0 %v939
        %v1902 = vpop.f32.mrf.mxu0
        %v1903 = vadd.f32 %v1854, %v1902
        %v1904 = vpop.f32.mrf.mxu0
        %v1905 = vadd.f32 %v1856, %v1904
        %1906 = vmatmul.bf16.gmra.mxu0 %v943
        %v1907 = vpop.f32.mrf.mxu0
        %v1908 = vadd.f32 %v1859, %v1907
        %v1909 = vpop.f32.mrf.mxu0
        %v1910 = vadd.f32 %v1861, %v1909
        %1911 = vmatmul.bf16.gmra.mxu0 %v947
        %v1912 = vpop.f32.mrf.mxu0
        %v1913 = vadd.f32 %v1864, %v1912
        %v1914 = vpop.f32.mrf.mxu0
        %v1915 = vadd.f32 %v1866, %v1914
        %1916 = vmatmul.bf16.gmra.mxu0 %v951
        %v1917 = vpop.f32.mrf.mxu0
        %v1918 = vadd.f32 %v1869, %v1917
        %v1919 = vpop.f32.mrf.mxu0
        %v1920 = vadd.f32 %v1871, %v1919
        %1921 = vmatmul.bf16.gmra.mxu0 %v955
        %v1922 = vpop.f32.mrf.mxu0
        %v1923 = vadd.f32 %v1874, %v1922
        %v1924 = vpop.f32.mrf.mxu0
        %v1925 = vadd.f32 %v1876, %v1924
        %1926 = vmatmul.bf16.gmra.mxu0 %v959
        %v1927 = vpop.f32.mrf.mxu0
        %v1928 = vadd.f32 %v1879, %v1927
        %v1929 = vpop.f32.mrf.mxu0
        %v1930 = vadd.f32 %v1881, %v1929
        %1931 = vmatmul.bf16.gmra.mxu0 %v963
        %v1932 = vpop.f32.mrf.mxu0
        %v1933 = vadd.f32 %v1884, %v1932
        %v1934 = vpop.f32.mrf.mxu0
        %v1935 = vadd.f32 %v1886, %v1934
        %1936 = vmatmul.bf16.gmra.mxu0 %v967
        %v1937 = vpop.f32.mrf.mxu0
        %v1938 = vadd.f32 %v1889, %v1937
        %v1939 = vpop.f32.mrf.mxu0
        %v1940 = vadd.f32 %v1891, %v1939
        %1941 = vdwg.mxu0
        %1942 = vmatpush.bf16.msra.mxu0 %v1519
        %1943 = vmatpush.bf16.msra.mxu0 %v1515
        %1944 = vmatpush.bf16.msra.mxu0 %v1511
        %1945 = vmatpush.bf16.msra.mxu0 %v1507
        %1946 = vmatpush.bf16.msra.mxu0 %v1503
        %1947 = vmatpush.bf16.msra.mxu0 %v1499
        %1948 = vmatpush.bf16.msra.mxu0 %v1495
        %1949 = vmatpush.bf16.msra.mxu0 %v1491
        %1950 = vmatmul.bf16.gmra.mxu0 %v936
        %v1951 = vpop.f32.mrf.mxu0
        %v1952 = vadd.f32 %v1099, %v1951
        %v1953 = vpop.f32.mrf.mxu0
        %v1954 = vadd.f32 %v1099, %v1953
        %1955 = vmatmul.bf16.gmra.mxu0 %v940
        %v1956 = vpop.f32.mrf.mxu0
        %v1957 = vadd.f32 %v1099, %v1956
        %v1958 = vpop.f32.mrf.mxu0
        %v1959 = vadd.f32 %v1099, %v1958
        %1960 = vmatmul.bf16.gmra.mxu0 %v944
        %v1961 = vpop.f32.mrf.mxu0
        %v1962 = vadd.f32 %v1099, %v1961
        %v1963 = vpop.f32.mrf.mxu0
        %v1964 = vadd.f32 %v1099, %v1963
        %1965 = vmatmul.bf16.gmra.mxu0 %v948
        %v1966 = vpop.f32.mrf.mxu0
        %v1967 = vadd.f32 %v1099, %v1966
        %v1968 = vpop.f32.mrf.mxu0
        %v1969 = vadd.f32 %v1099, %v1968
        %1970 = vmatmul.bf16.gmra.mxu0 %v952
        %v1971 = vpop.f32.mrf.mxu0
        %v1972 = vadd.f32 %v1099, %v1971
        %v1973 = vpop.f32.mrf.mxu0
        %v1974 = vadd.f32 %v1099, %v1973
        %1975 = vmatmul.bf16.gmra.mxu0 %v956
        %v1976 = vpop.f32.mrf.mxu0
        %v1977 = vadd.f32 %v1099, %v1976
        %v1978 = vpop.f32.mrf.mxu0
        %v1979 = vadd.f32 %v1099, %v1978
        %1980 = vmatmul.bf16.gmra.mxu0 %v960
        %v1981 = vpop.f32.mrf.mxu0
        %v1982 = vadd.f32 %v1099, %v1981
        %v1983 = vpop.f32.mrf.mxu0
        %v1984 = vadd.f32 %v1099, %v1983
        %1985 = vmatmul.bf16.gmra.mxu0 %v964
        %v1986 = vpop.f32.mrf.mxu0
        %v1987 = vadd.f32 %v1099, %v1986
        %v1988 = vpop.f32.mrf.mxu0
        %v1989 = vadd.f32 %v1099, %v1988
        %1990 = vdwg.mxu0
        %1991 = vmatpush.bf16.msra.mxu0 %v1551
        %1992 = vmatpush.bf16.msra.mxu0 %v1547
        %1993 = vmatpush.bf16.msra.mxu0 %v1543
        %1994 = vmatpush.bf16.msra.mxu0 %v1539
        %1995 = vmatpush.bf16.msra.mxu0 %v1535
        %1996 = vmatpush.bf16.msra.mxu0 %v1531
        %1997 = vmatpush.bf16.msra.mxu0 %v1527
        %1998 = vmatpush.bf16.msra.mxu0 %v1523
        %1999 = vmatmul.bf16.gmra.mxu0 %v937
        %v2000 = vpop.f32.mrf.mxu0
        %v2001 = vadd.f32 %v1952, %v2000
        %v2002 = vpop.f32.mrf.mxu0
        %v2003 = vadd.f32 %v1954, %v2002
        %2004 = vmatmul.bf16.gmra.mxu0 %v941
        %v2005 = vpop.f32.mrf.mxu0
        %v2006 = vadd.f32 %v1957, %v2005
        %v2007 = vpop.f32.mrf.mxu0
        %v2008 = vadd.f32 %v1959, %v2007
        %2009 = vmatmul.bf16.gmra.mxu0 %v945
        %v2010 = vpop.f32.mrf.mxu0
        %v2011 = vadd.f32 %v1962, %v2010
        %v2012 = vpop.f32.mrf.mxu0
        %v2013 = vadd.f32 %v1964, %v2012
        %2014 = vmatmul.bf16.gmra.mxu0 %v949
        %v2015 = vpop.f32.mrf.mxu0
        %v2016 = vadd.f32 %v1967, %v2015
        %v2017 = vpop.f32.mrf.mxu0
        %v2018 = vadd.f32 %v1969, %v2017
        %2019 = vmatmul.bf16.gmra.mxu0 %v953
        %v2020 = vpop.f32.mrf.mxu0
        %v2021 = vadd.f32 %v1972, %v2020
        %v2022 = vpop.f32.mrf.mxu0
        %v2023 = vadd.f32 %v1974, %v2022
        %2024 = vmatmul.bf16.gmra.mxu0 %v957
        %v2025 = vpop.f32.mrf.mxu0
        %v2026 = vadd.f32 %v1977, %v2025
        %v2027 = vpop.f32.mrf.mxu0
        %v2028 = vadd.f32 %v1979, %v2027
        %2029 = vmatmul.bf16.gmra.mxu0 %v961
        %v2030 = vpop.f32.mrf.mxu0
        %v2031 = vadd.f32 %v1982, %v2030
        %v2032 = vpop.f32.mrf.mxu0
        %v2033 = vadd.f32 %v1984, %v2032
        %2034 = vmatmul.bf16.gmra.mxu0 %v965
        %v2035 = vpop.f32.mrf.mxu0
        %v2036 = vadd.f32 %v1987, %v2035
        %v2037 = vpop.f32.mrf.mxu0
        %v2038 = vadd.f32 %v1989, %v2037
        %2039 = vdwg.mxu0
        %2040 = vmatpush.bf16.msra.mxu0 %v1583
        %2041 = vmatpush.bf16.msra.mxu0 %v1579
        %2042 = vmatpush.bf16.msra.mxu0 %v1575
        %2043 = vmatpush.bf16.msra.mxu0 %v1571
        %2044 = vmatpush.bf16.msra.mxu0 %v1567
        %2045 = vmatpush.bf16.msra.mxu0 %v1563
        %2046 = vmatpush.bf16.msra.mxu0 %v1559
        %2047 = vmatpush.bf16.msra.mxu0 %v1555
        %2048 = vmatmul.bf16.gmra.mxu0 %v938
        %v2049 = vpop.f32.mrf.mxu0
        %v2050 = vadd.f32 %v2001, %v2049
        %v2051 = vpop.f32.mrf.mxu0
        %v2052 = vadd.f32 %v2003, %v2051
        %2053 = vmatmul.bf16.gmra.mxu0 %v942
        %v2054 = vpop.f32.mrf.mxu0
        %v2055 = vadd.f32 %v2006, %v2054
        %v2056 = vpop.f32.mrf.mxu0
        %v2057 = vadd.f32 %v2008, %v2056
        %2058 = vmatmul.bf16.gmra.mxu0 %v946
        %v2059 = vpop.f32.mrf.mxu0
        %v2060 = vadd.f32 %v2011, %v2059
        %v2061 = vpop.f32.mrf.mxu0
        %v2062 = vadd.f32 %v2013, %v2061
        %2063 = vmatmul.bf16.gmra.mxu0 %v950
        %v2064 = vpop.f32.mrf.mxu0
        %v2065 = vadd.f32 %v2016, %v2064
        %v2066 = vpop.f32.mrf.mxu0
        %v2067 = vadd.f32 %v2018, %v2066
        %2068 = vmatmul.bf16.gmra.mxu0 %v954
        %v2069 = vpop.f32.mrf.mxu0
        %v2070 = vadd.f32 %v2021, %v2069
        %v2071 = vpop.f32.mrf.mxu0
        %v2072 = vadd.f32 %v2023, %v2071
        %2073 = vmatmul.bf16.gmra.mxu0 %v958
        %v2074 = vpop.f32.mrf.mxu0
        %v2075 = vadd.f32 %v2026, %v2074
        %v2076 = vpop.f32.mrf.mxu0
        %v2077 = vadd.f32 %v2028, %v2076
        %2078 = vmatmul.bf16.gmra.mxu0 %v962
        %v2079 = vpop.f32.mrf.mxu0
        %v2080 = vadd.f32 %v2031, %v2079
        %v2081 = vpop.f32.mrf.mxu0
        %v2082 = vadd.f32 %v2033, %v2081
        %2083 = vmatmul.bf16.gmra.mxu0 %v966
        %v2084 = vpop.f32.mrf.mxu0
        %v2085 = vadd.f32 %v2036, %v2084
        %v2086 = vpop.f32.mrf.mxu0
        %v2087 = vadd.f32 %v2038, %v2086
        %2088 = vdwg.mxu0
        %2089 = vmatpush.bf16.msra.mxu0 %v1615
        %2090 = vmatpush.bf16.msra.mxu0 %v1611
        %2091 = vmatpush.bf16.msra.mxu0 %v1607
        %2092 = vmatpush.bf16.msra.mxu0 %v1603
        %2093 = vmatpush.bf16.msra.mxu0 %v1599
        %2094 = vmatpush.bf16.msra.mxu0 %v1595
        %2095 = vmatpush.bf16.msra.mxu0 %v1591
        %2096 = vmatpush.bf16.msra.mxu0 %v1587
        %2097 = vmatmul.bf16.gmra.mxu0 %v939
        %v2098 = vpop.f32.mrf.mxu0
        %v2099 = vadd.f32 %v2050, %v2098
        %v2100 = vpop.f32.mrf.mxu0
        %v2101 = vadd.f32 %v2052, %v2100
        %2102 = vmatmul.bf16.gmra.mxu0 %v943
        %v2103 = vpop.f32.mrf.mxu0
        %v2104 = vadd.f32 %v2055, %v2103
        %v2105 = vpop.f32.mrf.mxu0
        %v2106 = vadd.f32 %v2057, %v2105
        %2107 = vmatmul.bf16.gmra.mxu0 %v947
        %v2108 = vpop.f32.mrf.mxu0
        %v2109 = vadd.f32 %v2060, %v2108
        %v2110 = vpop.f32.mrf.mxu0
        %v2111 = vadd.f32 %v2062, %v2110
        %2112 = vmatmul.bf16.gmra.mxu0 %v951
        %v2113 = vpop.f32.mrf.mxu0
        %v2114 = vadd.f32 %v2065, %v2113
        %v2115 = vpop.f32.mrf.mxu0
        %v2116 = vadd.f32 %v2067, %v2115
        %2117 = vmatmul.bf16.gmra.mxu0 %v955
        %v2118 = vpop.f32.mrf.mxu0
        %v2119 = vadd.f32 %v2070, %v2118
        %v2120 = vpop.f32.mrf.mxu0
        %v2121 = vadd.f32 %v2072, %v2120
        %2122 = vmatmul.bf16.gmra.mxu0 %v959
        %v2123 = vpop.f32.mrf.mxu0
        %v2124 = vadd.f32 %v2075, %v2123
        %v2125 = vpop.f32.mrf.mxu0
        %v2126 = vadd.f32 %v2077, %v2125
        %2127 = vmatmul.bf16.gmra.mxu0 %v963
        %v2128 = vpop.f32.mrf.mxu0
        %v2129 = vadd.f32 %v2080, %v2128
        %v2130 = vpop.f32.mrf.mxu0
        %v2131 = vadd.f32 %v2082, %v2130
        %2132 = vmatmul.bf16.gmra.mxu0 %v967
        %v2133 = vpop.f32.mrf.mxu0
        %v2134 = vadd.f32 %v2085, %v2133
        %v2135 = vpop.f32.mrf.mxu0
        %v2136 = vadd.f32 %v2087, %v2135
        %2137 = vdwg.mxu0
        %2138 = vmatpush.bf16.msra.mxu0 %v1520
        %2139 = vmatpush.bf16.msra.mxu0 %v1516
        %2140 = vmatpush.bf16.msra.mxu0 %v1512
        %2141 = vmatpush.bf16.msra.mxu0 %v1508
        %2142 = vmatpush.bf16.msra.mxu0 %v1504
        %2143 = vmatpush.bf16.msra.mxu0 %v1500
        %2144 = vmatpush.bf16.msra.mxu0 %v1496
        %2145 = vmatpush.bf16.msra.mxu0 %v1492
        %2146 = vmatmul.bf16.gmra.mxu0 %v936
        %v2147 = vpop.f32.mrf.mxu0
        %v2148 = vadd.f32 %v1100, %v2147
        %v2149 = vpop.f32.mrf.mxu0
        %v2150 = vadd.f32 %v1100, %v2149
        %2151 = vmatmul.bf16.gmra.mxu0 %v940
        %v2152 = vpop.f32.mrf.mxu0
        %v2153 = vadd.f32 %v1100, %v2152
        %v2154 = vpop.f32.mrf.mxu0
        %v2155 = vadd.f32 %v1100, %v2154
        %2156 = vmatmul.bf16.gmra.mxu0 %v944
        %v2157 = vpop.f32.mrf.mxu0
        %v2158 = vadd.f32 %v1100, %v2157
        %v2159 = vpop.f32.mrf.mxu0
        %v2160 = vadd.f32 %v1100, %v2159
        %2161 = vmatmul.bf16.gmra.mxu0 %v948
        %v2162 = vpop.f32.mrf.mxu0
        %v2163 = vadd.f32 %v1100, %v2162
        %v2164 = vpop.f32.mrf.mxu0
        %v2165 = vadd.f32 %v1100, %v2164
        %2166 = vmatmul.bf16.gmra.mxu0 %v952
        %v2167 = vpop.f32.mrf.mxu0
        %v2168 = vadd.f32 %v1100, %v2167
        %v2169 = vpop.f32.mrf.mxu0
        %v2170 = vadd.f32 %v1100, %v2169
        %2171 = vmatmul.bf16.gmra.mxu0 %v956
        %v2172 = vpop.f32.mrf.mxu0
        %v2173 = vadd.f32 %v1100, %v2172
        %v2174 = vpop.f32.mrf.mxu0
        %v2175 = vadd.f32 %v1100, %v2174
        %2176 = vmatmul.bf16.gmra.mxu0 %v960
        %v2177 = vpop.f32.mrf.mxu0
        %v2178 = vadd.f32 %v1100, %v2177
        %v2179 = vpop.f32.mrf.mxu0
        %v2180 = vadd.f32 %v1100, %v2179
        %2181 = vmatmul.bf16.gmra.mxu0 %v964
        %v2182 = vpop.f32.mrf.mxu0
        %v2183 = vadd.f32 %v1100, %v2182
        %v2184 = vpop.f32.mrf.mxu0
        %v2185 = vadd.f32 %v1100, %v2184
        %2186 = vdwg.mxu0
        %2187 = vmatpush.bf16.msra.mxu0 %v1552
        %2188 = vmatpush.bf16.msra.mxu0 %v1548
        %2189 = vmatpush.bf16.msra.mxu0 %v1544
        %2190 = vmatpush.bf16.msra.mxu0 %v1540
        %2191 = vmatpush.bf16.msra.mxu0 %v1536
        %2192 = vmatpush.bf16.msra.mxu0 %v1532
        %2193 = vmatpush.bf16.msra.mxu0 %v1528
        %2194 = vmatpush.bf16.msra.mxu0 %v1524
        %2195 = vmatmul.bf16.gmra.mxu0 %v937
        %v2196 = vpop.f32.mrf.mxu0
        %v2197 = vadd.f32 %v2148, %v2196
        %v2198 = vpop.f32.mrf.mxu0
        %v2199 = vadd.f32 %v2150, %v2198
        %2200 = vmatmul.bf16.gmra.mxu0 %v941
        %v2201 = vpop.f32.mrf.mxu0
        %v2202 = vadd.f32 %v2153, %v2201
        %v2203 = vpop.f32.mrf.mxu0
        %v2204 = vadd.f32 %v2155, %v2203
        %2205 = vmatmul.bf16.gmra.mxu0 %v945
        %v2206 = vpop.f32.mrf.mxu0
        %v2207 = vadd.f32 %v2158, %v2206
        %v2208 = vpop.f32.mrf.mxu0
        %v2209 = vadd.f32 %v2160, %v2208
        %2210 = vmatmul.bf16.gmra.mxu0 %v949
        %v2211 = vpop.f32.mrf.mxu0
        %v2212 = vadd.f32 %v2163, %v2211
        %v2213 = vpop.f32.mrf.mxu0
        %v2214 = vadd.f32 %v2165, %v2213
        %2215 = vmatmul.bf16.gmra.mxu0 %v953
        %v2216 = vpop.f32.mrf.mxu0
        %v2217 = vadd.f32 %v2168, %v2216
        %v2218 = vpop.f32.mrf.mxu0
        %v2219 = vadd.f32 %v2170, %v2218
        %2220 = vmatmul.bf16.gmra.mxu0 %v957
        %v2221 = vpop.f32.mrf.mxu0
        %v2222 = vadd.f32 %v2173, %v2221
        %v2223 = vpop.f32.mrf.mxu0
        %v2224 = vadd.f32 %v2175, %v2223
        %2225 = vmatmul.bf16.gmra.mxu0 %v961
        %v2226 = vpop.f32.mrf.mxu0
        %v2227 = vadd.f32 %v2178, %v2226
        %v2228 = vpop.f32.mrf.mxu0
        %v2229 = vadd.f32 %v2180, %v2228
        %2230 = vmatmul.bf16.gmra.mxu0 %v965
        %v2231 = vpop.f32.mrf.mxu0
        %v2232 = vadd.f32 %v2183, %v2231
        %v2233 = vpop.f32.mrf.mxu0
        %v2234 = vadd.f32 %v2185, %v2233
        %2235 = vdwg.mxu0
        %2236 = vmatpush.bf16.msra.mxu0 %v1584
        %2237 = vmatpush.bf16.msra.mxu0 %v1580
        %2238 = vmatpush.bf16.msra.mxu0 %v1576
        %2239 = vmatpush.bf16.msra.mxu0 %v1572
        %2240 = vmatpush.bf16.msra.mxu0 %v1568
        %2241 = vmatpush.bf16.msra.mxu0 %v1564
        %2242 = vmatpush.bf16.msra.mxu0 %v1560
        %2243 = vmatpush.bf16.msra.mxu0 %v1556
        %2244 = vmatmul.bf16.gmra.mxu0 %v938
        %v2245 = vpop.f32.mrf.mxu0
        %v2246 = vadd.f32 %v2197, %v2245
        %v2247 = vpop.f32.mrf.mxu0
        %v2248 = vadd.f32 %v2199, %v2247
        %2249 = vmatmul.bf16.gmra.mxu0 %v942
        %v2250 = vpop.f32.mrf.mxu0
        %v2251 = vadd.f32 %v2202, %v2250
        %v2252 = vpop.f32.mrf.mxu0
        %v2253 = vadd.f32 %v2204, %v2252
        %2254 = vmatmul.bf16.gmra.mxu0 %v946
        %v2255 = vpop.f32.mrf.mxu0
        %v2256 = vadd.f32 %v2207, %v2255
        %v2257 = vpop.f32.mrf.mxu0
        %v2258 = vadd.f32 %v2209, %v2257
        %2259 = vmatmul.bf16.gmra.mxu0 %v950
        %v2260 = vpop.f32.mrf.mxu0
        %v2261 = vadd.f32 %v2212, %v2260
        %v2262 = vpop.f32.mrf.mxu0
        %v2263 = vadd.f32 %v2214, %v2262
        %2264 = vmatmul.bf16.gmra.mxu0 %v954
        %v2265 = vpop.f32.mrf.mxu0
        %v2266 = vadd.f32 %v2217, %v2265
        %v2267 = vpop.f32.mrf.mxu0
        %v2268 = vadd.f32 %v2219, %v2267
        %2269 = vmatmul.bf16.gmra.mxu0 %v958
        %v2270 = vpop.f32.mrf.mxu0
        %v2271 = vadd.f32 %v2222, %v2270
        %v2272 = vpop.f32.mrf.mxu0
        %v2273 = vadd.f32 %v2224, %v2272
        %2274 = vmatmul.bf16.gmra.mxu0 %v962
        %v2275 = vpop.f32.mrf.mxu0
        %v2276 = vadd.f32 %v2227, %v2275
        %v2277 = vpop.f32.mrf.mxu0
        %v2278 = vadd.f32 %v2229, %v2277
        %2279 = vmatmul.bf16.gmra.mxu0 %v966
        %v2280 = vpop.f32.mrf.mxu0
        %v2281 = vadd.f32 %v2232, %v2280
        %v2282 = vpop.f32.mrf.mxu0
        %v2283 = vadd.f32 %v2234, %v2282
        %2284 = vdwg.mxu0
        %2285 = vmatpush.bf16.msra.mxu0 %v1616
        %2286 = vmatpush.bf16.msra.mxu0 %v1612
        %2287 = vmatpush.bf16.msra.mxu0 %v1608
        %2288 = vmatpush.bf16.msra.mxu0 %v1604
        %2289 = vmatpush.bf16.msra.mxu0 %v1600
        %2290 = vmatpush.bf16.msra.mxu0 %v1596
        %2291 = vmatpush.bf16.msra.mxu0 %v1592
        %2292 = vmatpush.bf16.msra.mxu0 %v1588
        %2293 = vmatmul.bf16.gmra.mxu0 %v939
        %v2294 = vpop.f32.mrf.mxu0
        %v2295 = vadd.f32 %v2246, %v2294
        %v2296 = vpop.f32.mrf.mxu0
        %v2297 = vadd.f32 %v2248, %v2296
        %2298 = vmatmul.bf16.gmra.mxu0 %v943
        %v2299 = vpop.f32.mrf.mxu0
        %v2300 = vadd.f32 %v2251, %v2299
        %v2301 = vpop.f32.mrf.mxu0
        %v2302 = vadd.f32 %v2253, %v2301
        %2303 = vmatmul.bf16.gmra.mxu0 %v947
        %v2304 = vpop.f32.mrf.mxu0
        %v2305 = vadd.f32 %v2256, %v2304
        %v2306 = vpop.f32.mrf.mxu0
        %v2307 = vadd.f32 %v2258, %v2306
        %2308 = vmatmul.bf16.gmra.mxu0 %v951
        %v2309 = vpop.f32.mrf.mxu0
        %v2310 = vadd.f32 %v2261, %v2309
        %v2311 = vpop.f32.mrf.mxu0
        %v2312 = vadd.f32 %v2263, %v2311
        %2313 = vmatmul.bf16.gmra.mxu0 %v955
        %v2314 = vpop.f32.mrf.mxu0
        %v2315 = vadd.f32 %v2266, %v2314
        %v2316 = vpop.f32.mrf.mxu0
        %v2317 = vadd.f32 %v2268, %v2316
        %2318 = vmatmul.bf16.gmra.mxu0 %v959
        %v2319 = vpop.f32.mrf.mxu0
        %v2320 = vadd.f32 %v2271, %v2319
        %v2321 = vpop.f32.mrf.mxu0
        %v2322 = vadd.f32 %v2273, %v2321
        %2323 = vmatmul.bf16.gmra.mxu0 %v963
        %v2324 = vpop.f32.mrf.mxu0
        %v2325 = vadd.f32 %v2276, %v2324
        %v2326 = vpop.f32.mrf.mxu0
        %v2327 = vadd.f32 %v2278, %v2326
        %2328 = vmatmul.bf16.gmra.mxu0 %v967
        %v2329 = vpop.f32.mrf.mxu0
        %v2330 = vadd.f32 %v2281, %v2329
        %v2331 = vpop.f32.mrf.mxu0
        %v2332 = vadd.f32 %v2283, %v2331
        %2333 = vdwg.mxu0
        %2334 = vmatpush.bf16.msra.mxu0 %v1521
        %2335 = vmatpush.bf16.msra.mxu0 %v1517
        %2336 = vmatpush.bf16.msra.mxu0 %v1513
        %2337 = vmatpush.bf16.msra.mxu0 %v1509
        %2338 = vmatpush.bf16.msra.mxu0 %v1505
        %2339 = vmatpush.bf16.msra.mxu0 %v1501
        %2340 = vmatpush.bf16.msra.mxu0 %v1497
        %2341 = vmatpush.bf16.msra.mxu0 %v1493
        %2342 = vmatmul.bf16.gmra.mxu0 %v936
        %v2343 = vpop.f32.mrf.mxu0
        %v2344 = vadd.f32 %v1101, %v2343
        %v2345 = vpop.f32.mrf.mxu0
        %v2346 = vadd.f32 %v1101, %v2345
        %2347 = vmatmul.bf16.gmra.mxu0 %v940
        %v2348 = vpop.f32.mrf.mxu0
        %v2349 = vadd.f32 %v1101, %v2348
        %v2350 = vpop.f32.mrf.mxu0
        %v2351 = vadd.f32 %v1101, %v2350
        %2352 = vmatmul.bf16.gmra.mxu0 %v944
        %v2353 = vpop.f32.mrf.mxu0
        %v2354 = vadd.f32 %v1101, %v2353
        %v2355 = vpop.f32.mrf.mxu0
        %v2356 = vadd.f32 %v1101, %v2355
        %2357 = vmatmul.bf16.gmra.mxu0 %v948
        %v2358 = vpop.f32.mrf.mxu0
        %v2359 = vadd.f32 %v1101, %v2358
        %v2360 = vpop.f32.mrf.mxu0
        %v2361 = vadd.f32 %v1101, %v2360
        %2362 = vmatmul.bf16.gmra.mxu0 %v952
        %v2363 = vpop.f32.mrf.mxu0
        %v2364 = vadd.f32 %v1101, %v2363
        %v2365 = vpop.f32.mrf.mxu0
        %v2366 = vadd.f32 %v1101, %v2365
        %2367 = vmatmul.bf16.gmra.mxu0 %v956
        %v2368 = vpop.f32.mrf.mxu0
        %v2369 = vadd.f32 %v1101, %v2368
        %v2370 = vpop.f32.mrf.mxu0
        %v2371 = vadd.f32 %v1101, %v2370
        %2372 = vmatmul.bf16.gmra.mxu0 %v960
        %v2373 = vpop.f32.mrf.mxu0
        %v2374 = vadd.f32 %v1101, %v2373
        %v2375 = vpop.f32.mrf.mxu0
        %v2376 = vadd.f32 %v1101, %v2375
        %2377 = vmatmul.bf16.gmra.mxu0 %v964
        %v2378 = vpop.f32.mrf.mxu0
        %v2379 = vadd.f32 %v1101, %v2378
        %v2380 = vpop.f32.mrf.mxu0
        %v2381 = vadd.f32 %v1101, %v2380
        %2382 = vdwg.mxu0
        %2383 = vmatpush.bf16.msra.mxu0 %v1553
        %2384 = vmatpush.bf16.msra.mxu0 %v1549
        %2385 = vmatpush.bf16.msra.mxu0 %v1545
        %2386 = vmatpush.bf16.msra.mxu0 %v1541
        %2387 = vmatpush.bf16.msra.mxu0 %v1537
        %2388 = vmatpush.bf16.msra.mxu0 %v1533
        %2389 = vmatpush.bf16.msra.mxu0 %v1529
        %2390 = vmatpush.bf16.msra.mxu0 %v1525
        %2391 = vmatmul.bf16.gmra.mxu0 %v937
        %v2392 = vpop.f32.mrf.mxu0
        %v2393 = vadd.f32 %v2344, %v2392
        %v2394 = vpop.f32.mrf.mxu0
        %v2395 = vadd.f32 %v2346, %v2394
        %2396 = vmatmul.bf16.gmra.mxu0 %v941
        %v2397 = vpop.f32.mrf.mxu0
        %v2398 = vadd.f32 %v2349, %v2397
        %v2399 = vpop.f32.mrf.mxu0
        %v2400 = vadd.f32 %v2351, %v2399
        %2401 = vmatmul.bf16.gmra.mxu0 %v945
        %v2402 = vpop.f32.mrf.mxu0
        %v2403 = vadd.f32 %v2354, %v2402
        %v2404 = vpop.f32.mrf.mxu0
        %v2405 = vadd.f32 %v2356, %v2404
        %2406 = vmatmul.bf16.gmra.mxu0 %v949
        %v2407 = vpop.f32.mrf.mxu0
        %v2408 = vadd.f32 %v2359, %v2407
        %v2409 = vpop.f32.mrf.mxu0
        %v2410 = vadd.f32 %v2361, %v2409
        %2411 = vmatmul.bf16.gmra.mxu0 %v953
        %v2412 = vpop.f32.mrf.mxu0
        %v2413 = vadd.f32 %v2364, %v2412
        %v2414 = vpop.f32.mrf.mxu0
        %v2415 = vadd.f32 %v2366, %v2414
        %2416 = vmatmul.bf16.gmra.mxu0 %v957
        %v2417 = vpop.f32.mrf.mxu0
        %v2418 = vadd.f32 %v2369, %v2417
        %v2419 = vpop.f32.mrf.mxu0
        %v2420 = vadd.f32 %v2371, %v2419
        %2421 = vmatmul.bf16.gmra.mxu0 %v961
        %v2422 = vpop.f32.mrf.mxu0
        %v2423 = vadd.f32 %v2374, %v2422
        %v2424 = vpop.f32.mrf.mxu0
        %v2425 = vadd.f32 %v2376, %v2424
        %2426 = vmatmul.bf16.gmra.mxu0 %v965
        %v2427 = vpop.f32.mrf.mxu0
        %v2428 = vadd.f32 %v2379, %v2427
        %v2429 = vpop.f32.mrf.mxu0
        %v2430 = vadd.f32 %v2381, %v2429
        %2431 = vdwg.mxu0
        %2432 = vmatpush.bf16.msra.mxu0 %v1585
        %2433 = vmatpush.bf16.msra.mxu0 %v1581
        %2434 = vmatpush.bf16.msra.mxu0 %v1577
        %2435 = vmatpush.bf16.msra.mxu0 %v1573
        %2436 = vmatpush.bf16.msra.mxu0 %v1569
        %2437 = vmatpush.bf16.msra.mxu0 %v1565
        %2438 = vmatpush.bf16.msra.mxu0 %v1561
        %2439 = vmatpush.bf16.msra.mxu0 %v1557
        %2440 = vmatmul.bf16.gmra.mxu0 %v938
        %v2441 = vpop.f32.mrf.mxu0
        %v2442 = vadd.f32 %v2393, %v2441
        %v2443 = vpop.f32.mrf.mxu0
        %v2444 = vadd.f32 %v2395, %v2443
        %2445 = vmatmul.bf16.gmra.mxu0 %v942
        %v2446 = vpop.f32.mrf.mxu0
        %v2447 = vadd.f32 %v2398, %v2446
        %v2448 = vpop.f32.mrf.mxu0
        %v2449 = vadd.f32 %v2400, %v2448
        %2450 = vmatmul.bf16.gmra.mxu0 %v946
        %v2451 = vpop.f32.mrf.mxu0
        %v2452 = vadd.f32 %v2403, %v2451
        %v2453 = vpop.f32.mrf.mxu0
        %v2454 = vadd.f32 %v2405, %v2453
        %2455 = vmatmul.bf16.gmra.mxu0 %v950
        %v2456 = vpop.f32.mrf.mxu0
        %v2457 = vadd.f32 %v2408, %v2456
        %v2458 = vpop.f32.mrf.mxu0
        %v2459 = vadd.f32 %v2410, %v2458
        %2460 = vmatmul.bf16.gmra.mxu0 %v954
        %v2461 = vpop.f32.mrf.mxu0
        %v2462 = vadd.f32 %v2413, %v2461
        %v2463 = vpop.f32.mrf.mxu0
        %v2464 = vadd.f32 %v2415, %v2463
        %2465 = vmatmul.bf16.gmra.mxu0 %v958
        %v2466 = vpop.f32.mrf.mxu0
        %v2467 = vadd.f32 %v2418, %v2466
        %v2468 = vpop.f32.mrf.mxu0
        %v2469 = vadd.f32 %v2420, %v2468
        %2470 = vmatmul.bf16.gmra.mxu0 %v962
        %v2471 = vpop.f32.mrf.mxu0
        %v2472 = vadd.f32 %v2423, %v2471
        %v2473 = vpop.f32.mrf.mxu0
        %v2474 = vadd.f32 %v2425, %v2473
        %2475 = vmatmul.bf16.gmra.mxu0 %v966
        %v2476 = vpop.f32.mrf.mxu0
        %v2477 = vadd.f32 %v2428, %v2476
        %v2478 = vpop.f32.mrf.mxu0
        %v2479 = vadd.f32 %v2430, %v2478
        %2480 = vdwg.mxu0
        %2481 = vmatpush.bf16.msra.mxu0 %v1617
        %2482 = vmatpush.bf16.msra.mxu0 %v1613
        %2483 = vmatpush.bf16.msra.mxu0 %v1609
        %2484 = vmatpush.bf16.msra.mxu0 %v1605
        %2485 = vmatpush.bf16.msra.mxu0 %v1601
        %2486 = vmatpush.bf16.msra.mxu0 %v1597
        %2487 = vmatpush.bf16.msra.mxu0 %v1593
        %2488 = vmatpush.bf16.msra.mxu0 %v1589
        %2489 = vmatmul.bf16.gmra.mxu0 %v939
        %v2490 = vpop.f32.mrf.mxu0
        %v2491 = vadd.f32 %v2442, %v2490
        %v2492 = vpop.f32.mrf.mxu0
        %v2493 = vadd.f32 %v2444, %v2492
        %2494 = vmatmul.bf16.gmra.mxu0 %v943
        %v2495 = vpop.f32.mrf.mxu0
        %v2496 = vadd.f32 %v2447, %v2495
        %v2497 = vpop.f32.mrf.mxu0
        %v2498 = vadd.f32 %v2449, %v2497
        %2499 = vmatmul.bf16.gmra.mxu0 %v947
        %v2500 = vpop.f32.mrf.mxu0
        %v2501 = vadd.f32 %v2452, %v2500
        %v2502 = vpop.f32.mrf.mxu0
        %v2503 = vadd.f32 %v2454, %v2502
        %2504 = vmatmul.bf16.gmra.mxu0 %v951
        %v2505 = vpop.f32.mrf.mxu0
        %v2506 = vadd.f32 %v2457, %v2505
        %v2507 = vpop.f32.mrf.mxu0
        %v2508 = vadd.f32 %v2459, %v2507
        %2509 = vmatmul.bf16.gmra.mxu0 %v955
        %v2510 = vpop.f32.mrf.mxu0
        %v2511 = vadd.f32 %v2462, %v2510
        %v2512 = vpop.f32.mrf.mxu0
        %v2513 = vadd.f32 %v2464, %v2512
        %2514 = vmatmul.bf16.gmra.mxu0 %v959
        %v2515 = vpop.f32.mrf.mxu0
        %v2516 = vadd.f32 %v2467, %v2515
        %v2517 = vpop.f32.mrf.mxu0
        %v2518 = vadd.f32 %v2469, %v2517
        %2519 = vmatmul.bf16.gmra.mxu0 %v963
        %v2520 = vpop.f32.mrf.mxu0
        %v2521 = vadd.f32 %v2472, %v2520
        %v2522 = vpop.f32.mrf.mxu0
        %v2523 = vadd.f32 %v2474, %v2522
        %2524 = vmatmul.bf16.gmra.mxu0 %v967
        %v2525 = vpop.f32.mrf.mxu0
        %v2526 = vadd.f32 %v2477, %v2525
        %v2527 = vpop.f32.mrf.mxu0
        %v2528 = vadd.f32 %v2479, %v2527
        %2529 = vdwg.mxu0
        %v2530 = vmax.f32 %v1903, 0.0
        %v2531 = vmax.f32 %v2099, 0.0
        %v2532 = vmax.f32 %v2295, 0.0
        %v2533 = vmax.f32 %v2491, 0.0
        %v2534 = vmax.f32 %v1905, 0.0
        %v2535 = vmax.f32 %v2101, 0.0
        %v2536 = vmax.f32 %v2297, 0.0
        %v2537 = vmax.f32 %v2493, 0.0
        %v2538 = vmax.f32 %v1908, 0.0
        %v2539 = vmax.f32 %v2104, 0.0
        %v2540 = vmax.f32 %v2300, 0.0
        %v2541 = vmax.f32 %v2496, 0.0
        %v2542 = vmax.f32 %v1910, 0.0
        %v2543 = vmax.f32 %v2106, 0.0
        %v2544 = vmax.f32 %v2302, 0.0
        %v2545 = vmax.f32 %v2498, 0.0
        %v2546 = vmax.f32 %v1913, 0.0
        %v2547 = vmax.f32 %v2109, 0.0
        %v2548 = vmax.f32 %v2305, 0.0
        %v2549 = vmax.f32 %v2501, 0.0
        %v2550 = vmax.f32 %v1915, 0.0
        %v2551 = vmax.f32 %v2111, 0.0
        %v2552 = vmax.f32 %v2307, 0.0
        %v2553 = vmax.f32 %v2503, 0.0
        %v2554 = vmax.f32 %v1918, 0.0
        %v2555 = vmax.f32 %v2114, 0.0
        %v2556 = vmax.f32 %v2310, 0.0
        %v2557 = vmax.f32 %v2506, 0.0
        %v2558 = vmax.f32 %v1920, 0.0
        %v2559 = vmax.f32 %v2116, 0.0
        %v2560 = vmax.f32 %v2312, 0.0
        %v2561 = vmax.f32 %v2508, 0.0
        %v2562 = vmax.f32 %v1923, 0.0
        %v2563 = vmax.f32 %v2119, 0.0
        %v2564 = vmax.f32 %v2315, 0.0
        %v2565 = vmax.f32 %v2511, 0.0
        %v2566 = vmax.f32 %v1925, 0.0
        %v2567 = vmax.f32 %v2121, 0.0
        %v2568 = vmax.f32 %v2317, 0.0
        %v2569 = vmax.f32 %v2513, 0.0
        %v2570 = vmax.f32 %v1928, 0.0
        %v2571 = vmax.f32 %v2124, 0.0
        %v2572 = vmax.f32 %v2320, 0.0
        %v2573 = vmax.f32 %v2516, 0.0
        %v2574 = vmax.f32 %v1930, 0.0
        %v2575 = vmax.f32 %v2126, 0.0
        %v2576 = vmax.f32 %v2322, 0.0
        %v2577 = vmax.f32 %v2518, 0.0
        %v2578 = vmax.f32 %v1933, 0.0
        %v2579 = vmax.f32 %v2129, 0.0
        %v2580 = vmax.f32 %v2325, 0.0
        %v2581 = vmax.f32 %v2521, 0.0
        %v2582 = vmax.f32 %v1935, 0.0
        %v2583 = vmax.f32 %v2131, 0.0
        %v2584 = vmax.f32 %v2327, 0.0
        %v2585 = vmax.f32 %v2523, 0.0
        %v2586 = vmax.f32 %v1938, 0.0
        %v2587 = vmax.f32 %v2134, 0.0
        %v2588 = vmax.f32 %v2330, 0.0
        %v2589 = vmax.f32 %v2526, 0.0
        %v2590 = vmax.f32 %v1940, 0.0
        %v2591 = vmax.f32 %v2136, 0.0
        %v2592 = vmax.f32 %v2332, 0.0
        %v2593 = vmax.f32 %v2528, 0.0
        %v2594 = vpack.c.bf16 %v2534, %v2530
        %v2595 = vpack.c.bf16 %v2535, %v2531
        %v2596 = vpack.c.bf16 %v2536, %v2532
        %v2597 = vpack.c.bf16 %v2537, %v2533
        %v2598 = vpack.c.bf16 %v2542, %v2538
        %v2599 = vpack.c.bf16 %v2543, %v2539
        %v2600 = vpack.c.bf16 %v2544, %v2540
        %v2601 = vpack.c.bf16 %v2545, %v2541
        %v2602 = vpack.c.bf16 %v2550, %v2546
        %v2603 = vpack.c.bf16 %v2551, %v2547
        %v2604 = vpack.c.bf16 %v2552, %v2548
        %v2605 = vpack.c.bf16 %v2553, %v2549
        %v2606 = vpack.c.bf16 %v2558, %v2554
        %v2607 = vpack.c.bf16 %v2559, %v2555
        %v2608 = vpack.c.bf16 %v2560, %v2556
        %v2609 = vpack.c.bf16 %v2561, %v2557
        %v2610 = vpack.c.bf16 %v2566, %v2562
        %v2611 = vpack.c.bf16 %v2567, %v2563
        %v2612 = vpack.c.bf16 %v2568, %v2564
        %v2613 = vpack.c.bf16 %v2569, %v2565
        %v2614 = vpack.c.bf16 %v2574, %v2570
        %v2615 = vpack.c.bf16 %v2575, %v2571
        %v2616 = vpack.c.bf16 %v2576, %v2572
        %v2617 = vpack.c.bf16 %v2577, %v2573
        %v2618 = vpack.c.bf16 %v2582, %v2578
        %v2619 = vpack.c.bf16 %v2583, %v2579
        %v2620 = vpack.c.bf16 %v2584, %v2580
        %v2621 = vpack.c.bf16 %v2585, %v2581
        %v2622 = vpack.c.bf16 %v2590, %v2586
        %v2623 = vpack.c.bf16 %v2591, %v2587
        %v2624 = vpack.c.bf16 %v2592, %v2588
        %v2625 = vpack.c.bf16 %v2593, %v2589
        %v2626 = vld [vmem:[#allocation11] sm:$0xff]
        %v2627 = vld [vmem:[#allocation11 + $0x8] sm:$0xff]
        %v2628 = vld [vmem:[#allocation11 + $0x10] sm:$0xff]
        %v2629 = vld [vmem:[#allocation11 + $0x18] sm:$0xff]
        %v2630 = vld [vmem:[#allocation11 + $0x20] sm:$0xff]
        %v2631 = vld [vmem:[#allocation11 + $0x28] sm:$0xff]
        %v2632 = vld [vmem:[#allocation11 + $0x30] sm:$0xff]
        %v2633 = vld [vmem:[#allocation11 + $0x38] sm:$0xff]
        %v2634 = vld [vmem:[#allocation11 + $0x40] sm:$0xff]
        %v2635 = vld [vmem:[#allocation11 + $0x48] sm:$0xff]
        %v2636 = vld [vmem:[#allocation11 + $0x50] sm:$0xff]
        %v2637 = vld [vmem:[#allocation11 + $0x58] sm:$0xff]
        %v2638 = vld [vmem:[#allocation11 + $0x60] sm:$0xff]
        %v2639 = vld [vmem:[#allocation11 + $0x68] sm:$0xff]
        %v2640 = vld [vmem:[#allocation11 + $0x70] sm:$0xff]
        %v2641 = vld [vmem:[#allocation11 + $0x78] sm:$0xff]
        %v2642 = vld [vmem:[#allocation11 + $0x80] sm:$0xff]
        %v2643 = vld [vmem:[#allocation11 + $0x88] sm:$0xff]
        %v2644 = vld [vmem:[#allocation11 + $0x90] sm:$0xff]
        %v2645 = vld [vmem:[#allocation11 + $0x98] sm:$0xff]
        %v2646 = vld [vmem:[#allocation11 + $0xa0] sm:$0xff]
        %v2647 = vld [vmem:[#allocation11 + $0xa8] sm:$0xff]
        %v2648 = vld [vmem:[#allocation11 + $0xb0] sm:$0xff]
        %v2649 = vld [vmem:[#allocation11 + $0xb8] sm:$0xff]
        %v2650 = vld [vmem:[#allocation11 + $0xc0] sm:$0xff]
        %v2651 = vld [vmem:[#allocation11 + $0xc8] sm:$0xff]
        %v2652 = vld [vmem:[#allocation11 + $0xd0] sm:$0xff]
        %v2653 = vld [vmem:[#allocation11 + $0xd8] sm:$0xff]
        %v2654 = vld [vmem:[#allocation11 + $0xe0] sm:$0xff]
        %v2655 = vld [vmem:[#allocation11 + $0xe8] sm:$0xff]
        %v2656 = vld [vmem:[#allocation11 + $0xf0] sm:$0xff]
        %v2657 = vld [vmem:[#allocation11 + $0xf8] sm:$0xff]
        %v2658 = vld [vmem:[#allocation11 + $0x100] sm:$0xff]
        %v2659 = vld [vmem:[#allocation11 + $0x108] sm:$0xff]
        %v2660 = vld [vmem:[#allocation11 + $0x110] sm:$0xff]
        %v2661 = vld [vmem:[#allocation11 + $0x118] sm:$0xff]
        %v2662 = vld [vmem:[#allocation11 + $0x120] sm:$0xff]
        %v2663 = vld [vmem:[#allocation11 + $0x128] sm:$0xff]
        %v2664 = vld [vmem:[#allocation11 + $0x130] sm:$0xff]
        %v2665 = vld [vmem:[#allocation11 + $0x138] sm:$0xff]
        %v2666 = vld [vmem:[#allocation11 + $0x140] sm:$0xff]
        %v2667 = vld [vmem:[#allocation11 + $0x148] sm:$0xff]
        %v2668 = vld [vmem:[#allocation11 + $0x150] sm:$0xff]
        %v2669 = vld [vmem:[#allocation11 + $0x158] sm:$0xff]
        %v2670 = vld [vmem:[#allocation11 + $0x160] sm:$0xff]
        %v2671 = vld [vmem:[#allocation11 + $0x168] sm:$0xff]
        %v2672 = vld [vmem:[#allocation11 + $0x170] sm:$0xff]
        %v2673 = vld [vmem:[#allocation11 + $0x178] sm:$0xff]
        %v2674 = vld [vmem:[#allocation11 + $0x180] sm:$0xff]
        %v2675 = vld [vmem:[#allocation11 + $0x188] sm:$0xff]
        %v2676 = vld [vmem:[#allocation11 + $0x190] sm:$0xff]
        %v2677 = vld [vmem:[#allocation11 + $0x198] sm:$0xff]
        %v2678 = vld [vmem:[#allocation11 + $0x1a0] sm:$0xff]
        %v2679 = vld [vmem:[#allocation11 + $0x1a8] sm:$0xff]
        %v2680 = vld [vmem:[#allocation11 + $0x1b0] sm:$0xff]
        %v2681 = vld [vmem:[#allocation11 + $0x1b8] sm:$0xff]
        %v2682 = vld [vmem:[#allocation11 + $0x1c0] sm:$0xff]
        %v2683 = vld [vmem:[#allocation11 + $0x1c8] sm:$0xff]
        %v2684 = vld [vmem:[#allocation11 + $0x1d0] sm:$0xff]
        %v2685 = vld [vmem:[#allocation11 + $0x1d8] sm:$0xff]
        %v2686 = vld [vmem:[#allocation11 + $0x1e0] sm:$0xff]
        %v2687 = vld [vmem:[#allocation11 + $0x1e8] sm:$0xff]
        %v2688 = vld [vmem:[#allocation11 + $0x1f0] sm:$0xff]
        %v2689 = vld [vmem:[#allocation11 + $0x1f8] sm:$0xff]
        %v2690 = vld [vmem:[#allocation11 + $0x200] sm:$0xff]
        %v2691 = vld [vmem:[#allocation11 + $0x208] sm:$0xff]
        %v2692 = vld [vmem:[#allocation11 + $0x210] sm:$0xff]
        %v2693 = vld [vmem:[#allocation11 + $0x218] sm:$0xff]
        %v2694 = vld [vmem:[#allocation11 + $0x220] sm:$0xff]
        %v2695 = vld [vmem:[#allocation11 + $0x228] sm:$0xff]
        %v2696 = vld [vmem:[#allocation11 + $0x230] sm:$0xff]
        %v2697 = vld [vmem:[#allocation11 + $0x238] sm:$0xff]
        %v2698 = vld [vmem:[#allocation11 + $0x240] sm:$0xff]
        %v2699 = vld [vmem:[#allocation11 + $0x248] sm:$0xff]
        %v2700 = vld [vmem:[#allocation11 + $0x250] sm:$0xff]
        %v2701 = vld [vmem:[#allocation11 + $0x258] sm:$0xff]
        %v2702 = vld [vmem:[#allocation11 + $0x260] sm:$0xff]
        %v2703 = vld [vmem:[#allocation11 + $0x268] sm:$0xff]
        %v2704 = vld [vmem:[#allocation11 + $0x270] sm:$0xff]
        %v2705 = vld [vmem:[#allocation11 + $0x278] sm:$0xff]
        %v2706 = vld [vmem:[#allocation11 + $0x280] sm:$0xff]
        %v2707 = vld [vmem:[#allocation11 + $0x288] sm:$0xff]
        %v2708 = vld [vmem:[#allocation11 + $0x290] sm:$0xff]
        %v2709 = vld [vmem:[#allocation11 + $0x298] sm:$0xff]
        %v2710 = vld [vmem:[#allocation11 + $0x2a0] sm:$0xff]
        %v2711 = vld [vmem:[#allocation11 + $0x2a8] sm:$0xff]
        %v2712 = vld [vmem:[#allocation11 + $0x2b0] sm:$0xff]
        %v2713 = vld [vmem:[#allocation11 + $0x2b8] sm:$0xff]
        %v2714 = vld [vmem:[#allocation11 + $0x2c0] sm:$0xff]
        %v2715 = vld [vmem:[#allocation11 + $0x2c8] sm:$0xff]
        %v2716 = vld [vmem:[#allocation11 + $0x2d0] sm:$0xff]
        %v2717 = vld [vmem:[#allocation11 + $0x2d8] sm:$0xff]
        %v2718 = vld [vmem:[#allocation11 + $0x2e0] sm:$0xff]
        %v2719 = vld [vmem:[#allocation11 + $0x2e8] sm:$0xff]
        %v2720 = vld [vmem:[#allocation11 + $0x2f0] sm:$0xff]
        %v2721 = vld [vmem:[#allocation11 + $0x2f8] sm:$0xff]
        %v2722 = vld [vmem:[#allocation11 + $0x300] sm:$0xff]
        %v2723 = vld [vmem:[#allocation11 + $0x308] sm:$0xff]
        %v2724 = vld [vmem:[#allocation11 + $0x310] sm:$0xff]
        %v2725 = vld [vmem:[#allocation11 + $0x318] sm:$0xff]
        %v2726 = vld [vmem:[#allocation11 + $0x320] sm:$0xff]
        %v2727 = vld [vmem:[#allocation11 + $0x328] sm:$0xff]
        %v2728 = vld [vmem:[#allocation11 + $0x330] sm:$0xff]
        %v2729 = vld [vmem:[#allocation11 + $0x338] sm:$0xff]
        %v2730 = vld [vmem:[#allocation11 + $0x340] sm:$0xff]
        %v2731 = vld [vmem:[#allocation11 + $0x348] sm:$0xff]
        %v2732 = vld [vmem:[#allocation11 + $0x350] sm:$0xff]
        %v2733 = vld [vmem:[#allocation11 + $0x358] sm:$0xff]
        %v2734 = vld [vmem:[#allocation11 + $0x360] sm:$0xff]
        %v2735 = vld [vmem:[#allocation11 + $0x368] sm:$0xff]
        %v2736 = vld [vmem:[#allocation11 + $0x370] sm:$0xff]
        %v2737 = vld [vmem:[#allocation11 + $0x378] sm:$0xff]
        %v2738 = vld [vmem:[#allocation11 + $0x380] sm:$0xff]
        %v2739 = vld [vmem:[#allocation11 + $0x388] sm:$0xff]
        %v2740 = vld [vmem:[#allocation11 + $0x390] sm:$0xff]
        %v2741 = vld [vmem:[#allocation11 + $0x398] sm:$0xff]
        %v2742 = vld [vmem:[#allocation11 + $0x3a0] sm:$0xff]
        %v2743 = vld [vmem:[#allocation11 + $0x3a8] sm:$0xff]
        %v2744 = vld [vmem:[#allocation11 + $0x3b0] sm:$0xff]
        %v2745 = vld [vmem:[#allocation11 + $0x3b8] sm:$0xff]
        %v2746 = vld [vmem:[#allocation11 + $0x3c0] sm:$0xff]
        %v2747 = vld [vmem:[#allocation11 + $0x3c8] sm:$0xff]
        %v2748 = vld [vmem:[#allocation11 + $0x3d0] sm:$0xff]
        %v2749 = vld [vmem:[#allocation11 + $0x3d8] sm:$0xff]
        %v2750 = vld [vmem:[#allocation11 + $0x3e0] sm:$0xff]
        %v2751 = vld [vmem:[#allocation11 + $0x3e8] sm:$0xff]
        %v2752 = vld [vmem:[#allocation11 + $0x3f0] sm:$0xff]
        %v2753 = vld [vmem:[#allocation11 + $0x3f8] sm:$0xff]
        %v2754 = vld [vmem:[%s6] sm:$0xf]
        %v2756 = vperm.slane %v2754, 0
        %v2757 = vperm.slane %v2754, 1
        %v2758 = vperm.slane %v2754, 2
        %v2759 = vperm.slane %v2754, 3
        %v2892 = vunpack.c.l.b16 %v2626
        %v2893 = vunpack.c.h.b16 %v2626
        %v2894 = vunpack.c.l.b16 %v2627
        %v2895 = vunpack.c.h.b16 %v2627
        %v2896 = vunpack.c.l.b16 %v2628
        %v2897 = vunpack.c.h.b16 %v2628
        %v2898 = vunpack.c.l.b16 %v2629
        %v2899 = vunpack.c.h.b16 %v2629
        %v2900 = vunpack.c.l.b16 %v2630
        %v2901 = vunpack.c.h.b16 %v2630
        %v2902 = vunpack.c.l.b16 %v2631
        %v2903 = vunpack.c.h.b16 %v2631
        %v2904 = vunpack.c.l.b16 %v2632
        %v2905 = vunpack.c.h.b16 %v2632
        %v2906 = vunpack.c.l.b16 %v2633
        %v2907 = vunpack.c.h.b16 %v2633
        %v2908 = vunpack.c.l.b16 %v2634
        %v2909 = vunpack.c.h.b16 %v2634
        %v2910 = vunpack.c.l.b16 %v2635
        %v2911 = vunpack.c.h.b16 %v2635
        %v2912 = vunpack.c.l.b16 %v2636
        %v2913 = vunpack.c.h.b16 %v2636
        %v2914 = vunpack.c.l.b16 %v2637
        %v2915 = vunpack.c.h.b16 %v2637
        %v2916 = vunpack.c.l.b16 %v2638
        %v2917 = vunpack.c.h.b16 %v2638
        %v2918 = vunpack.c.l.b16 %v2639
        %v2919 = vunpack.c.h.b16 %v2639
        %v2920 = vunpack.c.l.b16 %v2640
        %v2921 = vunpack.c.h.b16 %v2640
        %v2922 = vunpack.c.l.b16 %v2641
        %v2923 = vunpack.c.h.b16 %v2641
        %v2924 = vunpack.c.l.b16 %v2642
        %v2925 = vunpack.c.h.b16 %v2642
        %v2926 = vunpack.c.l.b16 %v2643
        %v2927 = vunpack.c.h.b16 %v2643
        %v2928 = vunpack.c.l.b16 %v2644
        %v2929 = vunpack.c.h.b16 %v2644
        %v2930 = vunpack.c.l.b16 %v2645
        %v2931 = vunpack.c.h.b16 %v2645
        %v2932 = vunpack.c.l.b16 %v2646
        %v2933 = vunpack.c.h.b16 %v2646
        %v2934 = vunpack.c.l.b16 %v2647
        %v2935 = vunpack.c.h.b16 %v2647
        %v2936 = vunpack.c.l.b16 %v2648
        %v2937 = vunpack.c.h.b16 %v2648
        %v2938 = vunpack.c.l.b16 %v2649
        %v2939 = vunpack.c.h.b16 %v2649
        %v2940 = vunpack.c.l.b16 %v2650
        %v2941 = vunpack.c.h.b16 %v2650
        %v2942 = vunpack.c.l.b16 %v2651
        %v2943 = vunpack.c.h.b16 %v2651
        %v2944 = vunpack.c.l.b16 %v2652
        %v2945 = vunpack.c.h.b16 %v2652
        %v2946 = vunpack.c.l.b16 %v2653
        %v2947 = vunpack.c.h.b16 %v2653
        %v2948 = vunpack.c.l.b16 %v2654
        %v2949 = vunpack.c.h.b16 %v2654
        %v2950 = vunpack.c.l.b16 %v2655
        %v2951 = vunpack.c.h.b16 %v2655
        %v2952 = vunpack.c.l.b16 %v2656
        %v2953 = vunpack.c.h.b16 %v2656
        %v2954 = vunpack.c.l.b16 %v2657
        %v2955 = vunpack.c.h.b16 %v2657
        %v2956 = vunpack.c.l.b16 %v2658
        %v2957 = vunpack.c.h.b16 %v2658
        %v2958 = vunpack.c.l.b16 %v2659
        %v2959 = vunpack.c.h.b16 %v2659
        %v2960 = vunpack.c.l.b16 %v2660
        %v2961 = vunpack.c.h.b16 %v2660
        %v2962 = vunpack.c.l.b16 %v2661
        %v2963 = vunpack.c.h.b16 %v2661
        %v2964 = vunpack.c.l.b16 %v2662
        %v2965 = vunpack.c.h.b16 %v2662
        %v2966 = vunpack.c.l.b16 %v2663
        %v2967 = vunpack.c.h.b16 %v2663
        %v2968 = vunpack.c.l.b16 %v2664
        %v2969 = vunpack.c.h.b16 %v2664
        %v2970 = vunpack.c.l.b16 %v2665
        %v2971 = vunpack.c.h.b16 %v2665
        %v2972 = vunpack.c.l.b16 %v2666
        %v2973 = vunpack.c.h.b16 %v2666
        %v2974 = vunpack.c.l.b16 %v2667
        %v2975 = vunpack.c.h.b16 %v2667
        %v2976 = vunpack.c.l.b16 %v2668
        %v2977 = vunpack.c.h.b16 %v2668
        %v2978 = vunpack.c.l.b16 %v2669
        %v2979 = vunpack.c.h.b16 %v2669
        %v2980 = vunpack.c.l.b16 %v2670
        %v2981 = vunpack.c.h.b16 %v2670
        %v2982 = vunpack.c.l.b16 %v2671
        %v2983 = vunpack.c.h.b16 %v2671
        %v2984 = vunpack.c.l.b16 %v2672
        %v2985 = vunpack.c.h.b16 %v2672
        %v2986 = vunpack.c.l.b16 %v2673
        %v2987 = vunpack.c.h.b16 %v2673
        %v2988 = vunpack.c.l.b16 %v2674
        %v2989 = vunpack.c.h.b16 %v2674
        %v2990 = vunpack.c.l.b16 %v2675
        %v2991 = vunpack.c.h.b16 %v2675
        %v2992 = vunpack.c.l.b16 %v2676
        %v2993 = vunpack.c.h.b16 %v2676
        %v2994 = vunpack.c.l.b16 %v2677
        %v2995 = vunpack.c.h.b16 %v2677
        %v2996 = vunpack.c.l.b16 %v2678
        %v2997 = vunpack.c.h.b16 %v2678
        %v2998 = vunpack.c.l.b16 %v2679
        %v2999 = vunpack.c.h.b16 %v2679
        %v3000 = vunpack.c.l.b16 %v2680
        %v3001 = vunpack.c.h.b16 %v2680
        %v3002 = vunpack.c.l.b16 %v2681
        %v3003 = vunpack.c.h.b16 %v2681
        %v3004 = vunpack.c.l.b16 %v2682
        %v3005 = vunpack.c.h.b16 %v2682
        %v3006 = vunpack.c.l.b16 %v2683
        %v3007 = vunpack.c.h.b16 %v2683
        %v3008 = vunpack.c.l.b16 %v2684
        %v3009 = vunpack.c.h.b16 %v2684
        %v3010 = vunpack.c.l.b16 %v2685
        %v3011 = vunpack.c.h.b16 %v2685
        %v3012 = vunpack.c.l.b16 %v2686
        %v3013 = vunpack.c.h.b16 %v2686
        %v3014 = vunpack.c.l.b16 %v2687
        %v3015 = vunpack.c.h.b16 %v2687
        %v3016 = vunpack.c.l.b16 %v2688
        %v3017 = vunpack.c.h.b16 %v2688
        %v3018 = vunpack.c.l.b16 %v2689
        %v3019 = vunpack.c.h.b16 %v2689
        %v3020 = vunpack.c.l.b16 %v2690
        %v3021 = vunpack.c.h.b16 %v2690
        %v3022 = vunpack.c.l.b16 %v2691
        %v3023 = vunpack.c.h.b16 %v2691
        %v3024 = vunpack.c.l.b16 %v2692
        %v3025 = vunpack.c.h.b16 %v2692
        %v3026 = vunpack.c.l.b16 %v2693
        %v3027 = vunpack.c.h.b16 %v2693
        %v3028 = vunpack.c.l.b16 %v2694
        %v3029 = vunpack.c.h.b16 %v2694
        %v3030 = vunpack.c.l.b16 %v2695
        %v3031 = vunpack.c.h.b16 %v2695
        %v3032 = vunpack.c.l.b16 %v2696
        %v3033 = vunpack.c.h.b16 %v2696
        %v3034 = vunpack.c.l.b16 %v2697
        %v3035 = vunpack.c.h.b16 %v2697
        %v3036 = vunpack.c.l.b16 %v2698
        %v3037 = vunpack.c.h.b16 %v2698
        %v3038 = vunpack.c.l.b16 %v2699
        %v3039 = vunpack.c.h.b16 %v2699
        %v3040 = vunpack.c.l.b16 %v2700
        %v3041 = vunpack.c.h.b16 %v2700
        %v3042 = vunpack.c.l.b16 %v2701
        %v3043 = vunpack.c.h.b16 %v2701
        %v3044 = vunpack.c.l.b16 %v2702
        %v3045 = vunpack.c.h.b16 %v2702
        %v3046 = vunpack.c.l.b16 %v2703
        %v3047 = vunpack.c.h.b16 %v2703
        %v3048 = vunpack.c.l.b16 %v2704
        %v3049 = vunpack.c.h.b16 %v2704
        %v3050 = vunpack.c.l.b16 %v2705
        %v3051 = vunpack.c.h.b16 %v2705
        %v3052 = vunpack.c.l.b16 %v2706
        %v3053 = vunpack.c.h.b16 %v2706
        %v3054 = vunpack.c.l.b16 %v2707
        %v3055 = vunpack.c.h.b16 %v2707
        %v3056 = vunpack.c.l.b16 %v2708
        %v3057 = vunpack.c.h.b16 %v2708
        %v3058 = vunpack.c.l.b16 %v2709
        %v3059 = vunpack.c.h.b16 %v2709
        %v3060 = vunpack.c.l.b16 %v2710
        %v3061 = vunpack.c.h.b16 %v2710
        %v3062 = vunpack.c.l.b16 %v2711
        %v3063 = vunpack.c.h.b16 %v2711
        %v3064 = vunpack.c.l.b16 %v2712
        %v3065 = vunpack.c.h.b16 %v2712
        %v3066 = vunpack.c.l.b16 %v2713
        %v3067 = vunpack.c.h.b16 %v2713
        %v3068 = vunpack.c.l.b16 %v2714
        %v3069 = vunpack.c.h.b16 %v2714
        %v3070 = vunpack.c.l.b16 %v2715
        %v3071 = vunpack.c.h.b16 %v2715
        %v3072 = vunpack.c.l.b16 %v2716
        %v3073 = vunpack.c.h.b16 %v2716
        %v3074 = vunpack.c.l.b16 %v2717
        %v3075 = vunpack.c.h.b16 %v2717
        %v3076 = vunpack.c.l.b16 %v2718
        %v3077 = vunpack.c.h.b16 %v2718
        %v3078 = vunpack.c.l.b16 %v2719
        %v3079 = vunpack.c.h.b16 %v2719
        %v3080 = vunpack.c.l.b16 %v2720
        %v3081 = vunpack.c.h.b16 %v2720
        %v3082 = vunpack.c.l.b16 %v2721
        %v3083 = vunpack.c.h.b16 %v2721
        %v3084 = vunpack.c.l.b16 %v2722
        %v3085 = vunpack.c.h.b16 %v2722
        %v3086 = vunpack.c.l.b16 %v2723
        %v3087 = vunpack.c.h.b16 %v2723
        %v3088 = vunpack.c.l.b16 %v2724
        %v3089 = vunpack.c.h.b16 %v2724
        %v3090 = vunpack.c.l.b16 %v2725
        %v3091 = vunpack.c.h.b16 %v2725
        %v3092 = vunpack.c.l.b16 %v2726
        %v3093 = vunpack.c.h.b16 %v2726
        %v3094 = vunpack.c.l.b16 %v2727
        %v3095 = vunpack.c.h.b16 %v2727
        %v3096 = vunpack.c.l.b16 %v2728
        %v3097 = vunpack.c.h.b16 %v2728
        %v3098 = vunpack.c.l.b16 %v2729
        %v3099 = vunpack.c.h.b16 %v2729
        %v3100 = vunpack.c.l.b16 %v2730
        %v3101 = vunpack.c.h.b16 %v2730
        %v3102 = vunpack.c.l.b16 %v2731
        %v3103 = vunpack.c.h.b16 %v2731
        %v3104 = vunpack.c.l.b16 %v2732
        %v3105 = vunpack.c.h.b16 %v2732
        %v3106 = vunpack.c.l.b16 %v2733
        %v3107 = vunpack.c.h.b16 %v2733
        %v3108 = vunpack.c.l.b16 %v2734
        %v3109 = vunpack.c.h.b16 %v2734
        %v3110 = vunpack.c.l.b16 %v2735
        %v3111 = vunpack.c.h.b16 %v2735
        %v3112 = vunpack.c.l.b16 %v2736
        %v3113 = vunpack.c.h.b16 %v2736
        %v3114 = vunpack.c.l.b16 %v2737
        %v3115 = vunpack.c.h.b16 %v2737
        %v3116 = vunpack.c.l.b16 %v2738
        %v3117 = vunpack.c.h.b16 %v2738
        %v3118 = vunpack.c.l.b16 %v2739
        %v3119 = vunpack.c.h.b16 %v2739
        %v3120 = vunpack.c.l.b16 %v2740
        %v3121 = vunpack.c.h.b16 %v2740
        %v3122 = vunpack.c.l.b16 %v2741
        %v3123 = vunpack.c.h.b16 %v2741
        %v3124 = vunpack.c.l.b16 %v2742
        %v3125 = vunpack.c.h.b16 %v2742
        %v3126 = vunpack.c.l.b16 %v2743
        %v3127 = vunpack.c.h.b16 %v2743
        %v3128 = vunpack.c.l.b16 %v2744
        %v3129 = vunpack.c.h.b16 %v2744
        %v3130 = vunpack.c.l.b16 %v2745
        %v3131 = vunpack.c.h.b16 %v2745
        %v3132 = vunpack.c.l.b16 %v2746
        %v3133 = vunpack.c.h.b16 %v2746
        %v3134 = vunpack.c.l.b16 %v2747
        %v3135 = vunpack.c.h.b16 %v2747
        %v3136 = vunpack.c.l.b16 %v2748
        %v3137 = vunpack.c.h.b16 %v2748
        %v3138 = vunpack.c.l.b16 %v2749
        %v3139 = vunpack.c.h.b16 %v2749
        %v3140 = vunpack.c.l.b16 %v2750
        %v3141 = vunpack.c.h.b16 %v2750
        %v3142 = vunpack.c.l.b16 %v2751
        %v3143 = vunpack.c.h.b16 %v2751
        %v3144 = vunpack.c.l.b16 %v2752
        %v3145 = vunpack.c.h.b16 %v2752
        %v3146 = vunpack.c.l.b16 %v2753
        %v3147 = vunpack.c.h.b16 %v2753
        %v3148 = vpack.c.b16 %v2896, %v2892
        %v3149 = vpack.c.b16 %v2897, %v2893
        %v3150 = vpack.c.b16 %v2898, %v2894
        %v3151 = vpack.c.b16 %v2899, %v2895
        %v3152 = vpack.c.b16 %v2904, %v2900
        %v3153 = vpack.c.b16 %v2905, %v2901
        %v3154 = vpack.c.b16 %v2906, %v2902
        %v3155 = vpack.c.b16 %v2907, %v2903
        %v3156 = vpack.c.b16 %v2912, %v2908
        %v3157 = vpack.c.b16 %v2913, %v2909
        %v3158 = vpack.c.b16 %v2914, %v2910
        %v3159 = vpack.c.b16 %v2915, %v2911
        %v3160 = vpack.c.b16 %v2920, %v2916
        %v3161 = vpack.c.b16 %v2921, %v2917
        %v3162 = vpack.c.b16 %v2922, %v2918
        %v3163 = vpack.c.b16 %v2923, %v2919
        %v3164 = vpack.c.b16 %v2928, %v2924
        %v3165 = vpack.c.b16 %v2929, %v2925
        %v3166 = vpack.c.b16 %v2930, %v2926
        %v3167 = vpack.c.b16 %v2931, %v2927
        %v3168 = vpack.c.b16 %v2936, %v2932
        %v3169 = vpack.c.b16 %v2937, %v2933
        %v3170 = vpack.c.b16 %v2938, %v2934
        %v3171 = vpack.c.b16 %v2939, %v2935
        %v3172 = vpack.c.b16 %v2944, %v2940
        %v3173 = vpack.c.b16 %v2945, %v2941
        %v3174 = vpack.c.b16 %v2946, %v2942
        %v3175 = vpack.c.b16 %v2947, %v2943
        %v3176 = vpack.c.b16 %v2952, %v2948
        %v3177 = vpack.c.b16 %v2953, %v2949
        %v3178 = vpack.c.b16 %v2954, %v2950
        %v3179 = vpack.c.b16 %v2955, %v2951
        %v3180 = vpack.c.b16 %v2960, %v2956
        %v3181 = vpack.c.b16 %v2961, %v2957
        %v3182 = vpack.c.b16 %v2962, %v2958
        %v3183 = vpack.c.b16 %v2963, %v2959
        %v3184 = vpack.c.b16 %v2968, %v2964
        %v3185 = vpack.c.b16 %v2969, %v2965
        %v3186 = vpack.c.b16 %v2970, %v2966
        %v3187 = vpack.c.b16 %v2971, %v2967
        %v3188 = vpack.c.b16 %v2976, %v2972
        %v3189 = vpack.c.b16 %v2977, %v2973
        %v3190 = vpack.c.b16 %v2978, %v2974
        %v3191 = vpack.c.b16 %v2979, %v2975
        %v3192 = vpack.c.b16 %v2984, %v2980
        %v3193 = vpack.c.b16 %v2985, %v2981
        %v3194 = vpack.c.b16 %v2986, %v2982
        %v3195 = vpack.c.b16 %v2987, %v2983
        %v3196 = vpack.c.b16 %v2992, %v2988
        %v3197 = vpack.c.b16 %v2993, %v2989
        %v3198 = vpack.c.b16 %v2994, %v2990
        %v3199 = vpack.c.b16 %v2995, %v2991
        %v3200 = vpack.c.b16 %v3000, %v2996
        %v3201 = vpack.c.b16 %v3001, %v2997
        %v3202 = vpack.c.b16 %v3002, %v2998
        %v3203 = vpack.c.b16 %v3003, %v2999
        %v3204 = vpack.c.b16 %v3008, %v3004
        %v3205 = vpack.c.b16 %v3009, %v3005
        %v3206 = vpack.c.b16 %v3010, %v3006
        %v3207 = vpack.c.b16 %v3011, %v3007
        %v3208 = vpack.c.b16 %v3016, %v3012
        %v3209 = vpack.c.b16 %v3017, %v3013
        %v3210 = vpack.c.b16 %v3018, %v3014
        %v3211 = vpack.c.b16 %v3019, %v3015
        %v3212 = vpack.c.b16 %v3024, %v3020
        %v3213 = vpack.c.b16 %v3025, %v3021
        %v3214 = vpack.c.b16 %v3026, %v3022
        %v3215 = vpack.c.b16 %v3027, %v3023
        %v3216 = vpack.c.b16 %v3032, %v3028
        %v3217 = vpack.c.b16 %v3033, %v3029
        %v3218 = vpack.c.b16 %v3034, %v3030
        %v3219 = vpack.c.b16 %v3035, %v3031
        %v3220 = vpack.c.b16 %v3040, %v3036
        %v3221 = vpack.c.b16 %v3041, %v3037
        %v3222 = vpack.c.b16 %v3042, %v3038
        %v3223 = vpack.c.b16 %v3043, %v3039
        %v3224 = vpack.c.b16 %v3048, %v3044
        %v3225 = vpack.c.b16 %v3049, %v3045
        %v3226 = vpack.c.b16 %v3050, %v3046
        %v3227 = vpack.c.b16 %v3051, %v3047
        %v3228 = vpack.c.b16 %v3056, %v3052
        %v3229 = vpack.c.b16 %v3057, %v3053
        %v3230 = vpack.c.b16 %v3058, %v3054
        %v3231 = vpack.c.b16 %v3059, %v3055
        %v3232 = vpack.c.b16 %v3064, %v3060
        %v3233 = vpack.c.b16 %v3065, %v3061
        %v3234 = vpack.c.b16 %v3066, %v3062
        %v3235 = vpack.c.b16 %v3067, %v3063
        %v3236 = vpack.c.b16 %v3072, %v3068
        %v3237 = vpack.c.b16 %v3073, %v3069
        %v3238 = vpack.c.b16 %v3074, %v3070
        %v3239 = vpack.c.b16 %v3075, %v3071
        %v3240 = vpack.c.b16 %v3080, %v3076
        %v3241 = vpack.c.b16 %v3081, %v3077
        %v3242 = vpack.c.b16 %v3082, %v3078
        %v3243 = vpack.c.b16 %v3083, %v3079
        %v3244 = vpack.c.b16 %v3088, %v3084
        %v3245 = vpack.c.b16 %v3089, %v3085
        %v3246 = vpack.c.b16 %v3090, %v3086
        %v3247 = vpack.c.b16 %v3091, %v3087
        %v3248 = vpack.c.b16 %v3096, %v3092
        %v3249 = vpack.c.b16 %v3097, %v3093
        %v3250 = vpack.c.b16 %v3098, %v3094
        %v3251 = vpack.c.b16 %v3099, %v3095
        %v3252 = vpack.c.b16 %v3104, %v3100
        %v3253 = vpack.c.b16 %v3105, %v3101
        %v3254 = vpack.c.b16 %v3106, %v3102
        %v3255 = vpack.c.b16 %v3107, %v3103
        %v3256 = vpack.c.b16 %v3112, %v3108
        %v3257 = vpack.c.b16 %v3113, %v3109
        %v3258 = vpack.c.b16 %v3114, %v3110
        %v3259 = vpack.c.b16 %v3115, %v3111
        %v3260 = vpack.c.b16 %v3120, %v3116
        %v3261 = vpack.c.b16 %v3121, %v3117
        %v3262 = vpack.c.b16 %v3122, %v3118
        %v3263 = vpack.c.b16 %v3123, %v3119
        %v3264 = vpack.c.b16 %v3128, %v3124
        %v3265 = vpack.c.b16 %v3129, %v3125
        %v3266 = vpack.c.b16 %v3130, %v3126
        %v3267 = vpack.c.b16 %v3131, %v3127
        %v3268 = vpack.c.b16 %v3136, %v3132
        %v3269 = vpack.c.b16 %v3137, %v3133
        %v3270 = vpack.c.b16 %v3138, %v3134
        %v3271 = vpack.c.b16 %v3139, %v3135
        %v3272 = vpack.c.b16 %v3144, %v3140
        %v3273 = vpack.c.b16 %v3145, %v3141
        %v3274 = vpack.c.b16 %v3146, %v3142
        %v3275 = vpack.c.b16 %v3147, %v3143
        %3404 = vmatpush.bf16.msra.mxu0 %v3176
        %3405 = vmatpush.bf16.msra.mxu0 %v3172
        %3406 = vmatpush.bf16.msra.mxu0 %v3168
        %3407 = vmatpush.bf16.msra.mxu0 %v3164
        %3408 = vmatpush.bf16.msra.mxu0 %v3160
        %3409 = vmatpush.bf16.msra.mxu0 %v3156
        %3410 = vmatpush.bf16.msra.mxu0 %v3152
        %3411 = vmatpush.bf16.msra.mxu0 %v3148
        %3412 = vmatmul.bf16.gmra.mxu0 %v2594
        %v3413 = vpop.f32.mrf.mxu0
        %v3414 = vadd.f32 %v2756, %v3413
        %v3415 = vpop.f32.mrf.mxu0
        %v3416 = vadd.f32 %v2756, %v3415
        %3417 = vmatmul.bf16.gmra.mxu0 %v2598
        %v3418 = vpop.f32.mrf.mxu0
        %v3419 = vadd.f32 %v2756, %v3418
        %v3420 = vpop.f32.mrf.mxu0
        %v3421 = vadd.f32 %v2756, %v3420
        %3422 = vmatmul.bf16.gmra.mxu0 %v2602
        %v3423 = vpop.f32.mrf.mxu0
        %v3424 = vadd.f32 %v2756, %v3423
        %v3425 = vpop.f32.mrf.mxu0
        %v3426 = vadd.f32 %v2756, %v3425
        %3427 = vmatmul.bf16.gmra.mxu0 %v2606
        %v3428 = vpop.f32.mrf.mxu0
        %v3429 = vadd.f32 %v2756, %v3428
        %v3430 = vpop.f32.mrf.mxu0
        %v3431 = vadd.f32 %v2756, %v3430
        %3432 = vmatmul.bf16.gmra.mxu0 %v2610
        %v3433 = vpop.f32.mrf.mxu0
        %v3434 = vadd.f32 %v2756, %v3433
        %v3435 = vpop.f32.mrf.mxu0
        %v3436 = vadd.f32 %v2756, %v3435
        %3437 = vmatmul.bf16.gmra.mxu0 %v2614
        %v3438 = vpop.f32.mrf.mxu0
        %v3439 = vadd.f32 %v2756, %v3438
        %v3440 = vpop.f32.mrf.mxu0
        %v3441 = vadd.f32 %v2756, %v3440
        %3442 = vmatmul.bf16.gmra.mxu0 %v2618
        %v3443 = vpop.f32.mrf.mxu0
        %v3444 = vadd.f32 %v2756, %v3443
        %v3445 = vpop.f32.mrf.mxu0
        %v3446 = vadd.f32 %v2756, %v3445
        %3447 = vmatmul.bf16.gmra.mxu0 %v2622
        %v3448 = vpop.f32.mrf.mxu0
        %v3449 = vadd.f32 %v2756, %v3448
        %v3450 = vpop.f32.mrf.mxu0
        %v3451 = vadd.f32 %v2756, %v3450
        %3452 = vdwg.mxu0
        %3453 = vmatpush.bf16.msra.mxu0 %v3208
        %3454 = vmatpush.bf16.msra.mxu0 %v3204
        %3455 = vmatpush.bf16.msra.mxu0 %v3200
        %3456 = vmatpush.bf16.msra.mxu0 %v3196
        %3457 = vmatpush.bf16.msra.mxu0 %v3192
        %3458 = vmatpush.bf16.msra.mxu0 %v3188
        %3459 = vmatpush.bf16.msra.mxu0 %v3184
        %3460 = vmatpush.bf16.msra.mxu0 %v3180
        %3461 = vmatmul.bf16.gmra.mxu0 %v2595
        %v3462 = vpop.f32.mrf.mxu0
        %v3463 = vadd.f32 %v3414, %v3462
        %v3464 = vpop.f32.mrf.mxu0
        %v3465 = vadd.f32 %v3416, %v3464
        %3466 = vmatmul.bf16.gmra.mxu0 %v2599
        %v3467 = vpop.f32.mrf.mxu0
        %v3468 = vadd.f32 %v3419, %v3467
        %v3469 = vpop.f32.mrf.mxu0
        %v3470 = vadd.f32 %v3421, %v3469
        %3471 = vmatmul.bf16.gmra.mxu0 %v2603
        %v3472 = vpop.f32.mrf.mxu0
        %v3473 = vadd.f32 %v3424, %v3472
        %v3474 = vpop.f32.mrf.mxu0
        %v3475 = vadd.f32 %v3426, %v3474
        %3476 = vmatmul.bf16.gmra.mxu0 %v2607
        %v3477 = vpop.f32.mrf.mxu0
        %v3478 = vadd.f32 %v3429, %v3477
        %v3479 = vpop.f32.mrf.mxu0
        %v3480 = vadd.f32 %v3431, %v3479
        %3481 = vmatmul.bf16.gmra.mxu0 %v2611
        %v3482 = vpop.f32.mrf.mxu0
        %v3483 = vadd.f32 %v3434, %v3482
        %v3484 = vpop.f32.mrf.mxu0
        %v3485 = vadd.f32 %v3436, %v3484
        %3486 = vmatmul.bf16.gmra.mxu0 %v2615
        %v3487 = vpop.f32.mrf.mxu0
        %v3488 = vadd.f32 %v3439, %v3487
        %v3489 = vpop.f32.mrf.mxu0
        %v3490 = vadd.f32 %v3441, %v3489
        %3491 = vmatmul.bf16.gmra.mxu0 %v2619
        %v3492 = vpop.f32.mrf.mxu0
        %v3493 = vadd.f32 %v3444, %v3492
        %v3494 = vpop.f32.mrf.mxu0
        %v3495 = vadd.f32 %v3446, %v3494
        %3496 = vmatmul.bf16.gmra.mxu0 %v2623
        %v3497 = vpop.f32.mrf.mxu0
        %v3498 = vadd.f32 %v3449, %v3497
        %v3499 = vpop.f32.mrf.mxu0
        %v3500 = vadd.f32 %v3451, %v3499
        %3501 = vdwg.mxu0
        %3502 = vmatpush.bf16.msra.mxu0 %v3240
        %3503 = vmatpush.bf16.msra.mxu0 %v3236
        %3504 = vmatpush.bf16.msra.mxu0 %v3232
        %3505 = vmatpush.bf16.msra.mxu0 %v3228
        %3506 = vmatpush.bf16.msra.mxu0 %v3224
        %3507 = vmatpush.bf16.msra.mxu0 %v3220
        %3508 = vmatpush.bf16.msra.mxu0 %v3216
        %3509 = vmatpush.bf16.msra.mxu0 %v3212
        %3510 = vmatmul.bf16.gmra.mxu0 %v2596
        %v3511 = vpop.f32.mrf.mxu0
        %v3512 = vadd.f32 %v3463, %v3511
        %v3513 = vpop.f32.mrf.mxu0
        %v3514 = vadd.f32 %v3465, %v3513
        %3515 = vmatmul.bf16.gmra.mxu0 %v2600
        %v3516 = vpop.f32.mrf.mxu0
        %v3517 = vadd.f32 %v3468, %v3516
        %v3518 = vpop.f32.mrf.mxu0
        %v3519 = vadd.f32 %v3470, %v3518
        %3520 = vmatmul.bf16.gmra.mxu0 %v2604
        %v3521 = vpop.f32.mrf.mxu0
        %v3522 = vadd.f32 %v3473, %v3521
        %v3523 = vpop.f32.mrf.mxu0
        %v3524 = vadd.f32 %v3475, %v3523
        %3525 = vmatmul.bf16.gmra.mxu0 %v2608
        %v3526 = vpop.f32.mrf.mxu0
        %v3527 = vadd.f32 %v3478, %v3526
        %v3528 = vpop.f32.mrf.mxu0
        %v3529 = vadd.f32 %v3480, %v3528
        %3530 = vmatmul.bf16.gmra.mxu0 %v2612
        %v3531 = vpop.f32.mrf.mxu0
        %v3532 = vadd.f32 %v3483, %v3531
        %v3533 = vpop.f32.mrf.mxu0
        %v3534 = vadd.f32 %v3485, %v3533
        %3535 = vmatmul.bf16.gmra.mxu0 %v2616
        %v3536 = vpop.f32.mrf.mxu0
        %v3537 = vadd.f32 %v3488, %v3536
        %v3538 = vpop.f32.mrf.mxu0
        %v3539 = vadd.f32 %v3490, %v3538
        %3540 = vmatmul.bf16.gmra.mxu0 %v2620
        %v3541 = vpop.f32.mrf.mxu0
        %v3542 = vadd.f32 %v3493, %v3541
        %v3543 = vpop.f32.mrf.mxu0
        %v3544 = vadd.f32 %v3495, %v3543
        %3545 = vmatmul.bf16.gmra.mxu0 %v2624
        %v3546 = vpop.f32.mrf.mxu0
        %v3547 = vadd.f32 %v3498, %v3546
        %v3548 = vpop.f32.mrf.mxu0
        %v3549 = vadd.f32 %v3500, %v3548
        %3550 = vdwg.mxu0
        %3551 = vmatpush.bf16.msra.mxu0 %v3272
        %3552 = vmatpush.bf16.msra.mxu0 %v3268
        %3553 = vmatpush.bf16.msra.mxu0 %v3264
        %3554 = vmatpush.bf16.msra.mxu0 %v3260
        %3555 = vmatpush.bf16.msra.mxu0 %v3256
        %3556 = vmatpush.bf16.msra.mxu0 %v3252
        %3557 = vmatpush.bf16.msra.mxu0 %v3248
        %3558 = vmatpush.bf16.msra.mxu0 %v3244
        %3559 = vmatmul.bf16.gmra.mxu0 %v2597
        %v3560 = vpop.f32.mrf.mxu0
        %v3561 = vadd.f32 %v3512, %v3560
        %v3562 = vpop.f32.mrf.mxu0
        %v3563 = vadd.f32 %v3514, %v3562
        %3564 = vmatmul.bf16.gmra.mxu0 %v2601
        %v3565 = vpop.f32.mrf.mxu0
        %v3566 = vadd.f32 %v3517, %v3565
        %v3567 = vpop.f32.mrf.mxu0
        %v3568 = vadd.f32 %v3519, %v3567
        %3569 = vmatmul.bf16.gmra.mxu0 %v2605
        %v3570 = vpop.f32.mrf.mxu0
        %v3571 = vadd.f32 %v3522, %v3570
        %v3572 = vpop.f32.mrf.mxu0
        %v3573 = vadd.f32 %v3524, %v3572
        %3574 = vmatmul.bf16.gmra.mxu0 %v2609
        %v3575 = vpop.f32.mrf.mxu0
        %v3576 = vadd.f32 %v3527, %v3575
        %v3577 = vpop.f32.mrf.mxu0
        %v3578 = vadd.f32 %v3529, %v3577
        %3579 = vmatmul.bf16.gmra.mxu0 %v2613
        %v3580 = vpop.f32.mrf.mxu0
        %v3581 = vadd.f32 %v3532, %v3580
        %v3582 = vpop.f32.mrf.mxu0
        %v3583 = vadd.f32 %v3534, %v3582
        %3584 = vmatmul.bf16.gmra.mxu0 %v2617
        %v3585 = vpop.f32.mrf.mxu0
        %v3586 = vadd.f32 %v3537, %v3585
        %v3587 = vpop.f32.mrf.mxu0
        %v3588 = vadd.f32 %v3539, %v3587
        %3589 = vmatmul.bf16.gmra.mxu0 %v2621
        %v3590 = vpop.f32.mrf.mxu0
        %v3591 = vadd.f32 %v3542, %v3590
        %v3592 = vpop.f32.mrf.mxu0
        %v3593 = vadd.f32 %v3544, %v3592
        %3594 = vmatmul.bf16.gmra.mxu0 %v2625
        %v3595 = vpop.f32.mrf.mxu0
        %v3596 = vadd.f32 %v3547, %v3595
        %v3597 = vpop.f32.mrf.mxu0
        %v3598 = vadd.f32 %v3549, %v3597
        %3599 = vdwg.mxu0
        %3600 = vmatpush.bf16.msra.mxu0 %v3177
        %3601 = vmatpush.bf16.msra.mxu0 %v3173
        %3602 = vmatpush.bf16.msra.mxu0 %v3169
        %3603 = vmatpush.bf16.msra.mxu0 %v3165
        %3604 = vmatpush.bf16.msra.mxu0 %v3161
        %3605 = vmatpush.bf16.msra.mxu0 %v3157
        %3606 = vmatpush.bf16.msra.mxu0 %v3153
        %3607 = vmatpush.bf16.msra.mxu0 %v3149
        %3608 = vmatmul.bf16.gmra.mxu0 %v2594
        %v3609 = vpop.f32.mrf.mxu0
        %v3610 = vadd.f32 %v2757, %v3609
        %v3611 = vpop.f32.mrf.mxu0
        %v3612 = vadd.f32 %v2757, %v3611
        %3613 = vmatmul.bf16.gmra.mxu0 %v2598
        %v3614 = vpop.f32.mrf.mxu0
        %v3615 = vadd.f32 %v2757, %v3614
        %v3616 = vpop.f32.mrf.mxu0
        %v3617 = vadd.f32 %v2757, %v3616
        %3618 = vmatmul.bf16.gmra.mxu0 %v2602
        %v3619 = vpop.f32.mrf.mxu0
        %v3620 = vadd.f32 %v2757, %v3619
        %v3621 = vpop.f32.mrf.mxu0
        %v3622 = vadd.f32 %v2757, %v3621
        %3623 = vmatmul.bf16.gmra.mxu0 %v2606
        %v3624 = vpop.f32.mrf.mxu0
        %v3625 = vadd.f32 %v2757, %v3624
        %v3626 = vpop.f32.mrf.mxu0
        %v3627 = vadd.f32 %v2757, %v3626
        %3628 = vmatmul.bf16.gmra.mxu0 %v2610
        %v3629 = vpop.f32.mrf.mxu0
        %v3630 = vadd.f32 %v2757, %v3629
        %v3631 = vpop.f32.mrf.mxu0
        %v3632 = vadd.f32 %v2757, %v3631
        %3633 = vmatmul.bf16.gmra.mxu0 %v2614
        %v3634 = vpop.f32.mrf.mxu0
        %v3635 = vadd.f32 %v2757, %v3634
        %v3636 = vpop.f32.mrf.mxu0
        %v3637 = vadd.f32 %v2757, %v3636
        %3638 = vmatmul.bf16.gmra.mxu0 %v2618
        %v3639 = vpop.f32.mrf.mxu0
        %v3640 = vadd.f32 %v2757, %v3639
        %v3641 = vpop.f32.mrf.mxu0
        %v3642 = vadd.f32 %v2757, %v3641
        %3643 = vmatmul.bf16.gmra.mxu0 %v2622
        %v3644 = vpop.f32.mrf.mxu0
        %v3645 = vadd.f32 %v2757, %v3644
        %v3646 = vpop.f32.mrf.mxu0
        %v3647 = vadd.f32 %v2757, %v3646
        %3648 = vdwg.mxu0
        %3649 = vmatpush.bf16.msra.mxu0 %v3209
        %3650 = vmatpush.bf16.msra.mxu0 %v3205
        %3651 = vmatpush.bf16.msra.mxu0 %v3201
        %3652 = vmatpush.bf16.msra.mxu0 %v3197
        %3653 = vmatpush.bf16.msra.mxu0 %v3193
        %3654 = vmatpush.bf16.msra.mxu0 %v3189
        %3655 = vmatpush.bf16.msra.mxu0 %v3185
        %3656 = vmatpush.bf16.msra.mxu0 %v3181
        %3657 = vmatmul.bf16.gmra.mxu0 %v2595
        %v3658 = vpop.f32.mrf.mxu0
        %v3659 = vadd.f32 %v3610, %v3658
        %v3660 = vpop.f32.mrf.mxu0
        %v3661 = vadd.f32 %v3612, %v3660
        %3662 = vmatmul.bf16.gmra.mxu0 %v2599
        %v3663 = vpop.f32.mrf.mxu0
        %v3664 = vadd.f32 %v3615, %v3663
        %v3665 = vpop.f32.mrf.mxu0
        %v3666 = vadd.f32 %v3617, %v3665
        %3667 = vmatmul.bf16.gmra.mxu0 %v2603
        %v3668 = vpop.f32.mrf.mxu0
        %v3669 = vadd.f32 %v3620, %v3668
        %v3670 = vpop.f32.mrf.mxu0
        %v3671 = vadd.f32 %v3622, %v3670
        %3672 = vmatmul.bf16.gmra.mxu0 %v2607
        %v3673 = vpop.f32.mrf.mxu0
        %v3674 = vadd.f32 %v3625, %v3673
        %v3675 = vpop.f32.mrf.mxu0
        %v3676 = vadd.f32 %v3627, %v3675
        %3677 = vmatmul.bf16.gmra.mxu0 %v2611
        %v3678 = vpop.f32.mrf.mxu0
        %v3679 = vadd.f32 %v3630, %v3678
        %v3680 = vpop.f32.mrf.mxu0
        %v3681 = vadd.f32 %v3632, %v3680
        %3682 = vmatmul.bf16.gmra.mxu0 %v2615
        %v3683 = vpop.f32.mrf.mxu0
        %v3684 = vadd.f32 %v3635, %v3683
        %v3685 = vpop.f32.mrf.mxu0
        %v3686 = vadd.f32 %v3637, %v3685
        %3687 = vmatmul.bf16.gmra.mxu0 %v2619
        %v3688 = vpop.f32.mrf.mxu0
        %v3689 = vadd.f32 %v3640, %v3688
        %v3690 = vpop.f32.mrf.mxu0
        %v3691 = vadd.f32 %v3642, %v3690
        %3692 = vmatmul.bf16.gmra.mxu0 %v2623
        %v3693 = vpop.f32.mrf.mxu0
        %v3694 = vadd.f32 %v3645, %v3693
        %v3695 = vpop.f32.mrf.mxu0
        %v3696 = vadd.f32 %v3647, %v3695
        %3697 = vdwg.mxu0
        %3698 = vmatpush.bf16.msra.mxu0 %v3241
        %3699 = vmatpush.bf16.msra.mxu0 %v3237
        %3700 = vmatpush.bf16.msra.mxu0 %v3233
        %3701 = vmatpush.bf16.msra.mxu0 %v3229
        %3702 = vmatpush.bf16.msra.mxu0 %v3225
        %3703 = vmatpush.bf16.msra.mxu0 %v3221
        %3704 = vmatpush.bf16.msra.mxu0 %v3217
        %3705 = vmatpush.bf16.msra.mxu0 %v3213
        %3706 = vmatmul.bf16.gmra.mxu0 %v2596
        %v3707 = vpop.f32.mrf.mxu0
        %v3708 = vadd.f32 %v3659, %v3707
        %v3709 = vpop.f32.mrf.mxu0
        %v3710 = vadd.f32 %v3661, %v3709
        %3711 = vmatmul.bf16.gmra.mxu0 %v2600
        %v3712 = vpop.f32.mrf.mxu0
        %v3713 = vadd.f32 %v3664, %v3712
        %v3714 = vpop.f32.mrf.mxu0
        %v3715 = vadd.f32 %v3666, %v3714
        %3716 = vmatmul.bf16.gmra.mxu0 %v2604
        %v3717 = vpop.f32.mrf.mxu0
        %v3718 = vadd.f32 %v3669, %v3717
        %v3719 = vpop.f32.mrf.mxu0
        %v3720 = vadd.f32 %v3671, %v3719
        %3721 = vmatmul.bf16.gmra.mxu0 %v2608
        %v3722 = vpop.f32.mrf.mxu0
        %v3723 = vadd.f32 %v3674, %v3722
        %v3724 = vpop.f32.mrf.mxu0
        %v3725 = vadd.f32 %v3676, %v3724
        %3726 = vmatmul.bf16.gmra.mxu0 %v2612
        %v3727 = vpop.f32.mrf.mxu0
        %v3728 = vadd.f32 %v3679, %v3727
        %v3729 = vpop.f32.mrf.mxu0
        %v3730 = vadd.f32 %v3681, %v3729
        %3731 = vmatmul.bf16.gmra.mxu0 %v2616
        %v3732 = vpop.f32.mrf.mxu0
        %v3733 = vadd.f32 %v3684, %v3732
        %v3734 = vpop.f32.mrf.mxu0
        %v3735 = vadd.f32 %v3686, %v3734
        %3736 = vmatmul.bf16.gmra.mxu0 %v2620
        %v3737 = vpop.f32.mrf.mxu0
        %v3738 = vadd.f32 %v3689, %v3737
        %v3739 = vpop.f32.mrf.mxu0
        %v3740 = vadd.f32 %v3691, %v3739
        %3741 = vmatmul.bf16.gmra.mxu0 %v2624
        %v3742 = vpop.f32.mrf.mxu0
        %v3743 = vadd.f32 %v3694, %v3742
        %v3744 = vpop.f32.mrf.mxu0
        %v3745 = vadd.f32 %v3696, %v3744
        %3746 = vdwg.mxu0
        %3747 = vmatpush.bf16.msra.mxu0 %v3273
        %3748 = vmatpush.bf16.msra.mxu0 %v3269
        %3749 = vmatpush.bf16.msra.mxu0 %v3265
        %3750 = vmatpush.bf16.msra.mxu0 %v3261
        %3751 = vmatpush.bf16.msra.mxu0 %v3257
        %3752 = vmatpush.bf16.msra.mxu0 %v3253
        %3753 = vmatpush.bf16.msra.mxu0 %v3249
        %3754 = vmatpush.bf16.msra.mxu0 %v3245
        %3755 = vmatmul.bf16.gmra.mxu0 %v2597
        %v3756 = vpop.f32.mrf.mxu0
        %v3757 = vadd.f32 %v3708, %v3756
        %v3758 = vpop.f32.mrf.mxu0
        %v3759 = vadd.f32 %v3710, %v3758
        %3760 = vmatmul.bf16.gmra.mxu0 %v2601
        %v3761 = vpop.f32.mrf.mxu0
        %v3762 = vadd.f32 %v3713, %v3761
        %v3763 = vpop.f32.mrf.mxu0
        %v3764 = vadd.f32 %v3715, %v3763
        %3765 = vmatmul.bf16.gmra.mxu0 %v2605
        %v3766 = vpop.f32.mrf.mxu0
        %v3767 = vadd.f32 %v3718, %v3766
        %v3768 = vpop.f32.mrf.mxu0
        %v3769 = vadd.f32 %v3720, %v3768
        %3770 = vmatmul.bf16.gmra.mxu0 %v2609
        %v3771 = vpop.f32.mrf.mxu0
        %v3772 = vadd.f32 %v3723, %v3771
        %v3773 = vpop.f32.mrf.mxu0
        %v3774 = vadd.f32 %v3725, %v3773
        %3775 = vmatmul.bf16.gmra.mxu0 %v2613
        %v3776 = vpop.f32.mrf.mxu0
        %v3777 = vadd.f32 %v3728, %v3776
        %v3778 = vpop.f32.mrf.mxu0
        %v3779 = vadd.f32 %v3730, %v3778
        %3780 = vmatmul.bf16.gmra.mxu0 %v2617
        %v3781 = vpop.f32.mrf.mxu0
        %v3782 = vadd.f32 %v3733, %v3781
        %v3783 = vpop.f32.mrf.mxu0
        %v3784 = vadd.f32 %v3735, %v3783
        %3785 = vmatmul.bf16.gmra.mxu0 %v2621
        %v3786 = vpop.f32.mrf.mxu0
        %v3787 = vadd.f32 %v3738, %v3786
        %v3788 = vpop.f32.mrf.mxu0
        %v3789 = vadd.f32 %v3740, %v3788
        %3790 = vmatmul.bf16.gmra.mxu0 %v2625
        %v3791 = vpop.f32.mrf.mxu0
        %v3792 = vadd.f32 %v3743, %v3791
        %v3793 = vpop.f32.mrf.mxu0
        %v3794 = vadd.f32 %v3745, %v3793
        %3795 = vdwg.mxu0
        %3796 = vmatpush.bf16.msra.mxu0 %v3178
        %3797 = vmatpush.bf16.msra.mxu0 %v3174
        %3798 = vmatpush.bf16.msra.mxu0 %v3170
        %3799 = vmatpush.bf16.msra.mxu0 %v3166
        %3800 = vmatpush.bf16.msra.mxu0 %v3162
        %3801 = vmatpush.bf16.msra.mxu0 %v3158
        %3802 = vmatpush.bf16.msra.mxu0 %v3154
        %3803 = vmatpush.bf16.msra.mxu0 %v3150
        %3804 = vmatmul.bf16.gmra.mxu0 %v2594
        %v3805 = vpop.f32.mrf.mxu0
        %v3806 = vadd.f32 %v2758, %v3805
        %v3807 = vpop.f32.mrf.mxu0
        %v3808 = vadd.f32 %v2758, %v3807
        %3809 = vmatmul.bf16.gmra.mxu0 %v2598
        %v3810 = vpop.f32.mrf.mxu0
        %v3811 = vadd.f32 %v2758, %v3810
        %v3812 = vpop.f32.mrf.mxu0
        %v3813 = vadd.f32 %v2758, %v3812
        %3814 = vmatmul.bf16.gmra.mxu0 %v2602
        %v3815 = vpop.f32.mrf.mxu0
        %v3816 = vadd.f32 %v2758, %v3815
        %v3817 = vpop.f32.mrf.mxu0
        %v3818 = vadd.f32 %v2758, %v3817
        %3819 = vmatmul.bf16.gmra.mxu0 %v2606
        %v3820 = vpop.f32.mrf.mxu0
        %v3821 = vadd.f32 %v2758, %v3820
        %v3822 = vpop.f32.mrf.mxu0
        %v3823 = vadd.f32 %v2758, %v3822
        %3824 = vmatmul.bf16.gmra.mxu0 %v2610
        %v3825 = vpop.f32.mrf.mxu0
        %v3826 = vadd.f32 %v2758, %v3825
        %v3827 = vpop.f32.mrf.mxu0
        %v3828 = vadd.f32 %v2758, %v3827
        %3829 = vmatmul.bf16.gmra.mxu0 %v2614
        %v3830 = vpop.f32.mrf.mxu0
        %v3831 = vadd.f32 %v2758, %v3830
        %v3832 = vpop.f32.mrf.mxu0
        %v3833 = vadd.f32 %v2758, %v3832
        %3834 = vmatmul.bf16.gmra.mxu0 %v2618
        %v3835 = vpop.f32.mrf.mxu0
        %v3836 = vadd.f32 %v2758, %v3835
        %v3837 = vpop.f32.mrf.mxu0
        %v3838 = vadd.f32 %v2758, %v3837
        %3839 = vmatmul.bf16.gmra.mxu0 %v2622
        %v3840 = vpop.f32.mrf.mxu0
        %v3841 = vadd.f32 %v2758, %v3840
        %v3842 = vpop.f32.mrf.mxu0
        %v3843 = vadd.f32 %v2758, %v3842
        %3844 = vdwg.mxu0
        %3845 = vmatpush.bf16.msra.mxu0 %v3210
        %3846 = vmatpush.bf16.msra.mxu0 %v3206
        %3847 = vmatpush.bf16.msra.mxu0 %v3202
        %3848 = vmatpush.bf16.msra.mxu0 %v3198
        %3849 = vmatpush.bf16.msra.mxu0 %v3194
        %3850 = vmatpush.bf16.msra.mxu0 %v3190
        %3851 = vmatpush.bf16.msra.mxu0 %v3186
        %3852 = vmatpush.bf16.msra.mxu0 %v3182
        %3853 = vmatmul.bf16.gmra.mxu0 %v2595
        %v3854 = vpop.f32.mrf.mxu0
        %v3855 = vadd.f32 %v3806, %v3854
        %v3856 = vpop.f32.mrf.mxu0
        %v3857 = vadd.f32 %v3808, %v3856
        %3858 = vmatmul.bf16.gmra.mxu0 %v2599
        %v3859 = vpop.f32.mrf.mxu0
        %v3860 = vadd.f32 %v3811, %v3859
        %v3861 = vpop.f32.mrf.mxu0
        %v3862 = vadd.f32 %v3813, %v3861
        %3863 = vmatmul.bf16.gmra.mxu0 %v2603
        %v3864 = vpop.f32.mrf.mxu0
        %v3865 = vadd.f32 %v3816, %v3864
        %v3866 = vpop.f32.mrf.mxu0
        %v3867 = vadd.f32 %v3818, %v3866
        %3868 = vmatmul.bf16.gmra.mxu0 %v2607
        %v3869 = vpop.f32.mrf.mxu0
        %v3870 = vadd.f32 %v3821, %v3869
        %v3871 = vpop.f32.mrf.mxu0
        %v3872 = vadd.f32 %v3823, %v3871
        %3873 = vmatmul.bf16.gmra.mxu0 %v2611
        %v3874 = vpop.f32.mrf.mxu0
        %v3875 = vadd.f32 %v3826, %v3874
        %v3876 = vpop.f32.mrf.mxu0
        %v3877 = vadd.f32 %v3828, %v3876
        %3878 = vmatmul.bf16.gmra.mxu0 %v2615
        %v3879 = vpop.f32.mrf.mxu0
        %v3880 = vadd.f32 %v3831, %v3879
        %v3881 = vpop.f32.mrf.mxu0
        %v3882 = vadd.f32 %v3833, %v3881
        %3883 = vmatmul.bf16.gmra.mxu0 %v2619
        %v3884 = vpop.f32.mrf.mxu0
        %v3885 = vadd.f32 %v3836, %v3884
        %v3886 = vpop.f32.mrf.mxu0
        %v3887 = vadd.f32 %v3838, %v3886
        %3888 = vmatmul.bf16.gmra.mxu0 %v2623
        %v3889 = vpop.f32.mrf.mxu0
        %v3890 = vadd.f32 %v3841, %v3889
        %v3891 = vpop.f32.mrf.mxu0
        %v3892 = vadd.f32 %v3843, %v3891
        %3893 = vdwg.mxu0
        %3894 = vmatpush.bf16.msra.mxu0 %v3242
        %3895 = vmatpush.bf16.msra.mxu0 %v3238
        %3896 = vmatpush.bf16.msra.mxu0 %v3234
        %3897 = vmatpush.bf16.msra.mxu0 %v3230
        %3898 = vmatpush.bf16.msra.mxu0 %v3226
        %3899 = vmatpush.bf16.msra.mxu0 %v3222
        %3900 = vmatpush.bf16.msra.mxu0 %v3218
        %3901 = vmatpush.bf16.msra.mxu0 %v3214
        %3902 = vmatmul.bf16.gmra.mxu0 %v2596
        %v3903 = vpop.f32.mrf.mxu0
        %v3904 = vadd.f32 %v3855, %v3903
        %v3905 = vpop.f32.mrf.mxu0
        %v3906 = vadd.f32 %v3857, %v3905
        %3907 = vmatmul.bf16.gmra.mxu0 %v2600
        %v3908 = vpop.f32.mrf.mxu0
        %v3909 = vadd.f32 %v3860, %v3908
        %v3910 = vpop.f32.mrf.mxu0
        %v3911 = vadd.f32 %v3862, %v3910
        %3912 = vmatmul.bf16.gmra.mxu0 %v2604
        %v3913 = vpop.f32.mrf.mxu0
        %v3914 = vadd.f32 %v3865, %v3913
        %v3915 = vpop.f32.mrf.mxu0
        %v3916 = vadd.f32 %v3867, %v3915
        %3917 = vmatmul.bf16.gmra.mxu0 %v2608
        %v3918 = vpop.f32.mrf.mxu0
        %v3919 = vadd.f32 %v3870, %v3918
        %v3920 = vpop.f32.mrf.mxu0
        %v3921 = vadd.f32 %v3872, %v3920
        %3922 = vmatmul.bf16.gmra.mxu0 %v2612
        %v3923 = vpop.f32.mrf.mxu0
        %v3924 = vadd.f32 %v3875, %v3923
        %v3925 = vpop.f32.mrf.mxu0
        %v3926 = vadd.f32 %v3877, %v3925
        %3927 = vmatmul.bf16.gmra.mxu0 %v2616
        %v3928 = vpop.f32.mrf.mxu0
        %v3929 = vadd.f32 %v3880, %v3928
        %v3930 = vpop.f32.mrf.mxu0
        %v3931 = vadd.f32 %v3882, %v3930
        %3932 = vmatmul.bf16.gmra.mxu0 %v2620
        %v3933 = vpop.f32.mrf.mxu0
        %v3934 = vadd.f32 %v3885, %v3933
        %v3935 = vpop.f32.mrf.mxu0
        %v3936 = vadd.f32 %v3887, %v3935
        %3937 = vmatmul.bf16.gmra.mxu0 %v2624
        %v3938 = vpop.f32.mrf.mxu0
        %v3939 = vadd.f32 %v3890, %v3938
        %v3940 = vpop.f32.mrf.mxu0
        %v3941 = vadd.f32 %v3892, %v3940
        %3942 = vdwg.mxu0
        %3943 = vmatpush.bf16.msra.mxu0 %v3274
        %3944 = vmatpush.bf16.msra.mxu0 %v3270
        %3945 = vmatpush.bf16.msra.mxu0 %v3266
        %3946 = vmatpush.bf16.msra.mxu0 %v3262
        %3947 = vmatpush.bf16.msra.mxu0 %v3258
        %3948 = vmatpush.bf16.msra.mxu0 %v3254
        %3949 = vmatpush.bf16.msra.mxu0 %v3250
        %3950 = vmatpush.bf16.msra.mxu0 %v3246
        %3951 = vmatmul.bf16.gmra.mxu0 %v2597
        %v3952 = vpop.f32.mrf.mxu0
        %v3953 = vadd.f32 %v3904, %v3952
        %v3954 = vpop.f32.mrf.mxu0
        %v3955 = vadd.f32 %v3906, %v3954
        %3956 = vmatmul.bf16.gmra.mxu0 %v2601
        %v3957 = vpop.f32.mrf.mxu0
        %v3958 = vadd.f32 %v3909, %v3957
        %v3959 = vpop.f32.mrf.mxu0
        %v3960 = vadd.f32 %v3911, %v3959
        %3961 = vmatmul.bf16.gmra.mxu0 %v2605
        %v3962 = vpop.f32.mrf.mxu0
        %v3963 = vadd.f32 %v3914, %v3962
        %v3964 = vpop.f32.mrf.mxu0
        %v3965 = vadd.f32 %v3916, %v3964
        %3966 = vmatmul.bf16.gmra.mxu0 %v2609
        %v3967 = vpop.f32.mrf.mxu0
        %v3968 = vadd.f32 %v3919, %v3967
        %v3969 = vpop.f32.mrf.mxu0
        %v3970 = vadd.f32 %v3921, %v3969
        %3971 = vmatmul.bf16.gmra.mxu0 %v2613
        %v3972 = vpop.f32.mrf.mxu0
        %v3973 = vadd.f32 %v3924, %v3972
        %v3974 = vpop.f32.mrf.mxu0
        %v3975 = vadd.f32 %v3926, %v3974
        %3976 = vmatmul.bf16.gmra.mxu0 %v2617
        %v3977 = vpop.f32.mrf.mxu0
        %v3978 = vadd.f32 %v3929, %v3977
        %v3979 = vpop.f32.mrf.mxu0
        %v3980 = vadd.f32 %v3931, %v3979
        %3981 = vmatmul.bf16.gmra.mxu0 %v2621
        %v3982 = vpop.f32.mrf.mxu0
        %v3983 = vadd.f32 %v3934, %v3982
        %v3984 = vpop.f32.mrf.mxu0
        %v3985 = vadd.f32 %v3936, %v3984
        %3986 = vmatmul.bf16.gmra.mxu0 %v2625
        %v3987 = vpop.f32.mrf.mxu0
        %v3988 = vadd.f32 %v3939, %v3987
        %v3989 = vpop.f32.mrf.mxu0
        %v3990 = vadd.f32 %v3941, %v3989
        %3991 = vdwg.mxu0
        %3992 = vmatpush.bf16.msra.mxu0 %v3179
        %3993 = vmatpush.bf16.msra.mxu0 %v3175
        %3994 = vmatpush.bf16.msra.mxu0 %v3171
        %3995 = vmatpush.bf16.msra.mxu0 %v3167
        %3996 = vmatpush.bf16.msra.mxu0 %v3163
        %3997 = vmatpush.bf16.msra.mxu0 %v3159
        %3998 = vmatpush.bf16.msra.mxu0 %v3155
        %3999 = vmatpush.bf16.msra.mxu0 %v3151
        %4000 = vmatmul.bf16.gmra.mxu0 %v2594
        %v4001 = vpop.f32.mrf.mxu0
        %v4002 = vadd.f32 %v2759, %v4001
        %v4003 = vpop.f32.mrf.mxu0
        %v4004 = vadd.f32 %v2759, %v4003
        %4005 = vmatmul.bf16.gmra.mxu0 %v2598
        %v4006 = vpop.f32.mrf.mxu0
        %v4007 = vadd.f32 %v2759, %v4006
        %v4008 = vpop.f32.mrf.mxu0
        %v4009 = vadd.f32 %v2759, %v4008
        %4010 = vmatmul.bf16.gmra.mxu0 %v2602
        %v4011 = vpop.f32.mrf.mxu0
        %v4012 = vadd.f32 %v2759, %v4011
        %v4013 = vpop.f32.mrf.mxu0
        %v4014 = vadd.f32 %v2759, %v4013
        %4015 = vmatmul.bf16.gmra.mxu0 %v2606
        %v4016 = vpop.f32.mrf.mxu0
        %v4017 = vadd.f32 %v2759, %v4016
        %v4018 = vpop.f32.mrf.mxu0
        %v4019 = vadd.f32 %v2759, %v4018
        %4020 = vmatmul.bf16.gmra.mxu0 %v2610
        %v4021 = vpop.f32.mrf.mxu0
        %v4022 = vadd.f32 %v2759, %v4021
        %v4023 = vpop.f32.mrf.mxu0
        %v4024 = vadd.f32 %v2759, %v4023
        %4025 = vmatmul.bf16.gmra.mxu0 %v2614
        %v4026 = vpop.f32.mrf.mxu0
        %v4027 = vadd.f32 %v2759, %v4026
        %v4028 = vpop.f32.mrf.mxu0
        %v4029 = vadd.f32 %v2759, %v4028
        %4030 = vmatmul.bf16.gmra.mxu0 %v2618
        %v4031 = vpop.f32.mrf.mxu0
        %v4032 = vadd.f32 %v2759, %v4031
        %v4033 = vpop.f32.mrf.mxu0
        %v4034 = vadd.f32 %v2759, %v4033
        %4035 = vmatmul.bf16.gmra.mxu0 %v2622
        %v4036 = vpop.f32.mrf.mxu0
        %v4037 = vadd.f32 %v2759, %v4036
        %v4038 = vpop.f32.mrf.mxu0
        %v4039 = vadd.f32 %v2759, %v4038
        %4040 = vdwg.mxu0
        %4041 = vmatpush.bf16.msra.mxu0 %v3211
        %4042 = vmatpush.bf16.msra.mxu0 %v3207
        %4043 = vmatpush.bf16.msra.mxu0 %v3203
        %4044 = vmatpush.bf16.msra.mxu0 %v3199
        %4045 = vmatpush.bf16.msra.mxu0 %v3195
        %4046 = vmatpush.bf16.msra.mxu0 %v3191
        %4047 = vmatpush.bf16.msra.mxu0 %v3187
        %4048 = vmatpush.bf16.msra.mxu0 %v3183
        %4049 = vmatmul.bf16.gmra.mxu0 %v2595
        %v4050 = vpop.f32.mrf.mxu0
        %v4051 = vadd.f32 %v4002, %v4050
        %v4052 = vpop.f32.mrf.mxu0
        %v4053 = vadd.f32 %v4004, %v4052
        %4054 = vmatmul.bf16.gmra.mxu0 %v2599
        %v4055 = vpop.f32.mrf.mxu0
        %v4056 = vadd.f32 %v4007, %v4055
        %v4057 = vpop.f32.mrf.mxu0
        %v4058 = vadd.f32 %v4009, %v4057
        %4059 = vmatmul.bf16.gmra.mxu0 %v2603
        %v4060 = vpop.f32.mrf.mxu0
        %v4061 = vadd.f32 %v4012, %v4060
        %v4062 = vpop.f32.mrf.mxu0
        %v4063 = vadd.f32 %v4014, %v4062
        %4064 = vmatmul.bf16.gmra.mxu0 %v2607
        %v4065 = vpop.f32.mrf.mxu0
        %v4066 = vadd.f32 %v4017, %v4065
        %v4067 = vpop.f32.mrf.mxu0
        %v4068 = vadd.f32 %v4019, %v4067
        %4069 = vmatmul.bf16.gmra.mxu0 %v2611
        %v4070 = vpop.f32.mrf.mxu0
        %v4071 = vadd.f32 %v4022, %v4070
        %v4072 = vpop.f32.mrf.mxu0
        %v4073 = vadd.f32 %v4024, %v4072
        %4074 = vmatmul.bf16.gmra.mxu0 %v2615
        %v4075 = vpop.f32.mrf.mxu0
        %v4076 = vadd.f32 %v4027, %v4075
        %v4077 = vpop.f32.mrf.mxu0
        %v4078 = vadd.f32 %v4029, %v4077
        %4079 = vmatmul.bf16.gmra.mxu0 %v2619
        %v4080 = vpop.f32.mrf.mxu0
        %v4081 = vadd.f32 %v4032, %v4080
        %v4082 = vpop.f32.mrf.mxu0
        %v4083 = vadd.f32 %v4034, %v4082
        %4084 = vmatmul.bf16.gmra.mxu0 %v2623
        %v4085 = vpop.f32.mrf.mxu0
        %v4086 = vadd.f32 %v4037, %v4085
        %v4087 = vpop.f32.mrf.mxu0
        %v4088 = vadd.f32 %v4039, %v4087
        %4089 = vdwg.mxu0
        %4090 = vmatpush.bf16.msra.mxu0 %v3243
        %4091 = vmatpush.bf16.msra.mxu0 %v3239
        %4092 = vmatpush.bf16.msra.mxu0 %v3235
        %4093 = vmatpush.bf16.msra.mxu0 %v3231
        %4094 = vmatpush.bf16.msra.mxu0 %v3227
        %4095 = vmatpush.bf16.msra.mxu0 %v3223
        %4096 = vmatpush.bf16.msra.mxu0 %v3219
        %4097 = vmatpush.bf16.msra.mxu0 %v3215
        %4098 = vmatmul.bf16.gmra.mxu0 %v2596
        %v4099 = vpop.f32.mrf.mxu0
        %v4100 = vadd.f32 %v4051, %v4099
        %v4101 = vpop.f32.mrf.mxu0
        %v4102 = vadd.f32 %v4053, %v4101
        %4103 = vmatmul.bf16.gmra.mxu0 %v2600
        %v4104 = vpop.f32.mrf.mxu0
        %v4105 = vadd.f32 %v4056, %v4104
        %v4106 = vpop.f32.mrf.mxu0
        %v4107 = vadd.f32 %v4058, %v4106
        %4108 = vmatmul.bf16.gmra.mxu0 %v2604
        %v4109 = vpop.f32.mrf.mxu0
        %v4110 = vadd.f32 %v4061, %v4109
        %v4111 = vpop.f32.mrf.mxu0
        %v4112 = vadd.f32 %v4063, %v4111
        %4113 = vmatmul.bf16.gmra.mxu0 %v2608
        %v4114 = vpop.f32.mrf.mxu0
        %v4115 = vadd.f32 %v4066, %v4114
        %v4116 = vpop.f32.mrf.mxu0
        %v4117 = vadd.f32 %v4068, %v4116
        %4118 = vmatmul.bf16.gmra.mxu0 %v2612
        %v4119 = vpop.f32.mrf.mxu0
        %v4120 = vadd.f32 %v4071, %v4119
        %v4121 = vpop.f32.mrf.mxu0
        %v4122 = vadd.f32 %v4073, %v4121
        %4123 = vmatmul.bf16.gmra.mxu0 %v2616
        %v4124 = vpop.f32.mrf.mxu0
        %v4125 = vadd.f32 %v4076, %v4124
        %v4126 = vpop.f32.mrf.mxu0
        %v4127 = vadd.f32 %v4078, %v4126
        %4128 = vmatmul.bf16.gmra.mxu0 %v2620
        %v4129 = vpop.f32.mrf.mxu0
        %v4130 = vadd.f32 %v4081, %v4129
        %v4131 = vpop.f32.mrf.mxu0
        %v4132 = vadd.f32 %v4083, %v4131
        %4133 = vmatmul.bf16.gmra.mxu0 %v2624
        %v4134 = vpop.f32.mrf.mxu0
        %v4135 = vadd.f32 %v4086, %v4134
        %v4136 = vpop.f32.mrf.mxu0
        %v4137 = vadd.f32 %v4088, %v4136
        %4138 = vdwg.mxu0
        %4139 = vmatpush.bf16.msra.mxu0 %v3275
        %4140 = vmatpush.bf16.msra.mxu0 %v3271
        %4141 = vmatpush.bf16.msra.mxu0 %v3267
        %4142 = vmatpush.bf16.msra.mxu0 %v3263
        %4143 = vmatpush.bf16.msra.mxu0 %v3259
        %4144 = vmatpush.bf16.msra.mxu0 %v3255
        %4145 = vmatpush.bf16.msra.mxu0 %v3251
        %4146 = vmatpush.bf16.msra.mxu0 %v3247
        %4147 = vmatmul.bf16.gmra.mxu0 %v2597
        %v4148 = vpop.f32.mrf.mxu0
        %v4149 = vadd.f32 %v4100, %v4148
        %v4150 = vpop.f32.mrf.mxu0
        %v4151 = vadd.f32 %v4102, %v4150
        %4152 = vmatmul.bf16.gmra.mxu0 %v2601
        %v4153 = vpop.f32.mrf.mxu0
        %v4154 = vadd.f32 %v4105, %v4153
        %v4155 = vpop.f32.mrf.mxu0
        %v4156 = vadd.f32 %v4107, %v4155
        %4157 = vmatmul.bf16.gmra.mxu0 %v2605
        %v4158 = vpop.f32.mrf.mxu0
        %v4159 = vadd.f32 %v4110, %v4158
        %v4160 = vpop.f32.mrf.mxu0
        %v4161 = vadd.f32 %v4112, %v4160
        %4162 = vmatmul.bf16.gmra.mxu0 %v2609
        %v4163 = vpop.f32.mrf.mxu0
        %v4164 = vadd.f32 %v4115, %v4163
        %v4165 = vpop.f32.mrf.mxu0
        %v4166 = vadd.f32 %v4117, %v4165
        %4167 = vmatmul.bf16.gmra.mxu0 %v2613
        %v4168 = vpop.f32.mrf.mxu0
        %v4169 = vadd.f32 %v4120, %v4168
        %v4170 = vpop.f32.mrf.mxu0
        %v4171 = vadd.f32 %v4122, %v4170
        %4172 = vmatmul.bf16.gmra.mxu0 %v2617
        %v4173 = vpop.f32.mrf.mxu0
        %v4174 = vadd.f32 %v4125, %v4173
        %v4175 = vpop.f32.mrf.mxu0
        %v4176 = vadd.f32 %v4127, %v4175
        %4177 = vmatmul.bf16.gmra.mxu0 %v2621
        %v4178 = vpop.f32.mrf.mxu0
        %v4179 = vadd.f32 %v4130, %v4178
        %v4180 = vpop.f32.mrf.mxu0
        %v4181 = vadd.f32 %v4132, %v4180
        %4182 = vmatmul.bf16.gmra.mxu0 %v2625
        %v4183 = vpop.f32.mrf.mxu0
        %v4184 = vadd.f32 %v4135, %v4183
        %v4185 = vpop.f32.mrf.mxu0
        %v4186 = vadd.f32 %v4137, %v4185
        %4187 = vdwg.mxu0
        %v4188 = vmax.f32 %v3561, 0.0
        %v4189 = vmax.f32 %v3757, 0.0
        %v4190 = vmax.f32 %v3953, 0.0
        %v4191 = vmax.f32 %v4149, 0.0
        %v4192 = vmax.f32 %v3563, 0.0
        %v4193 = vmax.f32 %v3759, 0.0
        %v4194 = vmax.f32 %v3955, 0.0
        %v4195 = vmax.f32 %v4151, 0.0
        %v4196 = vmax.f32 %v3566, 0.0
        %v4197 = vmax.f32 %v3762, 0.0
        %v4198 = vmax.f32 %v3958, 0.0
        %v4199 = vmax.f32 %v4154, 0.0
        %v4200 = vmax.f32 %v3568, 0.0
        %v4201 = vmax.f32 %v3764, 0.0
        %v4202 = vmax.f32 %v3960, 0.0
        %v4203 = vmax.f32 %v4156, 0.0
        %v4204 = vmax.f32 %v3571, 0.0
        %v4205 = vmax.f32 %v3767, 0.0
        %v4206 = vmax.f32 %v3963, 0.0
        %v4207 = vmax.f32 %v4159, 0.0
        %v4208 = vmax.f32 %v3573, 0.0
        %v4209 = vmax.f32 %v3769, 0.0
        %v4210 = vmax.f32 %v3965, 0.0
        %v4211 = vmax.f32 %v4161, 0.0
        %v4212 = vmax.f32 %v3576, 0.0
        %v4213 = vmax.f32 %v3772, 0.0
        %v4214 = vmax.f32 %v3968, 0.0
        %v4215 = vmax.f32 %v4164, 0.0
        %v4216 = vmax.f32 %v3578, 0.0
        %v4217 = vmax.f32 %v3774, 0.0
        %v4218 = vmax.f32 %v3970, 0.0
        %v4219 = vmax.f32 %v4166, 0.0
        %v4220 = vmax.f32 %v3581, 0.0
        %v4221 = vmax.f32 %v3777, 0.0
        %v4222 = vmax.f32 %v3973, 0.0
        %v4223 = vmax.f32 %v4169, 0.0
        %v4224 = vmax.f32 %v3583, 0.0
        %v4225 = vmax.f32 %v3779, 0.0
        %v4226 = vmax.f32 %v3975, 0.0
        %v4227 = vmax.f32 %v4171, 0.0
        %v4228 = vmax.f32 %v3586, 0.0
        %v4229 = vmax.f32 %v3782, 0.0
        %v4230 = vmax.f32 %v3978, 0.0
        %v4231 = vmax.f32 %v4174, 0.0
        %v4232 = vmax.f32 %v3588, 0.0
        %v4233 = vmax.f32 %v3784, 0.0
        %v4234 = vmax.f32 %v3980, 0.0
        %v4235 = vmax.f32 %v4176, 0.0
        %v4236 = vmax.f32 %v3591, 0.0
        %v4237 = vmax.f32 %v3787, 0.0
        %v4238 = vmax.f32 %v3983, 0.0
        %v4239 = vmax.f32 %v4179, 0.0
        %v4240 = vmax.f32 %v3593, 0.0
        %v4241 = vmax.f32 %v3789, 0.0
        %v4242 = vmax.f32 %v3985, 0.0
        %v4243 = vmax.f32 %v4181, 0.0
        %v4244 = vmax.f32 %v3596, 0.0
        %v4245 = vmax.f32 %v3792, 0.0
        %v4246 = vmax.f32 %v3988, 0.0
        %v4247 = vmax.f32 %v4184, 0.0
        %v4248 = vmax.f32 %v3598, 0.0
        %v4249 = vmax.f32 %v3794, 0.0
        %v4250 = vmax.f32 %v3990, 0.0
        %v4251 = vmax.f32 %v4186, 0.0
        %v4252 = vpack.c.bf16 %v4192, %v4188
        %v4253 = vpack.c.bf16 %v4193, %v4189
        %v4254 = vpack.c.bf16 %v4194, %v4190
        %v4255 = vpack.c.bf16 %v4195, %v4191
        %v4256 = vpack.c.bf16 %v4200, %v4196
        %v4257 = vpack.c.bf16 %v4201, %v4197
        %v4258 = vpack.c.bf16 %v4202, %v4198
        %v4259 = vpack.c.bf16 %v4203, %v4199
        %v4260 = vpack.c.bf16 %v4208, %v4204
        %v4261 = vpack.c.bf16 %v4209, %v4205
        %v4262 = vpack.c.bf16 %v4210, %v4206
        %v4263 = vpack.c.bf16 %v4211, %v4207
        %v4264 = vpack.c.bf16 %v4216, %v4212
        %v4265 = vpack.c.bf16 %v4217, %v4213
        %v4266 = vpack.c.bf16 %v4218, %v4214
        %v4267 = vpack.c.bf16 %v4219, %v4215
        %v4268 = vpack.c.bf16 %v4224, %v4220
        %v4269 = vpack.c.bf16 %v4225, %v4221
        %v4270 = vpack.c.bf16 %v4226, %v4222
        %v4271 = vpack.c.bf16 %v4227, %v4223
        %v4272 = vpack.c.bf16 %v4232, %v4228
        %v4273 = vpack.c.bf16 %v4233, %v4229
        %v4274 = vpack.c.bf16 %v4234, %v4230
        %v4275 = vpack.c.bf16 %v4235, %v4231
        %v4276 = vpack.c.bf16 %v4240, %v4236
        %v4277 = vpack.c.bf16 %v4241, %v4237
        %v4278 = vpack.c.bf16 %v4242, %v4238
        %v4279 = vpack.c.bf16 %v4243, %v4239
        %v4280 = vpack.c.bf16 %v4248, %v4244
        %v4281 = vpack.c.bf16 %v4249, %v4245
        %v4282 = vpack.c.bf16 %v4250, %v4246
        %v4283 = vpack.c.bf16 %v4251, %v4247
        %v4284 = vld [vmem:[#allocation13] sm:$0xf]
        %v4285 = vld [vmem:[#allocation13 + $0x4] sm:$0xf]
        %v4286 = vld [vmem:[#allocation13 + $0x8] sm:$0xf]
        %v4287 = vld [vmem:[#allocation13 + $0xc] sm:$0xf]
        %v4288 = vld [vmem:[#allocation13 + $0x10] sm:$0xf]
        %v4289 = vld [vmem:[#allocation13 + $0x14] sm:$0xf]
        %v4290 = vld [vmem:[#allocation13 + $0x18] sm:$0xf]
        %v4291 = vld [vmem:[#allocation13 + $0x1c] sm:$0xf]
        %v4292 = vld [vmem:[#allocation13 + $0x20] sm:$0xf]
        %v4293 = vld [vmem:[#allocation13 + $0x24] sm:$0xf]
        %v4294 = vld [vmem:[#allocation13 + $0x28] sm:$0xf]
        %v4295 = vld [vmem:[#allocation13 + $0x2c] sm:$0xf]
        %v4296 = vld [vmem:[#allocation13 + $0x30] sm:$0xf]
        %v4297 = vld [vmem:[#allocation13 + $0x34] sm:$0xf]
        %v4298 = vld [vmem:[#allocation13 + $0x38] sm:$0xf]
        %v4299 = vld [vmem:[#allocation13 + $0x3c] sm:$0xf]
        %v4300 = vld [vmem:[#allocation13 + $0x40] sm:$0xf]
        %v4301 = vld [vmem:[#allocation13 + $0x44] sm:$0xf]
        %v4302 = vld [vmem:[#allocation13 + $0x48] sm:$0xf]
        %v4303 = vld [vmem:[#allocation13 + $0x4c] sm:$0xf]
        %v4304 = vld [vmem:[#allocation13 + $0x50] sm:$0xf]
        %v4305 = vld [vmem:[#allocation13 + $0x54] sm:$0xf]
        %v4306 = vld [vmem:[#allocation13 + $0x58] sm:$0xf]
        %v4307 = vld [vmem:[#allocation13 + $0x5c] sm:$0xf]
        %v4308 = vld [vmem:[#allocation13 + $0x60] sm:$0xf]
        %v4309 = vld [vmem:[#allocation13 + $0x64] sm:$0xf]
        %v4310 = vld [vmem:[#allocation13 + $0x68] sm:$0xf]
        %v4311 = vld [vmem:[#allocation13 + $0x6c] sm:$0xf]
        %v4312 = vld [vmem:[#allocation13 + $0x70] sm:$0xf]
        %v4313 = vld [vmem:[#allocation13 + $0x74] sm:$0xf]
        %v4314 = vld [vmem:[#allocation13 + $0x78] sm:$0xf]
        %v4315 = vld [vmem:[#allocation13 + $0x7c] sm:$0xf]
        %v4316 = vld [vmem:[#allocation13 + $0x80] sm:$0xf]
        %v4317 = vld [vmem:[#allocation13 + $0x84] sm:$0xf]
        %v4318 = vld [vmem:[#allocation13 + $0x88] sm:$0xf]
        %v4319 = vld [vmem:[#allocation13 + $0x8c] sm:$0xf]
        %v4320 = vld [vmem:[#allocation13 + $0x90] sm:$0xf]
        %v4321 = vld [vmem:[#allocation13 + $0x94] sm:$0xf]
        %v4322 = vld [vmem:[#allocation13 + $0x98] sm:$0xf]
        %v4323 = vld [vmem:[#allocation13 + $0x9c] sm:$0xf]
        %v4324 = vld [vmem:[#allocation13 + $0xa0] sm:$0xf]
        %v4325 = vld [vmem:[#allocation13 + $0xa4] sm:$0xf]
        %v4326 = vld [vmem:[#allocation13 + $0xa8] sm:$0xf]
        %v4327 = vld [vmem:[#allocation13 + $0xac] sm:$0xf]
        %v4328 = vld [vmem:[#allocation13 + $0xb0] sm:$0xf]
        %v4329 = vld [vmem:[#allocation13 + $0xb4] sm:$0xf]
        %v4330 = vld [vmem:[#allocation13 + $0xb8] sm:$0xf]
        %v4331 = vld [vmem:[#allocation13 + $0xbc] sm:$0xf]
        %v4332 = vld [vmem:[#allocation13 + $0xc0] sm:$0xf]
        %v4333 = vld [vmem:[#allocation13 + $0xc4] sm:$0xf]
        %v4334 = vld [vmem:[#allocation13 + $0xc8] sm:$0xf]
        %v4335 = vld [vmem:[#allocation13 + $0xcc] sm:$0xf]
        %v4336 = vld [vmem:[#allocation13 + $0xd0] sm:$0xf]
        %v4337 = vld [vmem:[#allocation13 + $0xd4] sm:$0xf]
        %v4338 = vld [vmem:[#allocation13 + $0xd8] sm:$0xf]
        %v4339 = vld [vmem:[#allocation13 + $0xdc] sm:$0xf]
        %v4340 = vld [vmem:[#allocation13 + $0xe0] sm:$0xf]
        %v4341 = vld [vmem:[#allocation13 + $0xe4] sm:$0xf]
        %v4342 = vld [vmem:[#allocation13 + $0xe8] sm:$0xf]
        %v4343 = vld [vmem:[#allocation13 + $0xec] sm:$0xf]
        %v4344 = vld [vmem:[#allocation13 + $0xf0] sm:$0xf]
        %v4345 = vld [vmem:[#allocation13 + $0xf4] sm:$0xf]
        %v4346 = vld [vmem:[#allocation13 + $0xf8] sm:$0xf]
        %v4347 = vld [vmem:[#allocation13 + $0xfc] sm:$0xf]
        %v4348 = vld [vmem:[%s8] sm:$0x1]
        %v4350 = vperm.slane %v4348, 0
        %v4416 = vunpack.c.l.b16 %v4284
        %v4417 = vunpack.c.l.b16 %v4285
        %v4418 = vunpack.c.l.b16 %v4286
        %v4419 = vunpack.c.l.b16 %v4287
        %v4420 = vunpack.c.l.b16 %v4288
        %v4421 = vunpack.c.l.b16 %v4289
        %v4422 = vunpack.c.l.b16 %v4290
        %v4423 = vunpack.c.l.b16 %v4291
        %v4424 = vunpack.c.l.b16 %v4292
        %v4425 = vunpack.c.l.b16 %v4293
        %v4426 = vunpack.c.l.b16 %v4294
        %v4427 = vunpack.c.l.b16 %v4295
        %v4428 = vunpack.c.l.b16 %v4296
        %v4429 = vunpack.c.l.b16 %v4297
        %v4430 = vunpack.c.l.b16 %v4298
        %v4431 = vunpack.c.l.b16 %v4299
        %v4432 = vunpack.c.l.b16 %v4300
        %v4433 = vunpack.c.l.b16 %v4301
        %v4434 = vunpack.c.l.b16 %v4302
        %v4435 = vunpack.c.l.b16 %v4303
        %v4436 = vunpack.c.l.b16 %v4304
        %v4437 = vunpack.c.l.b16 %v4305
        %v4438 = vunpack.c.l.b16 %v4306
        %v4439 = vunpack.c.l.b16 %v4307
        %v4440 = vunpack.c.l.b16 %v4308
        %v4441 = vunpack.c.l.b16 %v4309
        %v4442 = vunpack.c.l.b16 %v4310
        %v4443 = vunpack.c.l.b16 %v4311
        %v4444 = vunpack.c.l.b16 %v4312
        %v4445 = vunpack.c.l.b16 %v4313
        %v4446 = vunpack.c.l.b16 %v4314
        %v4447 = vunpack.c.l.b16 %v4315
        %v4448 = vunpack.c.l.b16 %v4316
        %v4449 = vunpack.c.l.b16 %v4317
        %v4450 = vunpack.c.l.b16 %v4318
        %v4451 = vunpack.c.l.b16 %v4319
        %v4452 = vunpack.c.l.b16 %v4320
        %v4453 = vunpack.c.l.b16 %v4321
        %v4454 = vunpack.c.l.b16 %v4322
        %v4455 = vunpack.c.l.b16 %v4323
        %v4456 = vunpack.c.l.b16 %v4324
        %v4457 = vunpack.c.l.b16 %v4325
        %v4458 = vunpack.c.l.b16 %v4326
        %v4459 = vunpack.c.l.b16 %v4327
        %v4460 = vunpack.c.l.b16 %v4328
        %v4461 = vunpack.c.l.b16 %v4329
        %v4462 = vunpack.c.l.b16 %v4330
        %v4463 = vunpack.c.l.b16 %v4331
        %v4464 = vunpack.c.l.b16 %v4332
        %v4465 = vunpack.c.l.b16 %v4333
        %v4466 = vunpack.c.l.b16 %v4334
        %v4467 = vunpack.c.l.b16 %v4335
        %v4468 = vunpack.c.l.b16 %v4336
        %v4469 = vunpack.c.l.b16 %v4337
        %v4470 = vunpack.c.l.b16 %v4338
        %v4471 = vunpack.c.l.b16 %v4339
        %v4472 = vunpack.c.l.b16 %v4340
        %v4473 = vunpack.c.l.b16 %v4341
        %v4474 = vunpack.c.l.b16 %v4342
        %v4475 = vunpack.c.l.b16 %v4343
        %v4476 = vunpack.c.l.b16 %v4344
        %v4477 = vunpack.c.l.b16 %v4345
        %v4478 = vunpack.c.l.b16 %v4346
        %v4479 = vunpack.c.l.b16 %v4347
        %v4480 = vpack.c.b16 %v4417, %v4416
        %v4481 = vpack.c.b16 %v4419, %v4418
        %v4482 = vpack.c.b16 %v4421, %v4420
        %v4483 = vpack.c.b16 %v4423, %v4422
        %v4484 = vpack.c.b16 %v4425, %v4424
        %v4485 = vpack.c.b16 %v4427, %v4426
        %v4486 = vpack.c.b16 %v4429, %v4428
        %v4487 = vpack.c.b16 %v4431, %v4430
        %v4488 = vpack.c.b16 %v4433, %v4432
        %v4489 = vpack.c.b16 %v4435, %v4434
        %v4490 = vpack.c.b16 %v4437, %v4436
        %v4491 = vpack.c.b16 %v4439, %v4438
        %v4492 = vpack.c.b16 %v4441, %v4440
        %v4493 = vpack.c.b16 %v4443, %v4442
        %v4494 = vpack.c.b16 %v4445, %v4444
        %v4495 = vpack.c.b16 %v4447, %v4446
        %v4496 = vpack.c.b16 %v4449, %v4448
        %v4497 = vpack.c.b16 %v4451, %v4450
        %v4498 = vpack.c.b16 %v4453, %v4452
        %v4499 = vpack.c.b16 %v4455, %v4454
        %v4500 = vpack.c.b16 %v4457, %v4456
        %v4501 = vpack.c.b16 %v4459, %v4458
        %v4502 = vpack.c.b16 %v4461, %v4460
        %v4503 = vpack.c.b16 %v4463, %v4462
        %v4504 = vpack.c.b16 %v4465, %v4464
        %v4505 = vpack.c.b16 %v4467, %v4466
        %v4506 = vpack.c.b16 %v4469, %v4468
        %v4507 = vpack.c.b16 %v4471, %v4470
        %v4508 = vpack.c.b16 %v4473, %v4472
        %v4509 = vpack.c.b16 %v4475, %v4474
        %v4510 = vpack.c.b16 %v4477, %v4476
        %v4511 = vpack.c.b16 %v4479, %v4478
        %4544 = vmatpush.bf16.msra.mxu0 %v4487
        %4545 = vmatpush.bf16.msra.mxu0 %v4486
        %4546 = vmatpush.bf16.msra.mxu0 %v4485
        %4547 = vmatpush.bf16.msra.mxu0 %v4484
        %4548 = vmatpush.bf16.msra.mxu0 %v4483
        %4549 = vmatpush.bf16.msra.mxu0 %v4482
        %4550 = vmatpush.bf16.msra.mxu0 %v4481
        %4551 = vmatpush.bf16.msra.mxu0 %v4480
        %4552 = vmatmul.bf16.gmra.mxu0 %v4252
        %v4553 = vpop.f32.mrf.mxu0
        %v4554 = vadd.f32 %v4350, %v4553
        %v4555 = vpop.f32.mrf.mxu0
        %v4556 = vadd.f32 %v4350, %v4555
        %4557 = vmatmul.bf16.gmra.mxu0 %v4256
        %v4558 = vpop.f32.mrf.mxu0
        %v4559 = vadd.f32 %v4350, %v4558
        %v4560 = vpop.f32.mrf.mxu0
        %v4561 = vadd.f32 %v4350, %v4560
        %4562 = vmatmul.bf16.gmra.mxu0 %v4260
        %v4563 = vpop.f32.mrf.mxu0
        %v4564 = vadd.f32 %v4350, %v4563
        %v4565 = vpop.f32.mrf.mxu0
        %v4566 = vadd.f32 %v4350, %v4565
        %4567 = vmatmul.bf16.gmra.mxu0 %v4264
        %v4568 = vpop.f32.mrf.mxu0
        %v4569 = vadd.f32 %v4350, %v4568
        %v4570 = vpop.f32.mrf.mxu0
        %v4571 = vadd.f32 %v4350, %v4570
        %4572 = vmatmul.bf16.gmra.mxu0 %v4268
        %v4573 = vpop.f32.mrf.mxu0
        %v4574 = vadd.f32 %v4350, %v4573
        %v4575 = vpop.f32.mrf.mxu0
        %v4576 = vadd.f32 %v4350, %v4575
        %4577 = vmatmul.bf16.gmra.mxu0 %v4272
        %v4578 = vpop.f32.mrf.mxu0
        %v4579 = vadd.f32 %v4350, %v4578
        %v4580 = vpop.f32.mrf.mxu0
        %v4581 = vadd.f32 %v4350, %v4580
        %4582 = vmatmul.bf16.gmra.mxu0 %v4276
        %v4583 = vpop.f32.mrf.mxu0
        %v4584 = vadd.f32 %v4350, %v4583
        %v4585 = vpop.f32.mrf.mxu0
        %v4586 = vadd.f32 %v4350, %v4585
        %4587 = vmatmul.bf16.gmra.mxu0 %v4280
        %v4588 = vpop.f32.mrf.mxu0
        %v4589 = vadd.f32 %v4350, %v4588
        %v4590 = vpop.f32.mrf.mxu0
        %v4591 = vadd.f32 %v4350, %v4590
        %4592 = vdwg.mxu0
        %4593 = vmatpush.bf16.msra.mxu0 %v4495
        %4594 = vmatpush.bf16.msra.mxu0 %v4494
        %4595 = vmatpush.bf16.msra.mxu0 %v4493
        %4596 = vmatpush.bf16.msra.mxu0 %v4492
        %4597 = vmatpush.bf16.msra.mxu0 %v4491
        %4598 = vmatpush.bf16.msra.mxu0 %v4490
        %4599 = vmatpush.bf16.msra.mxu0 %v4489
        %4600 = vmatpush.bf16.msra.mxu0 %v4488
        %4601 = vmatmul.bf16.gmra.mxu0 %v4253
        %v4602 = vpop.f32.mrf.mxu0
        %v4603 = vadd.f32 %v4554, %v4602
        %v4604 = vpop.f32.mrf.mxu0
        %v4605 = vadd.f32 %v4556, %v4604
        %4606 = vmatmul.bf16.gmra.mxu0 %v4257
        %v4607 = vpop.f32.mrf.mxu0
        %v4608 = vadd.f32 %v4559, %v4607
        %v4609 = vpop.f32.mrf.mxu0
        %v4610 = vadd.f32 %v4561, %v4609
        %4611 = vmatmul.bf16.gmra.mxu0 %v4261
        %v4612 = vpop.f32.mrf.mxu0
        %v4613 = vadd.f32 %v4564, %v4612
        %v4614 = vpop.f32.mrf.mxu0
        %v4615 = vadd.f32 %v4566, %v4614
        %4616 = vmatmul.bf16.gmra.mxu0 %v4265
        %v4617 = vpop.f32.mrf.mxu0
        %v4618 = vadd.f32 %v4569, %v4617
        %v4619 = vpop.f32.mrf.mxu0
        %v4620 = vadd.f32 %v4571, %v4619
        %4621 = vmatmul.bf16.gmra.mxu0 %v4269
        %v4622 = vpop.f32.mrf.mxu0
        %v4623 = vadd.f32 %v4574, %v4622
        %v4624 = vpop.f32.mrf.mxu0
        %v4625 = vadd.f32 %v4576, %v4624
        %4626 = vmatmul.bf16.gmra.mxu0 %v4273
        %v4627 = vpop.f32.mrf.mxu0
        %v4628 = vadd.f32 %v4579, %v4627
        %v4629 = vpop.f32.mrf.mxu0
        %v4630 = vadd.f32 %v4581, %v4629
        %4631 = vmatmul.bf16.gmra.mxu0 %v4277
        %v4632 = vpop.f32.mrf.mxu0
        %v4633 = vadd.f32 %v4584, %v4632
        %v4634 = vpop.f32.mrf.mxu0
        %v4635 = vadd.f32 %v4586, %v4634
        %4636 = vmatmul.bf16.gmra.mxu0 %v4281
        %v4637 = vpop.f32.mrf.mxu0
        %v4638 = vadd.f32 %v4589, %v4637
        %v4639 = vpop.f32.mrf.mxu0
        %v4640 = vadd.f32 %v4591, %v4639
        %4641 = vdwg.mxu0
        %4642 = vmatpush.bf16.msra.mxu0 %v4503
        %4643 = vmatpush.bf16.msra.mxu0 %v4502
        %4644 = vmatpush.bf16.msra.mxu0 %v4501
        %4645 = vmatpush.bf16.msra.mxu0 %v4500
        %4646 = vmatpush.bf16.msra.mxu0 %v4499
        %4647 = vmatpush.bf16.msra.mxu0 %v4498
        %4648 = vmatpush.bf16.msra.mxu0 %v4497
        %4649 = vmatpush.bf16.msra.mxu0 %v4496
        %4650 = vmatmul.bf16.gmra.mxu0 %v4254
        %v4651 = vpop.f32.mrf.mxu0
        %v4652 = vadd.f32 %v4603, %v4651
        %v4653 = vpop.f32.mrf.mxu0
        %v4654 = vadd.f32 %v4605, %v4653
        %4655 = vmatmul.bf16.gmra.mxu0 %v4258
        %v4656 = vpop.f32.mrf.mxu0
        %v4657 = vadd.f32 %v4608, %v4656
        %v4658 = vpop.f32.mrf.mxu0
        %v4659 = vadd.f32 %v4610, %v4658
        %4660 = vmatmul.bf16.gmra.mxu0 %v4262
        %v4661 = vpop.f32.mrf.mxu0
        %v4662 = vadd.f32 %v4613, %v4661
        %v4663 = vpop.f32.mrf.mxu0
        %v4664 = vadd.f32 %v4615, %v4663
        %4665 = vmatmul.bf16.gmra.mxu0 %v4266
        %v4666 = vpop.f32.mrf.mxu0
        %v4667 = vadd.f32 %v4618, %v4666
        %v4668 = vpop.f32.mrf.mxu0
        %v4669 = vadd.f32 %v4620, %v4668
        %4670 = vmatmul.bf16.gmra.mxu0 %v4270
        %v4671 = vpop.f32.mrf.mxu0
        %v4672 = vadd.f32 %v4623, %v4671
        %v4673 = vpop.f32.mrf.mxu0
        %v4674 = vadd.f32 %v4625, %v4673
        %4675 = vmatmul.bf16.gmra.mxu0 %v4274
        %v4676 = vpop.f32.mrf.mxu0
        %v4677 = vadd.f32 %v4628, %v4676
        %v4678 = vpop.f32.mrf.mxu0
        %v4679 = vadd.f32 %v4630, %v4678
        %4680 = vmatmul.bf16.gmra.mxu0 %v4278
        %v4681 = vpop.f32.mrf.mxu0
        %v4682 = vadd.f32 %v4633, %v4681
        %v4683 = vpop.f32.mrf.mxu0
        %v4684 = vadd.f32 %v4635, %v4683
        %4685 = vmatmul.bf16.gmra.mxu0 %v4282
        %v4686 = vpop.f32.mrf.mxu0
        %v4687 = vadd.f32 %v4638, %v4686
        %v4688 = vpop.f32.mrf.mxu0
        %v4689 = vadd.f32 %v4640, %v4688
        %4690 = vdwg.mxu0
        %4691 = vmatpush.bf16.msra.mxu0 %v4511
        %4692 = vmatpush.bf16.msra.mxu0 %v4510
        %4693 = vmatpush.bf16.msra.mxu0 %v4509
        %4694 = vmatpush.bf16.msra.mxu0 %v4508
        %4695 = vmatpush.bf16.msra.mxu0 %v4507
        %4696 = vmatpush.bf16.msra.mxu0 %v4506
        %4697 = vmatpush.bf16.msra.mxu0 %v4505
        %4698 = vmatpush.bf16.msra.mxu0 %v4504
        %4699 = vmatmul.bf16.gmra.mxu0 %v4255
        %v4700 = vpop.f32.mrf.mxu0
        %v4701 = vadd.f32 %v4652, %v4700
        %v4702 = vpop.f32.mrf.mxu0
        %v4703 = vadd.f32 %v4654, %v4702
        %4704 = vmatmul.bf16.gmra.mxu0 %v4259
        %v4705 = vpop.f32.mrf.mxu0
        %v4706 = vadd.f32 %v4657, %v4705
        %v4707 = vpop.f32.mrf.mxu0
        %v4708 = vadd.f32 %v4659, %v4707
        %4709 = vmatmul.bf16.gmra.mxu0 %v4263
        %v4710 = vpop.f32.mrf.mxu0
        %v4711 = vadd.f32 %v4662, %v4710
        %v4712 = vpop.f32.mrf.mxu0
        %v4713 = vadd.f32 %v4664, %v4712
        %4714 = vmatmul.bf16.gmra.mxu0 %v4267
        %v4715 = vpop.f32.mrf.mxu0
        %v4716 = vadd.f32 %v4667, %v4715
        %v4717 = vpop.f32.mrf.mxu0
        %v4718 = vadd.f32 %v4669, %v4717
        %4719 = vmatmul.bf16.gmra.mxu0 %v4271
        %v4720 = vpop.f32.mrf.mxu0
        %v4721 = vadd.f32 %v4672, %v4720
        %v4722 = vpop.f32.mrf.mxu0
        %v4723 = vadd.f32 %v4674, %v4722
        %4724 = vmatmul.bf16.gmra.mxu0 %v4275
        %v4725 = vpop.f32.mrf.mxu0
        %v4726 = vadd.f32 %v4677, %v4725
        %v4727 = vpop.f32.mrf.mxu0
        %v4728 = vadd.f32 %v4679, %v4727
        %4729 = vmatmul.bf16.gmra.mxu0 %v4279
        %v4730 = vpop.f32.mrf.mxu0
        %v4731 = vadd.f32 %v4682, %v4730
        %v4732 = vpop.f32.mrf.mxu0
        %v4733 = vadd.f32 %v4684, %v4732
        %4734 = vmatmul.bf16.gmra.mxu0 %v4283
        %v4735 = vpop.f32.mrf.mxu0
        %v4736 = vadd.f32 %v4687, %v4735
        %v4737 = vpop.f32.mrf.mxu0
        %v4738 = vadd.f32 %v4689, %v4737
        %4739 = vdwg.mxu0
        %4740 = vst [vmem:[%s447] sm:$0xff] %v4701
        %4741 = vst [vmem:[%s447 + $0x8] sm:$0xff] %v4703
        %4742 = vst [vmem:[%s447 + $0x10] sm:$0xff] %v4706
        %4743 = vst [vmem:[%s447 + $0x18] sm:$0xff] %v4708
        %4744 = vst [vmem:[%s447 + $0x20] sm:$0xff] %v4711
        %4745 = vst [vmem:[%s447 + $0x28] sm:$0xff] %v4713
        %4746 = vst [vmem:[%s447 + $0x30] sm:$0xff] %v4716
        %4747 = vst [vmem:[%s447 + $0x38] sm:$0xff] %v4718
        %4748 = vst [vmem:[%s447 + $0x40] sm:$0xff] %v4721
        %4749 = vst [vmem:[%s447 + $0x48] sm:$0xff] %v4723
        %4750 = vst [vmem:[%s447 + $0x50] sm:$0xff] %v4726
        %4751 = vst [vmem:[%s447 + $0x58] sm:$0xff] %v4728
        %4752 = vst [vmem:[%s447 + $0x60] sm:$0xff] %v4731
        %4753 = vst [vmem:[%s447 + $0x68] sm:$0xff] %v4733
        %4754 = vst [vmem:[%s447 + $0x70] sm:$0xff] %v4736
        %4755 = vst [vmem:[%s447 + $0x78] sm:$0xff] %v4738
        %s4756 = sand.u32 %s231, 1
        %s4757 = scalar_lea.sflag [#allocation4], %s4756
        %s4758 = sand.u32 %s231, 1
        %s4759 = smul.addr %s4758, 128
        %s4760 = scalar_lea.vmem [#allocation14], %s4759
        // Predicated region
        $region85: #{tpu_custom_call.1} parent=55 // pred_check
          %p4761 = pneg %p241
        $region86: #{tpu_custom_call.1} parent=55 // pred_check_branch
          %4763 = sbr.rel (%p4761) target = $region88
        $region87: #{tpu_custom_call.1} parent=55 // pred_region
          %s4764 = smul.u32 16, %s29
          %4766 = vsyncadd %s4757, 0
          %s4767 = smul.addr %s4764, 8
          %s4768 = scalar_lea.hbm %s9, %s4767
          %s4769 = sshll.u32 %s4760, 4
          %s4770 = int_to_ptr.vmem [resolvable:$true] %s4769
          %s4771 = sshll.u32 %s4768, 4
          %s4772 = int_to_ptr.hbm [resolvable:$true] %s4771
          %4777 = dma.vmem_to_hbm [thread:$0]  %s4770, 2048, %s4772, %s4757, 128, 128, 8
        $region88: #{tpu_custom_call.1} parent=55 // pred_fallthru
          _
      $region56: #{tpu_custom_call.1} parent=5 // pred_fallthru
        _
      %p4778 = scmp.le.s32.totalorder 2, %s24
      // Predicated region
      $region89: #{tpu_custom_call.1} parent=5 // pred_check
        %p4779 = pneg %p4778
      $region90: #{tpu_custom_call.1} parent=5 // pred_check_branch
        %4781 = sbr.rel (%p4779) target = $region92
      $region91: #{tpu_custom_call.1} parent=5 // pred_region
        %s4782 = ssub.s32 %s24, 2
        // Predicated region
        $region93: #{tpu_custom_call.1} parent=91 // pred_check
          %p4783 = pneg %p247
        $region94: #{tpu_custom_call.1} parent=91 // pred_check_branch
          %4785 = sbr.rel (%p4783) target = $region96
        $region95: #{tpu_custom_call.1} parent=91 // pred_region
          %s4786 = sand.u32 %s232, 1
          %s4787 = scalar_lea.sflag [#allocation4], %s4786
          %s4788 = sand.u32 %s232, 1
          %s4789 = smul.addr %s4788, 128
          %s4790 = scalar_lea.vmem [#allocation14], %s4789
          %4792 = dma.done %s4787, 2048
        $region96: #{tpu_custom_call.1} parent=91 // pred_fallthru
          _
      $region92: #{tpu_custom_call.1} parent=5 // pred_fallthru
        _
    $region6: #{tpu_custom_call.1} parent=1 // loop_footer
      %s28 = sadd.s32 1, %s24
    $region7: #{tpu_custom_call.1} parent=1 // loop_footer_branch
      %23 = sbr.rel target = $region3
    $region8: #{tpu_custom_call.1} parent=1 // loop_exit
      _
    %4793 = vsyncpa [#allocation3], 1
    %s4794 = scalar_lea.sflag [#allocation3], 1
    %4795 = vsyncpa %s4794, 1
    %4796 = vsyncpa [#allocation6], 1
    %4797 = vsyncpa [#allocation9], 1
    %4798 = vsyncpa [#allocation12], 1
    %4799 = vsyncpa [#allocation4], 1
    %s4800 = scalar_lea.sflag [#allocation4], 1
    %4801 = vsyncpa %s4800, 1

</llo_original>
